<compile_context>
chip_gen: v7x
topology: tpu7x:2x2x1
jax: 0.10.0
libtpu: 0.0.40
codegen_flags: <defaults>
</compile_context>

<pallas_src>
import math

import jax
import jax.numpy as jnp
from jax.experimental import pallas as pl
from jax.experimental.pallas import tpu as pltpu

# ---- small shapes consistent with the module ----
B, S, DIN = 2, 8, 16                 # batch, seq, input_dim
E, H, FF, LAYERS = 32, 4, 64, 2      # embed_size, heads, dim_feedforward, layers
DH = E // H
LN_EPS = 1e-5
LANES = 128


def _align8(n):
    return (n + 7) // 8 * 8


# ---- row map of the single packed parameter slab (all starts 8-aligned) ----
OFF_EMBED_W = 0                                  # (DIN, E)
OFF_EMBED_B = OFF_EMBED_W + _align8(DIN)         # (1, E)
OFF_PE      = OFF_EMBED_B + 8                    # (B*S, E)
OFF_MASK    = OFF_PE + _align8(B * S)            # (B*S, B*S) additive block mask
OFF_LAYERS  = OFF_MASK + _align8(B * S)

# per-layer sub-block offsets
R_INW  = 0                                       # (E, 128)  q|k|v weights, lane-padded
R_INB  = R_INW + _align8(E)                      # (1, 128)  q|k|v bias, lane-padded
R_OUTW = R_INB + 8                               # (E, E)    out_proj.weight^T
R_L1W  = R_OUTW + _align8(E)                     # (E, FF)   linear1.weight^T
R_L1B  = R_L1W + _align8(E)                      # (1, FF)
R_L2W  = R_L1B + 8                               # (FF, E)   linear2.weight^T
R_VEC  = R_L2W + _align8(FF)                     # (6, E): out_b, n1w, n1b, l2b, n2w, n2b
LROWS  = R_VEC + 8

TOTAL_ROWS = _align8(OFF_LAYERS + LAYERS * LROWS)


def _layer_norm(x, w, b):
    mu = jnp.mean(x, axis=-1, keepdims=True)
    var = jnp.mean((x - mu) ** 2, axis=-1, keepdims=True)
    return (x - mu) * jax.lax.rsqrt(var + LN_EPS) * w + b


# ---------------- fused kernel ----------------
def fused_kernel(x_ref, p_ref, o_ref):
    # --- embed + positional encoding ---
    embed_w = p_ref[OFF_EMBED_W:OFF_EMBED_W + DIN, 0:E]        # (DIN, E)
    embed_b = p_ref[OFF_EMBED_B:OFF_EMBED_B + 1, 0:E]          # (1, E)
    pe      = p_ref[OFF_PE:OFF_PE + B * S, 0:E]                # (B*S, E)
    h = jnp.dot(x_ref[...], embed_w,
                preferred_element_type=jnp.float32) + embed_b + pe     # (B*S, E)

    # cross-batch additive mask, precomputed at init and hoisted out of the
    # layer/head loops: 0 inside each batch's SxS block, -1e30 across batches.
    neg_mask = p_ref[OFF_MASK:OFF_MASK + B * S, 0:B * S]       # (B*S, B*S)

    for l in range(LAYERS):                                    # unrolled (2)
        base = OFF_LAYERS + l * LROWS
        inw  = p_ref[base + R_INW:base + R_INW + E, :]         # (E, 128)
        inb  = p_ref[base + R_INB:base + R_INB + 1, :]         # (1, 128)
        outw = p_ref[base + R_OUTW:base + R_OUTW + E, 0:E]     # (E, E)
        l1w  = p_ref[base + R_L1W:base + R_L1W + E, 0:FF]      # (E, FF)
        l1b  = p_ref[base + R_L1B:base + R_L1B + 1, 0:FF]      # (1, FF)
        l2w  = p_ref[base + R_L2W:base + R_L2W + FF, 0:E]      # (FF, E)
        vec  = p_ref[base + R_VEC:base + R_VEC + 6, 0:E]       # (6, E)
        out_b, n1w, n1b = vec[0:1], vec[1:2], vec[2:3]
        l2b, n2w, n2b = vec[3:4], vec[4:5], vec[5:6]

        # --- fused QKV projection (128-lane padded -> unmasked vreg result) ---
        qkv = jnp.dot(h, inw, preferred_element_type=jnp.float32) + inb  # (B*S, 128)

        # --- multi-head self attention over all B*S rows, batch-block masked ---
        head_ctx = []
        for hh in range(H):                                    # unrolled (4)
            q = qkv[:, hh * DH:(hh + 1) * DH]                  # (B*S, DH), pre-scaled
            k = qkv[:, E + hh * DH:E + (hh + 1) * DH]          # (B*S, DH)
            v = qkv[:, 2 * E + hh * DH:2 * E + (hh + 1) * DH]  # (B*S, DH)
            s = jax.lax.dot_general(
                q, k, (((1,), (1,)), ((), ())),
                preferred_element_type=jnp.float32)            # (B*S, B*S)
            s = s + neg_mask
            s = s - jnp.max(s, axis=-1, keepdims=True)
            p = jnp.exp(s)
            # TODO(synk): approx reciprocal has ~1e-3 rel err; switch to an
            # exact divide if bit-level parity with torch is required.
            p = p * pl.reciprocal(jnp.sum(p, axis=-1, keepdims=True), approx=True)
            head_ctx.append(jnp.dot(p, v, preferred_element_type=jnp.float32))
        ctx = jnp.concatenate(head_ctx, axis=-1)               # (B*S, E)

        attn_out = jnp.dot(ctx, outw,
                           preferred_element_type=jnp.float32) + out_b
        # TODO(synk): dropout layers are identity here (inference/eval semantics).
        x1 = _layer_norm(h + attn_out, n1w, n1b)

        # --- feed forward (ReLU) ---
        hidden = jnp.maximum(
            jnp.dot(x1, l1w, preferred_element_type=jnp.float32) + l1b, 0.0)
        ff = jnp.dot(hidden, l2w, preferred_element_type=jnp.float32) + l2b
        h = _layer_norm(x1 + ff, n2w, n2b)

    # --- last sequence position of each batch row -> (B, E) ---
    for b in range(B):                                         # unrolled (2)
        o_ref[b:b + 1, :] = h[b * S + S - 1:b * S + S, :]


# ---------------- wrapper ----------------
_VMEM = pl.BlockSpec(memory_space=pltpu.MemorySpace.VMEM)


@jax.jit
def trans_encoder_forward(x, param_slab):
    x2 = x.reshape(B * S, DIN)
    return pl.pallas_call(
        fused_kernel,
        out_shape=jax.ShapeDtypeStruct((B, E), jnp.float32),
        in_specs=[_VMEM, _VMEM],
        out_specs=_VMEM,
    )(x2, param_slab)


# ---------------- deterministic parameter init (packed slab) ----------------
def make_pos_encoding():
    pos = jnp.arange(S, dtype=jnp.float32)[:, None]
    div = jnp.exp(jnp.arange(0, E, 2, dtype=jnp.float32)
                  * (-math.log(10000.0) / E))
    pe = jnp.zeros((S, E), jnp.float32)
    pe = pe.at[:, 0::2].set(jnp.sin(pos * div))
    pe = pe.at[:, 1::2].set(jnp.cos(pos * div))
    return pe


def make_batch_mask():
    ids = jnp.arange(B * S) // S
    return jnp.where(ids[:, None] == ids[None, :], 0.0, -1e30).astype(jnp.float32)


def init_params(key):
    ks = iter(jax.random.split(key, 64))
    scale = 0.05

    def lin(shape):
        return scale * jax.random.normal(next(ks), shape, jnp.float32)

    slab = jnp.zeros((TOTAL_ROWS, LANES), jnp.float32)

    def put(sl, row, arr):
        r, c = arr.shape
        return sl.at[row:row + r, 0:c].set(arr)

    # embed (pre-transposed: y = x @ W + b), positional encoding, batch mask
    slab = put(slab, OFF_EMBED_W, lin((DIN, E)))
    slab = put(slab, OFF_EMBED_B, lin((1, E)))
    slab = put(slab, OFF_PE, jnp.tile(make_pos_encoding(), (B, 1)))
    slab = put(slab, OFF_MASK, make_batch_mask())

    inv_sqrt_dh = 1.0 / math.sqrt(DH)
    for l in range(LAYERS):
        base = OFF_LAYERS + l * LROWS
        # in_proj, pre-transposed, attention 1/sqrt(DH) folded into the Q third
        w_in = lin((E, 3 * E))
        b_in = lin((1, 3 * E))
        w_in = w_in.at[:, :E].multiply(inv_sqrt_dh)
        b_in = b_in.at[:, :E].multiply(inv_sqrt_dh)
        slab = put(slab, base + R_INW, w_in)                 # lane-padded to 128
        slab = put(slab, base + R_INB, b_in)
        slab = put(slab, base + R_OUTW, lin((E, E)))         # out_proj.weight^T
        slab = put(slab, base + R_L1W, lin((E, FF)))         # linear1.weight^T
        slab = put(slab, base + R_L1B, lin((1, FF)))
        slab = put(slab, base + R_L2W, lin((FF, E)))         # linear2.weight^T
        vec = jnp.concatenate([
            lin((1, E)),                      # out_proj bias
            jnp.ones((1, E), jnp.float32),    # norm1 weight
            jnp.zeros((1, E), jnp.float32),   # norm1 bias
            lin((1, E)),                      # linear2 bias
            jnp.ones((1, E), jnp.float32),    # norm2 weight
            jnp.zeros((1, E), jnp.float32),   # norm2 bias
        ], axis=0)
        slab = put(slab, base + R_VEC, vec)
    return slab


if __name__ == "__main__":
    key = jax.random.PRNGKey(0)
    k_param, k_x = jax.random.split(key)
    param_slab = init_params(k_param)
    x = jax.random.normal(k_x, (B, S, DIN), jnp.float32)

    out = trans_encoder_forward(x, param_slab)
    jax.block_until_ready(out)
    assert out.shape == (B, E), out.shape
    assert bool(jnp.all(jnp.isfinite(out)))
    print("KERNEL_OK")
</pallas_src>

<mosaic_0001>
module attributes {stable_mosaic.version = 11 : i64} {
  func.func @fused_kernel(%arg0: memref<16x16xf32, #tpu.memory_space<vmem>>, %arg1: memref<424x128xf32, #tpu.memory_space<vmem>>, %arg2: memref<2x32xf32, #tpu.memory_space<vmem>>) attributes {dimension_semantics = [], scalar_prefetch = 0 : i64, scratch_operands = 0 : i64, tpu.core_type = #tpu.core_type<tc>} {
    %c0 = arith.constant 0 : index
    %c0_0 = arith.constant 0 : index
    %0 = vector.load %arg1[%c0, %c0_0] : memref<424x128xf32, #tpu.memory_space<vmem>>, vector<16x32xf32>
    %c16 = arith.constant 16 : index
    %c0_1 = arith.constant 0 : index
    %1 = vector.load %arg1[%c16, %c0_1] : memref<424x128xf32, #tpu.memory_space<vmem>>, vector<1x32xf32>
    %c24 = arith.constant 24 : index
    %c0_2 = arith.constant 0 : index
    %2 = vector.load %arg1[%c24, %c0_2] : memref<424x128xf32, #tpu.memory_space<vmem>>, vector<16x32xf32>
    %c0_3 = arith.constant 0 : index
    %c0_4 = arith.constant 0 : index
    %3 = vector.load %arg0[%c0_3, %c0_4] : memref<16x16xf32, #tpu.memory_space<vmem>>, vector<16x16xf32>
    %cst = arith.constant dense<0.000000e+00> : vector<16x32xf32>
    %4 = tpu.matmul %3, %0, %cst {dimension_numbers = #tpu.dot_dimension_numbers<[1], [0], [0], [1], [0, 0, 1, 1], [], []>} : vector<16x16xf32>, vector<16x32xf32>, vector<16x32xf32> -> vector<16x32xf32>
    %5 = vector.broadcast %1 : vector<1x32xf32> to vector<16x32xf32>
    %6 = arith.addf %4, %5 : vector<16x32xf32>
    %7 = arith.addf %6, %2 : vector<16x32xf32>
    %c40 = arith.constant 40 : index
    %c0_5 = arith.constant 0 : index
    %8 = vector.load %arg1[%c40, %c0_5] : memref<424x128xf32, #tpu.memory_space<vmem>>, vector<16x16xf32>
    %c56 = arith.constant 56 : index
    %c0_6 = arith.constant 0 : index
    %9 = vector.load %arg1[%c56, %c0_6] : memref<424x128xf32, #tpu.memory_space<vmem>>, vector<32x128xf32>
    %c88 = arith.constant 88 : index
    %c0_7 = arith.constant 0 : index
    %10 = vector.load %arg1[%c88, %c0_7] : memref<424x128xf32, #tpu.memory_space<vmem>>, vector<1x128xf32>
    %c96 = arith.constant 96 : index
    %c0_8 = arith.constant 0 : index
    %11 = vector.load %arg1[%c96, %c0_8] : memref<424x128xf32, #tpu.memory_space<vmem>>, vector<32x32xf32>
    %c128 = arith.constant 128 : index
    %c0_9 = arith.constant 0 : index
    %12 = vector.load %arg1[%c128, %c0_9] : memref<424x128xf32, #tpu.memory_space<vmem>>, vector<32x64xf32>
    %c160 = arith.constant 160 : index
    %c0_10 = arith.constant 0 : index
    %13 = vector.load %arg1[%c160, %c0_10] : memref<424x128xf32, #tpu.memory_space<vmem>>, vector<1x64xf32>
    %c168 = arith.constant 168 : index
    %c0_11 = arith.constant 0 : index
    %14 = vector.load %arg1[%c168, %c0_11] : memref<424x128xf32, #tpu.memory_space<vmem>>, vector<64x32xf32>
    %c232 = arith.constant 232 : index
    %c0_12 = arith.constant 0 : index
    %15 = vector.load %arg1[%c232, %c0_12] : memref<424x128xf32, #tpu.memory_space<vmem>>, vector<6x32xf32>
    %16 = vector.extract_strided_slice %15 {offsets = [0, 0], sizes = [1, 32], strides = [1, 1]} : vector<6x32xf32> to vector<1x32xf32>
    %17 = vector.extract_strided_slice %15 {offsets = [1, 0], sizes = [1, 32], strides = [1, 1]} : vector<6x32xf32> to vector<1x32xf32>
    %18 = vector.extract_strided_slice %15 {offsets = [2, 0], sizes = [1, 32], strides = [1, 1]} : vector<6x32xf32> to vector<1x32xf32>
    %19 = vector.extract_strided_slice %15 {offsets = [3, 0], sizes = [1, 32], strides = [1, 1]} : vector<6x32xf32> to vector<1x32xf32>
    %20 = vector.extract_strided_slice %15 {offsets = [4, 0], sizes = [1, 32], strides = [1, 1]} : vector<6x32xf32> to vector<1x32xf32>
    %21 = vector.extract_strided_slice %15 {offsets = [5, 0], sizes = [1, 32], strides = [1, 1]} : vector<6x32xf32> to vector<1x32xf32>
    %cst_13 = arith.constant dense<0.000000e+00> : vector<16x128xf32>
    %22 = tpu.matmul %7, %9, %cst_13 {dimension_numbers = #tpu.dot_dimension_numbers<[1], [0], [0], [1], [0, 0, 1, 1], [], []>} : vector<16x32xf32>, vector<32x128xf32>, vector<16x128xf32> -> vector<16x128xf32>
    %23 = vector.broadcast %10 : vector<1x128xf32> to vector<16x128xf32>
    %24 = arith.addf %22, %23 : vector<16x128xf32>
    %25 = vector.extract_strided_slice %24 {offsets = [0, 0], sizes = [16, 8], strides = [1, 1]} : vector<16x128xf32> to vector<16x8xf32>
    %26 = vector.extract_strided_slice %24 {offsets = [0, 32], sizes = [16, 8], strides = [1, 1]} : vector<16x128xf32> to vector<16x8xf32>
    %27 = vector.extract_strided_slice %24 {offsets = [0, 64], sizes = [16, 8], strides = [1, 1]} : vector<16x128xf32> to vector<16x8xf32>
    %cst_14 = arith.constant dense<0.000000e+00> : vector<16x16xf32>
    %28 = tpu.matmul %25, %26, %cst_14 {dimension_numbers = #tpu.dot_dimension_numbers<[1], [1], [0], [0], [0, 0, 1, 0], [], []>} : vector<16x8xf32>, vector<16x8xf32>, vector<16x16xf32> -> vector<16x16xf32>
    %29 = arith.addf %28, %8 : vector<16x16xf32>
    %cst_15 = arith.constant dense<0xFF800000> : vector<16xf32>
    %30 = vector.multi_reduction <maximumf>, %29, %cst_15 [1] : vector<16x16xf32> to vector<16xf32>
    %31 = vector.shape_cast %30 : vector<16xf32> to vector<16x1xf32>
    %32 = vector.broadcast %31 : vector<16x1xf32> to vector<16x16xf32>
    %33 = arith.subf %29, %32 : vector<16x16xf32>
    %34 = math.exp %33 : vector<16x16xf32>
    %cst_16 = arith.constant dense<0.000000e+00> : vector<16xf32>
    %35 = vector.multi_reduction <add>, %34, %cst_16 [1] : vector<16x16xf32> to vector<16xf32>
    %36 = vector.shape_cast %35 : vector<16xf32> to vector<16x1xf32>
    %37 = tpu.reciprocal %36 {approx = true} : vector<16x1xf32> -> vector<16x1xf32>
    %38 = vector.broadcast %37 : vector<16x1xf32> to vector<16x16xf32>
    %39 = arith.mulf %34, %38 : vector<16x16xf32>
    %cst_17 = arith.constant dense<0.000000e+00> : vector<16x8xf32>
    %40 = tpu.matmul %39, %27, %cst_17 {dimension_numbers = #tpu.dot_dimension_numbers<[1], [0], [0], [1], [0, 0, 1, 1], [], []>} : vector<16x16xf32>, vector<16x8xf32>, vector<16x8xf32> -> vector<16x8xf32>
    %41 = vector.extract_strided_slice %24 {offsets = [0, 8], sizes = [16, 8], strides = [1, 1]} : vector<16x128xf32> to vector<16x8xf32>
    %42 = vector.extract_strided_slice %24 {offsets = [0, 40], sizes = [16, 8], strides = [1, 1]} : vector<16x128xf32> to vector<16x8xf32>
    %43 = vector.extract_strided_slice %24 {offsets = [0, 72], sizes = [16, 8], strides = [1, 1]} : vector<16x128xf32> to vector<16x8xf32>
    %cst_18 = arith.constant dense<0.000000e+00> : vector<16x16xf32>
    %44 = tpu.matmul %41, %42, %cst_18 {dimension_numbers = #tpu.dot_dimension_numbers<[1], [1], [0], [0], [0, 0, 1, 0], [], []>} : vector<16x8xf32>, vector<16x8xf32>, vector<16x16xf32> -> vector<16x16xf32>
    %45 = arith.addf %44, %8 : vector<16x16xf32>
    %cst_19 = arith.constant dense<0xFF800000> : vector<16xf32>
    %46 = vector.multi_reduction <maximumf>, %45, %cst_19 [1] : vector<16x16xf32> to vector<16xf32>
    %47 = vector.shape_cast %46 : vector<16xf32> to vector<16x1xf32>
    %48 = vector.broadcast %47 : vector<16x1xf32> to vector<16x16xf32>
    %49 = arith.subf %45, %48 : vector<16x16xf32>
    %50 = math.exp %49 : vector<16x16xf32>
    %cst_20 = arith.constant dense<0.000000e+00> : vector<16xf32>
    %51 = vector.multi_reduction <add>, %50, %cst_20 [1] : vector<16x16xf32> to vector<16xf32>
    %52 = vector.shape_cast %51 : vector<16xf32> to vector<16x1xf32>
    %53 = tpu.reciprocal %52 {approx = true} : vector<16x1xf32> -> vector<16x1xf32>
    %54 = vector.broadcast %53 : vector<16x1xf32> to vector<16x16xf32>
    %55 = arith.mulf %50, %54 : vector<16x16xf32>
    %cst_21 = arith.constant dense<0.000000e+00> : vector<16x8xf32>
    %56 = tpu.matmul %55, %43, %cst_21 {dimension_numbers = #tpu.dot_dimension_numbers<[1], [0], [0], [1], [0, 0, 1, 1], [], []>} : vector<16x16xf32>, vector<16x8xf32>, vector<16x8xf32> -> vector<16x8xf32>
    %57 = vector.extract_strided_slice %24 {offsets = [0, 16], sizes = [16, 8], strides = [1, 1]} : vector<16x128xf32> to vector<16x8xf32>
    %58 = vector.extract_strided_slice %24 {offsets = [0, 48], sizes = [16, 8], strides = [1, 1]} : vector<16x128xf32> to vector<16x8xf32>
    %59 = vector.extract_strided_slice %24 {offsets = [0, 80], sizes = [16, 8], strides = [1, 1]} : vector<16x128xf32> to vector<16x8xf32>
    %cst_22 = arith.constant dense<0.000000e+00> : vector<16x16xf32>
    %60 = tpu.matmul %57, %58, %cst_22 {dimension_numbers = #tpu.dot_dimension_numbers<[1], [1], [0], [0], [0, 0, 1, 0], [], []>} : vector<16x8xf32>, vector<16x8xf32>, vector<16x16xf32> -> vector<16x16xf32>
    %61 = arith.addf %60, %8 : vector<16x16xf32>
    %cst_23 = arith.constant dense<0xFF800000> : vector<16xf32>
    %62 = vector.multi_reduction <maximumf>, %61, %cst_23 [1] : vector<16x16xf32> to vector<16xf32>
    %63 = vector.shape_cast %62 : vector<16xf32> to vector<16x1xf32>
    %64 = vector.broadcast %63 : vector<16x1xf32> to vector<16x16xf32>
    %65 = arith.subf %61, %64 : vector<16x16xf32>
    %66 = math.exp %65 : vector<16x16xf32>
    %cst_24 = arith.constant dense<0.000000e+00> : vector<16xf32>
    %67 = vector.multi_reduction <add>, %66, %cst_24 [1] : vector<16x16xf32> to vector<16xf32>
    %68 = vector.shape_cast %67 : vector<16xf32> to vector<16x1xf32>
    %69 = tpu.reciprocal %68 {approx = true} : vector<16x1xf32> -> vector<16x1xf32>
    %70 = vector.broadcast %69 : vector<16x1xf32> to vector<16x16xf32>
    %71 = arith.mulf %66, %70 : vector<16x16xf32>
    %cst_25 = arith.constant dense<0.000000e+00> : vector<16x8xf32>
    %72 = tpu.matmul %71, %59, %cst_25 {dimension_numbers = #tpu.dot_dimension_numbers<[1], [0], [0], [1], [0, 0, 1, 1], [], []>} : vector<16x16xf32>, vector<16x8xf32>, vector<16x8xf32> -> vector<16x8xf32>
    %73 = vector.extract_strided_slice %24 {offsets = [0, 24], sizes = [16, 8], strides = [1, 1]} : vector<16x128xf32> to vector<16x8xf32>
    %74 = vector.extract_strided_slice %24 {offsets = [0, 56], sizes = [16, 8], strides = [1, 1]} : vector<16x128xf32> to vector<16x8xf32>
    %75 = vector.extract_strided_slice %24 {offsets = [0, 88], sizes = [16, 8], strides = [1, 1]} : vector<16x128xf32> to vector<16x8xf32>
    %cst_26 = arith.constant dense<0.000000e+00> : vector<16x16xf32>
    %76 = tpu.matmul %73, %74, %cst_26 {dimension_numbers = #tpu.dot_dimension_numbers<[1], [1], [0], [0], [0, 0, 1, 0], [], []>} : vector<16x8xf32>, vector<16x8xf32>, vector<16x16xf32> -> vector<16x16xf32>
    %77 = arith.addf %76, %8 : vector<16x16xf32>
    %cst_27 = arith.constant dense<0xFF800000> : vector<16xf32>
    %78 = vector.multi_reduction <maximumf>, %77, %cst_27 [1] : vector<16x16xf32> to vector<16xf32>
    %79 = vector.shape_cast %78 : vector<16xf32> to vector<16x1xf32>
    %80 = vector.broadcast %79 : vector<16x1xf32> to vector<16x16xf32>
    %81 = arith.subf %77, %80 : vector<16x16xf32>
    %82 = math.exp %81 : vector<16x16xf32>
    %cst_28 = arith.constant dense<0.000000e+00> : vector<16xf32>
    %83 = vector.multi_reduction <add>, %82, %cst_28 [1] : vector<16x16xf32> to vector<16xf32>
    %84 = vector.shape_cast %83 : vector<16xf32> to vector<16x1xf32>
    %85 = tpu.reciprocal %84 {approx = true} : vector<16x1xf32> -> vector<16x1xf32>
    %86 = vector.broadcast %85 : vector<16x1xf32> to vector<16x16xf32>
    %87 = arith.mulf %82, %86 : vector<16x16xf32>
    %cst_29 = arith.constant dense<0.000000e+00> : vector<16x8xf32>
    %88 = tpu.matmul %87, %75, %cst_29 {dimension_numbers = #tpu.dot_dimension_numbers<[1], [0], [0], [1], [0, 0, 1, 1], [], []>} : vector<16x16xf32>, vector<16x8xf32>, vector<16x8xf32> -> vector<16x8xf32>
    %89 = tpu.concatenate %40, %56, %72, %88 in 1 : vector<16x8xf32>, vector<16x8xf32>, vector<16x8xf32>, vector<16x8xf32> -> vector<16x32xf32>
    %cst_30 = arith.constant dense<0.000000e+00> : vector<16x32xf32>
    %90 = tpu.matmul %89, %11, %cst_30 {dimension_numbers = #tpu.dot_dimension_numbers<[1], [0], [0], [1], [0, 0, 1, 1], [], []>} : vector<16x32xf32>, vector<32x32xf32>, vector<16x32xf32> -> vector<16x32xf32>
    %91 = vector.broadcast %16 : vector<1x32xf32> to vector<16x32xf32>
    %92 = arith.addf %90, %91 : vector<16x32xf32>
    %93 = arith.addf %7, %92 : vector<16x32xf32>
    %cst_31 = arith.constant dense<0.000000e+00> : vector<16xf32>
    %94 = vector.multi_reduction <add>, %93, %cst_31 [1] : vector<16x32xf32> to vector<16xf32>
    %95 = vector.shape_cast %94 : vector<16xf32> to vector<16x1xf32>
    %cst_32 = arith.constant 3.200000e+01 : f32
    %96 = vector.broadcast %cst_32 : f32 to vector<16x1xf32>
    %97 = arith.divf %95, %96 : vector<16x1xf32>
    %98 = vector.broadcast %97 : vector<16x1xf32> to vector<16x32xf32>
    %99 = arith.subf %93, %98 : vector<16x32xf32>
    %100 = arith.mulf %99, %99 : vector<16x32xf32>
    %cst_33 = arith.constant dense<0.000000e+00> : vector<16xf32>
    %101 = vector.multi_reduction <add>, %100, %cst_33 [1] : vector<16x32xf32> to vector<16xf32>
    %102 = vector.shape_cast %101 : vector<16xf32> to vector<16x1xf32>
    %cst_34 = arith.constant 3.200000e+01 : f32
    %103 = vector.broadcast %cst_34 : f32 to vector<16x1xf32>
    %104 = arith.divf %102, %103 : vector<16x1xf32>
    %105 = vector.broadcast %97 : vector<16x1xf32> to vector<16x32xf32>
    %106 = arith.subf %93, %105 : vector<16x32xf32>
    %cst_35 = arith.constant 9.99999974E-6 : f32
    %107 = vector.broadcast %cst_35 : f32 to vector<16x1xf32>
    %108 = arith.addf %104, %107 : vector<16x1xf32>
    %109 = math.rsqrt %108 : vector<16x1xf32>
    %110 = vector.broadcast %109 : vector<16x1xf32> to vector<16x32xf32>
    %111 = arith.mulf %106, %110 : vector<16x32xf32>
    %112 = vector.broadcast %17 : vector<1x32xf32> to vector<16x32xf32>
    %113 = arith.mulf %111, %112 : vector<16x32xf32>
    %114 = vector.broadcast %18 : vector<1x32xf32> to vector<16x32xf32>
    %115 = arith.addf %113, %114 : vector<16x32xf32>
    %cst_36 = arith.constant dense<0.000000e+00> : vector<16x64xf32>
    %116 = tpu.matmul %115, %12, %cst_36 {dimension_numbers = #tpu.dot_dimension_numbers<[1], [0], [0], [1], [0, 0, 1, 1], [], []>} : vector<16x32xf32>, vector<32x64xf32>, vector<16x64xf32> -> vector<16x64xf32>
    %117 = vector.broadcast %13 : vector<1x64xf32> to vector<16x64xf32>
    %118 = arith.addf %116, %117 : vector<16x64xf32>
    %cst_37 = arith.constant 0.000000e+00 : f32
    %119 = vector.broadcast %cst_37 : f32 to vector<16x64xf32>
    %120 = arith.maximumf %118, %119 : vector<16x64xf32>
    %cst_38 = arith.constant dense<0.000000e+00> : vector<16x32xf32>
    %121 = tpu.matmul %120, %14, %cst_38 {dimension_numbers = #tpu.dot_dimension_numbers<[1], [0], [0], [1], [0, 0, 1, 1], [], []>} : vector<16x64xf32>, vector<64x32xf32>, vector<16x32xf32> -> vector<16x32xf32>
    %122 = vector.broadcast %19 : vector<1x32xf32> to vector<16x32xf32>
    %123 = arith.addf %121, %122 : vector<16x32xf32>
    %124 = arith.addf %115, %123 : vector<16x32xf32>
    %cst_39 = arith.constant dense<0.000000e+00> : vector<16xf32>
    %125 = vector.multi_reduction <add>, %124, %cst_39 [1] : vector<16x32xf32> to vector<16xf32>
    %126 = vector.shape_cast %125 : vector<16xf32> to vector<16x1xf32>
    %cst_40 = arith.constant 3.200000e+01 : f32
    %127 = vector.broadcast %cst_40 : f32 to vector<16x1xf32>
    %128 = arith.divf %126, %127 : vector<16x1xf32>
    %129 = vector.broadcast %128 : vector<16x1xf32> to vector<16x32xf32>
    %130 = arith.subf %124, %129 : vector<16x32xf32>
    %131 = arith.mulf %130, %130 : vector<16x32xf32>
    %cst_41 = arith.constant dense<0.000000e+00> : vector<16xf32>
    %132 = vector.multi_reduction <add>, %131, %cst_41 [1] : vector<16x32xf32> to vector<16xf32>
    %133 = vector.shape_cast %132 : vector<16xf32> to vector<16x1xf32>
    %cst_42 = arith.constant 3.200000e+01 : f32
    %134 = vector.broadcast %cst_42 : f32 to vector<16x1xf32>
    %135 = arith.divf %133, %134 : vector<16x1xf32>
    %136 = vector.broadcast %128 : vector<16x1xf32> to vector<16x32xf32>
    %137 = arith.subf %124, %136 : vector<16x32xf32>
    %cst_43 = arith.constant 9.99999974E-6 : f32
    %138 = vector.broadcast %cst_43 : f32 to vector<16x1xf32>
    %139 = arith.addf %135, %138 : vector<16x1xf32>
    %140 = math.rsqrt %139 : vector<16x1xf32>
    %141 = vector.broadcast %140 : vector<16x1xf32> to vector<16x32xf32>
    %142 = arith.mulf %137, %141 : vector<16x32xf32>
    %143 = vector.broadcast %20 : vector<1x32xf32> to vector<16x32xf32>
    %144 = arith.mulf %142, %143 : vector<16x32xf32>
    %145 = vector.broadcast %21 : vector<1x32xf32> to vector<16x32xf32>
    %146 = arith.addf %144, %145 : vector<16x32xf32>
    %c240 = arith.constant 240 : index
    %c0_44 = arith.constant 0 : index
    %147 = vector.load %arg1[%c240, %c0_44] : memref<424x128xf32, #tpu.memory_space<vmem>>, vector<32x128xf32>
    %c272 = arith.constant 272 : index
    %c0_45 = arith.constant 0 : index
    %148 = vector.load %arg1[%c272, %c0_45] : memref<424x128xf32, #tpu.memory_space<vmem>>, vector<1x128xf32>
    %c280 = arith.constant 280 : index
    %c0_46 = arith.constant 0 : index
    %149 = vector.load %arg1[%c280, %c0_46] : memref<424x128xf32, #tpu.memory_space<vmem>>, vector<32x32xf32>
    %c312 = arith.constant 312 : index
    %c0_47 = arith.constant 0 : index
    %150 = vector.load %arg1[%c312, %c0_47] : memref<424x128xf32, #tpu.memory_space<vmem>>, vector<32x64xf32>
    %c344 = arith.constant 344 : index
    %c0_48 = arith.constant 0 : index
    %151 = vector.load %arg1[%c344, %c0_48] : memref<424x128xf32, #tpu.memory_space<vmem>>, vector<1x64xf32>
    %c352 = arith.constant 352 : index
    %c0_49 = arith.constant 0 : index
    %152 = vector.load %arg1[%c352, %c0_49] : memref<424x128xf32, #tpu.memory_space<vmem>>, vector<64x32xf32>
    %c416 = arith.constant 416 : index
    %c0_50 = arith.constant 0 : index
    %153 = vector.load %arg1[%c416, %c0_50] : memref<424x128xf32, #tpu.memory_space<vmem>>, vector<6x32xf32>
    %154 = vector.extract_strided_slice %153 {offsets = [0, 0], sizes = [1, 32], strides = [1, 1]} : vector<6x32xf32> to vector<1x32xf32>
    %155 = vector.extract_strided_slice %153 {offsets = [1, 0], sizes = [1, 32], strides = [1, 1]} : vector<6x32xf32> to vector<1x32xf32>
    %156 = vector.extract_strided_slice %153 {offsets = [2, 0], sizes = [1, 32], strides = [1, 1]} : vector<6x32xf32> to vector<1x32xf32>
    %157 = vector.extract_strided_slice %153 {offsets = [3, 0], sizes = [1, 32], strides = [1, 1]} : vector<6x32xf32> to vector<1x32xf32>
    %158 = vector.extract_strided_slice %153 {offsets = [4, 0], sizes = [1, 32], strides = [1, 1]} : vector<6x32xf32> to vector<1x32xf32>
    %159 = vector.extract_strided_slice %153 {offsets = [5, 0], sizes = [1, 32], strides = [1, 1]} : vector<6x32xf32> to vector<1x32xf32>
    %cst_51 = arith.constant dense<0.000000e+00> : vector<16x128xf32>
    %160 = tpu.matmul %146, %147, %cst_51 {dimension_numbers = #tpu.dot_dimension_numbers<[1], [0], [0], [1], [0, 0, 1, 1], [], []>} : vector<16x32xf32>, vector<32x128xf32>, vector<16x128xf32> -> vector<16x128xf32>
    %161 = vector.broadcast %148 : vector<1x128xf32> to vector<16x128xf32>
    %162 = arith.addf %160, %161 : vector<16x128xf32>
    %163 = vector.extract_strided_slice %162 {offsets = [0, 0], sizes = [16, 8], strides = [1, 1]} : vector<16x128xf32> to vector<16x8xf32>
    %164 = vector.extract_strided_slice %162 {offsets = [0, 32], sizes = [16, 8], strides = [1, 1]} : vector<16x128xf32> to vector<16x8xf32>
    %165 = vector.extract_strided_slice %162 {offsets = [0, 64], sizes = [16, 8], strides = [1, 1]} : vector<16x128xf32> to vector<16x8xf32>
    %cst_52 = arith.constant dense<0.000000e+00> : vector<16x16xf32>
    %166 = tpu.matmul %163, %164, %cst_52 {dimension_numbers = #tpu.dot_dimension_numbers<[1], [1], [0], [0], [0, 0, 1, 0], [], []>} : vector<16x8xf32>, vector<16x8xf32>, vector<16x16xf32> -> vector<16x16xf32>
    %167 = arith.addf %166, %8 : vector<16x16xf32>
    %cst_53 = arith.constant dense<0xFF800000> : vector<16xf32>
    %168 = vector.multi_reduction <maximumf>, %167, %cst_53 [1] : vector<16x16xf32> to vector<16xf32>
    %169 = vector.shape_cast %168 : vector<16xf32> to vector<16x1xf32>
    %170 = vector.broadcast %169 : vector<16x1xf32> to vector<16x16xf32>
    %171 = arith.subf %167, %170 : vector<16x16xf32>
    %172 = math.exp %171 : vector<16x16xf32>
    %cst_54 = arith.constant dense<0.000000e+00> : vector<16xf32>
    %173 = vector.multi_reduction <add>, %172, %cst_54 [1] : vector<16x16xf32> to vector<16xf32>
    %174 = vector.shape_cast %173 : vector<16xf32> to vector<16x1xf32>
    %175 = tpu.reciprocal %174 {approx = true} : vector<16x1xf32> -> vector<16x1xf32>
    %176 = vector.broadcast %175 : vector<16x1xf32> to vector<16x16xf32>
    %177 = arith.mulf %172, %176 : vector<16x16xf32>
    %cst_55 = arith.constant dense<0.000000e+00> : vector<16x8xf32>
    %178 = tpu.matmul %177, %165, %cst_55 {dimension_numbers = #tpu.dot_dimension_numbers<[1], [0], [0], [1], [0, 0, 1, 1], [], []>} : vector<16x16xf32>, vector<16x8xf32>, vector<16x8xf32> -> vector<16x8xf32>
    %179 = vector.extract_strided_slice %162 {offsets = [0, 8], sizes = [16, 8], strides = [1, 1]} : vector<16x128xf32> to vector<16x8xf32>
    %180 = vector.extract_strided_slice %162 {offsets = [0, 40], sizes = [16, 8], strides = [1, 1]} : vector<16x128xf32> to vector<16x8xf32>
    %181 = vector.extract_strided_slice %162 {offsets = [0, 72], sizes = [16, 8], strides = [1, 1]} : vector<16x128xf32> to vector<16x8xf32>
    %cst_56 = arith.constant dense<0.000000e+00> : vector<16x16xf32>
    %182 = tpu.matmul %179, %180, %cst_56 {dimension_numbers = #tpu.dot_dimension_numbers<[1], [1], [0], [0], [0, 0, 1, 0], [], []>} : vector<16x8xf32>, vector<16x8xf32>, vector<16x16xf32> -> vector<16x16xf32>
    %183 = arith.addf %182, %8 : vector<16x16xf32>
    %cst_57 = arith.constant dense<0xFF800000> : vector<16xf32>
    %184 = vector.multi_reduction <maximumf>, %183, %cst_57 [1] : vector<16x16xf32> to vector<16xf32>
    %185 = vector.shape_cast %184 : vector<16xf32> to vector<16x1xf32>
    %186 = vector.broadcast %185 : vector<16x1xf32> to vector<16x16xf32>
    %187 = arith.subf %183, %186 : vector<16x16xf32>
    %188 = math.exp %187 : vector<16x16xf32>
    %cst_58 = arith.constant dense<0.000000e+00> : vector<16xf32>
    %189 = vector.multi_reduction <add>, %188, %cst_58 [1] : vector<16x16xf32> to vector<16xf32>
    %190 = vector.shape_cast %189 : vector<16xf32> to vector<16x1xf32>
    %191 = tpu.reciprocal %190 {approx = true} : vector<16x1xf32> -> vector<16x1xf32>
    %192 = vector.broadcast %191 : vector<16x1xf32> to vector<16x16xf32>
    %193 = arith.mulf %188, %192 : vector<16x16xf32>
    %cst_59 = arith.constant dense<0.000000e+00> : vector<16x8xf32>
    %194 = tpu.matmul %193, %181, %cst_59 {dimension_numbers = #tpu.dot_dimension_numbers<[1], [0], [0], [1], [0, 0, 1, 1], [], []>} : vector<16x16xf32>, vector<16x8xf32>, vector<16x8xf32> -> vector<16x8xf32>
    %195 = vector.extract_strided_slice %162 {offsets = [0, 16], sizes = [16, 8], strides = [1, 1]} : vector<16x128xf32> to vector<16x8xf32>
    %196 = vector.extract_strided_slice %162 {offsets = [0, 48], sizes = [16, 8], strides = [1, 1]} : vector<16x128xf32> to vector<16x8xf32>
    %197 = vector.extract_strided_slice %162 {offsets = [0, 80], sizes = [16, 8], strides = [1, 1]} : vector<16x128xf32> to vector<16x8xf32>
    %cst_60 = arith.constant dense<0.000000e+00> : vector<16x16xf32>
    %198 = tpu.matmul %195, %196, %cst_60 {dimension_numbers = #tpu.dot_dimension_numbers<[1], [1], [0], [0], [0, 0, 1, 0], [], []>} : vector<16x8xf32>, vector<16x8xf32>, vector<16x16xf32> -> vector<16x16xf32>
    %199 = arith.addf %198, %8 : vector<16x16xf32>
    %cst_61 = arith.constant dense<0xFF800000> : vector<16xf32>
    %200 = vector.multi_reduction <maximumf>, %199, %cst_61 [1] : vector<16x16xf32> to vector<16xf32>
    %201 = vector.shape_cast %200 : vector<16xf32> to vector<16x1xf32>
    %202 = vector.broadcast %201 : vector<16x1xf32> to vector<16x16xf32>
    %203 = arith.subf %199, %202 : vector<16x16xf32>
    %204 = math.exp %203 : vector<16x16xf32>
    %cst_62 = arith.constant dense<0.000000e+00> : vector<16xf32>
    %205 = vector.multi_reduction <add>, %204, %cst_62 [1] : vector<16x16xf32> to vector<16xf32>
    %206 = vector.shape_cast %205 : vector<16xf32> to vector<16x1xf32>
    %207 = tpu.reciprocal %206 {approx = true} : vector<16x1xf32> -> vector<16x1xf32>
    %208 = vector.broadcast %207 : vector<16x1xf32> to vector<16x16xf32>
    %209 = arith.mulf %204, %208 : vector<16x16xf32>
    %cst_63 = arith.constant dense<0.000000e+00> : vector<16x8xf32>
    %210 = tpu.matmul %209, %197, %cst_63 {dimension_numbers = #tpu.dot_dimension_numbers<[1], [0], [0], [1], [0, 0, 1, 1], [], []>} : vector<16x16xf32>, vector<16x8xf32>, vector<16x8xf32> -> vector<16x8xf32>
    %211 = vector.extract_strided_slice %162 {offsets = [0, 24], sizes = [16, 8], strides = [1, 1]} : vector<16x128xf32> to vector<16x8xf32>
    %212 = vector.extract_strided_slice %162 {offsets = [0, 56], sizes = [16, 8], strides = [1, 1]} : vector<16x128xf32> to vector<16x8xf32>
    %213 = vector.extract_strided_slice %162 {offsets = [0, 88], sizes = [16, 8], strides = [1, 1]} : vector<16x128xf32> to vector<16x8xf32>
    %cst_64 = arith.constant dense<0.000000e+00> : vector<16x16xf32>
    %214 = tpu.matmul %211, %212, %cst_64 {dimension_numbers = #tpu.dot_dimension_numbers<[1], [1], [0], [0], [0, 0, 1, 0], [], []>} : vector<16x8xf32>, vector<16x8xf32>, vector<16x16xf32> -> vector<16x16xf32>
    %215 = arith.addf %214, %8 : vector<16x16xf32>
    %cst_65 = arith.constant dense<0xFF800000> : vector<16xf32>
    %216 = vector.multi_reduction <maximumf>, %215, %cst_65 [1] : vector<16x16xf32> to vector<16xf32>
    %217 = vector.shape_cast %216 : vector<16xf32> to vector<16x1xf32>
    %218 = vector.broadcast %217 : vector<16x1xf32> to vector<16x16xf32>
    %219 = arith.subf %215, %218 : vector<16x16xf32>
    %220 = math.exp %219 : vector<16x16xf32>
    %cst_66 = arith.constant dense<0.000000e+00> : vector<16xf32>
    %221 = vector.multi_reduction <add>, %220, %cst_66 [1] : vector<16x16xf32> to vector<16xf32>
    %222 = vector.shape_cast %221 : vector<16xf32> to vector<16x1xf32>
    %223 = tpu.reciprocal %222 {approx = true} : vector<16x1xf32> -> vector<16x1xf32>
    %224 = vector.broadcast %223 : vector<16x1xf32> to vector<16x16xf32>
    %225 = arith.mulf %220, %224 : vector<16x16xf32>
    %cst_67 = arith.constant dense<0.000000e+00> : vector<16x8xf32>
    %226 = tpu.matmul %225, %213, %cst_67 {dimension_numbers = #tpu.dot_dimension_numbers<[1], [0], [0], [1], [0, 0, 1, 1], [], []>} : vector<16x16xf32>, vector<16x8xf32>, vector<16x8xf32> -> vector<16x8xf32>
    %227 = tpu.concatenate %178, %194, %210, %226 in 1 : vector<16x8xf32>, vector<16x8xf32>, vector<16x8xf32>, vector<16x8xf32> -> vector<16x32xf32>
    %cst_68 = arith.constant dense<0.000000e+00> : vector<16x32xf32>
    %228 = tpu.matmul %227, %149, %cst_68 {dimension_numbers = #tpu.dot_dimension_numbers<[1], [0], [0], [1], [0, 0, 1, 1], [], []>} : vector<16x32xf32>, vector<32x32xf32>, vector<16x32xf32> -> vector<16x32xf32>
    %229 = vector.broadcast %154 : vector<1x32xf32> to vector<16x32xf32>
    %230 = arith.addf %228, %229 : vector<16x32xf32>
    %231 = arith.addf %146, %230 : vector<16x32xf32>
    %cst_69 = arith.constant dense<0.000000e+00> : vector<16xf32>
    %232 = vector.multi_reduction <add>, %231, %cst_69 [1] : vector<16x32xf32> to vector<16xf32>
    %233 = vector.shape_cast %232 : vector<16xf32> to vector<16x1xf32>
    %cst_70 = arith.constant 3.200000e+01 : f32
    %234 = vector.broadcast %cst_70 : f32 to vector<16x1xf32>
    %235 = arith.divf %233, %234 : vector<16x1xf32>
    %236 = vector.broadcast %235 : vector<16x1xf32> to vector<16x32xf32>
    %237 = arith.subf %231, %236 : vector<16x32xf32>
    %238 = arith.mulf %237, %237 : vector<16x32xf32>
    %cst_71 = arith.constant dense<0.000000e+00> : vector<16xf32>
    %239 = vector.multi_reduction <add>, %238, %cst_71 [1] : vector<16x32xf32> to vector<16xf32>
    %240 = vector.shape_cast %239 : vector<16xf32> to vector<16x1xf32>
    %cst_72 = arith.constant 3.200000e+01 : f32
    %241 = vector.broadcast %cst_72 : f32 to vector<16x1xf32>
    %242 = arith.divf %240, %241 : vector<16x1xf32>
    %243 = vector.broadcast %235 : vector<16x1xf32> to vector<16x32xf32>
    %244 = arith.subf %231, %243 : vector<16x32xf32>
    %cst_73 = arith.constant 9.99999974E-6 : f32
    %245 = vector.broadcast %cst_73 : f32 to vector<16x1xf32>
    %246 = arith.addf %242, %245 : vector<16x1xf32>
    %247 = math.rsqrt %246 : vector<16x1xf32>
    %248 = vector.broadcast %247 : vector<16x1xf32> to vector<16x32xf32>
    %249 = arith.mulf %244, %248 : vector<16x32xf32>
    %250 = vector.broadcast %155 : vector<1x32xf32> to vector<16x32xf32>
    %251 = arith.mulf %249, %250 : vector<16x32xf32>
    %252 = vector.broadcast %156 : vector<1x32xf32> to vector<16x32xf32>
    %253 = arith.addf %251, %252 : vector<16x32xf32>
    %cst_74 = arith.constant dense<0.000000e+00> : vector<16x64xf32>
    %254 = tpu.matmul %253, %150, %cst_74 {dimension_numbers = #tpu.dot_dimension_numbers<[1], [0], [0], [1], [0, 0, 1, 1], [], []>} : vector<16x32xf32>, vector<32x64xf32>, vector<16x64xf32> -> vector<16x64xf32>
    %255 = vector.broadcast %151 : vector<1x64xf32> to vector<16x64xf32>
    %256 = arith.addf %254, %255 : vector<16x64xf32>
    %cst_75 = arith.constant 0.000000e+00 : f32
    %257 = vector.broadcast %cst_75 : f32 to vector<16x64xf32>
    %258 = arith.maximumf %256, %257 : vector<16x64xf32>
    %cst_76 = arith.constant dense<0.000000e+00> : vector<16x32xf32>
    %259 = tpu.matmul %258, %152, %cst_76 {dimension_numbers = #tpu.dot_dimension_numbers<[1], [0], [0], [1], [0, 0, 1, 1], [], []>} : vector<16x64xf32>, vector<64x32xf32>, vector<16x32xf32> -> vector<16x32xf32>
    %260 = vector.broadcast %157 : vector<1x32xf32> to vector<16x32xf32>
    %261 = arith.addf %259, %260 : vector<16x32xf32>
    %262 = arith.addf %253, %261 : vector<16x32xf32>
    %cst_77 = arith.constant dense<0.000000e+00> : vector<16xf32>
    %263 = vector.multi_reduction <add>, %262, %cst_77 [1] : vector<16x32xf32> to vector<16xf32>
    %264 = vector.shape_cast %263 : vector<16xf32> to vector<16x1xf32>
    %cst_78 = arith.constant 3.200000e+01 : f32
    %265 = vector.broadcast %cst_78 : f32 to vector<16x1xf32>
    %266 = arith.divf %264, %265 : vector<16x1xf32>
    %267 = vector.broadcast %266 : vector<16x1xf32> to vector<16x32xf32>
    %268 = arith.subf %262, %267 : vector<16x32xf32>
    %269 = arith.mulf %268, %268 : vector<16x32xf32>
    %cst_79 = arith.constant dense<0.000000e+00> : vector<16xf32>
    %270 = vector.multi_reduction <add>, %269, %cst_79 [1] : vector<16x32xf32> to vector<16xf32>
    %271 = vector.shape_cast %270 : vector<16xf32> to vector<16x1xf32>
    %cst_80 = arith.constant 3.200000e+01 : f32
    %272 = vector.broadcast %cst_80 : f32 to vector<16x1xf32>
    %273 = arith.divf %271, %272 : vector<16x1xf32>
    %274 = vector.broadcast %266 : vector<16x1xf32> to vector<16x32xf32>
    %275 = arith.subf %262, %274 : vector<16x32xf32>
    %cst_81 = arith.constant 9.99999974E-6 : f32
    %276 = vector.broadcast %cst_81 : f32 to vector<16x1xf32>
    %277 = arith.addf %273, %276 : vector<16x1xf32>
    %278 = math.rsqrt %277 : vector<16x1xf32>
    %279 = vector.broadcast %278 : vector<16x1xf32> to vector<16x32xf32>
    %280 = arith.mulf %275, %279 : vector<16x32xf32>
    %281 = vector.broadcast %158 : vector<1x32xf32> to vector<16x32xf32>
    %282 = arith.mulf %280, %281 : vector<16x32xf32>
    %283 = vector.broadcast %159 : vector<1x32xf32> to vector<16x32xf32>
    %284 = arith.addf %282, %283 : vector<16x32xf32>
    %285 = vector.extract_strided_slice %284 {offsets = [7, 0], sizes = [1, 32], strides = [1, 1]} : vector<16x32xf32> to vector<1x32xf32>
    %c0_82 = arith.constant 0 : index
    %c0_83 = arith.constant 0 : index
    %286 = vector.load %arg2[%c0_82, %c0_83] : memref<2x32xf32, #tpu.memory_space<vmem>>, vector<1x32xf32>
    tpu.vector_store %arg2[%c0_82, %c0_83], %285 {strides = array<i32>} : memref<2x32xf32, #tpu.memory_space<vmem>>, vector<1x32xf32>,
    %287 = vector.extract_strided_slice %284 {offsets = [15, 0], sizes = [1, 32], strides = [1, 1]} : vector<16x32xf32> to vector<1x32xf32>
    %c1 = arith.constant 1 : index
    %c0_84 = arith.constant 0 : index
    %288 = vector.load %arg2[%c1, %c0_84] : memref<2x32xf32, #tpu.memory_space<vmem>>, vector<1x32xf32>
    tpu.vector_store %arg2[%c1, %c0_84], %287 {strides = array<i32>} : memref<2x32xf32, #tpu.memory_space<vmem>>, vector<1x32xf32>,
    return
  }
}

</mosaic_0001>

<llo_original>
// kernel: trans_encoder_forward.1
$region0: #{trans_encoder_forward.1}
  #allocation0 [shape = 'u32[]', space=smem, size = 0x4, offset = 0x4, fixed_abs, tag = 'smem constant byte address 0x4 - core index']
  #allocation1 [shape = 'u32[144,128]{1,0:T(1,128)}', space=vmem, size = 0x12000, scoped, tag = 'internal scratch']
  %s0 = inlined_call_operand.hbm [shape: f32[16,16], index: 0, kind: input, shape index: {}]
  %s1 = inlined_call_operand.hbm [shape: f32[424,128], index: 1, kind: input, shape index: {}]
  %s2 = inlined_call_operand.hbm [shape: f32[2,32], index: 2, kind: output, shape index: {}]
  %s3 = sld [smem:[#allocation0]]
  $region26: #{trans_encoder_forward.1} parent=0
    _
  %s5 = ssub.s32 1, %s3
  %s6 = scalar_select 0, %s5, %s3
  $region1: #{trans_encoder_forward.1} parent=0
    #allocation2 [shape = 'u8[8192]{0}', space=vmem, size = 0x2000, scoped, tag = 'input window, operand 0, single buffered']
    #allocation3 [shape = 's32[1]{0}', space=sflag, size = 0x4, scoped, tag = 'scoped memory for trans_encoder_forward.1']
    #allocation4 [shape = 's32[1]{0}', space=sflag, size = 0x4, scoped, tag = 'scoped memory for trans_encoder_forward.1']
    #allocation5 [shape = 'u8[217088]{0}', space=vmem, size = 0x35000, scoped, tag = 'input window, operand 1, single buffered']
    #allocation6 [shape = 's32[1]{0}', space=sflag, size = 0x4, scoped, tag = 'scoped memory for trans_encoder_forward.1']
    #allocation7 [shape = 'u8[1024]{0}', space=vmem, size = 0x400, scoped, tag = 'output window, operand 0, single buffered']
    %7 = vsyncpa [#allocation3], 0
    %8 = vsyncpa [#allocation6], 0
    %9 = vsyncpa [#allocation4], 0
    // Predicated region
    $region2: #{trans_encoder_forward.1} parent=1 // pred_check
      _
    $region3: #{trans_encoder_forward.1} parent=1 // pred_check_branch
      %11 = sbr.rel (0) target = $region5
    $region4: #{trans_encoder_forward.1} parent=1 // pred_region
      %s13 = ssub.s32 256, 256
      %14 = vsyncadd [#allocation3], %s13
      %s15 = sshll.u32 [#allocation2], 4
      %s16 = int_to_ptr.vmem [resolvable:$true] %s15
      %21 = dma.hbm_to_vmem [thread:$0]  %s0, 256, %s16, [#allocation3], 128, 128, 8
    $region5: #{trans_encoder_forward.1} parent=1 // pred_fallthru
      _
    // Predicated region
    $region6: #{trans_encoder_forward.1} parent=1 // pred_check
      _
    $region7: #{trans_encoder_forward.1} parent=1 // pred_check_branch
      %23 = sbr.rel (0) target = $region9
    $region8: #{trans_encoder_forward.1} parent=1 // pred_region
      %s25 = ssub.s32 6784, 6784
      %26 = vsyncadd [#allocation6], %s25
      %s27 = sshll.u32 [#allocation5], 4
      %s28 = int_to_ptr.vmem [resolvable:$true] %s27
      %33 = dma.hbm_to_vmem [thread:$0]  %s1, 6784, %s28, [#allocation6], 128, 128, 8
    $region9: #{trans_encoder_forward.1} parent=1 // pred_fallthru
      _
    // Predicated region
    $region10: #{trans_encoder_forward.1} parent=1 // pred_check
      _
    $region11: #{trans_encoder_forward.1} parent=1 // pred_check_branch
      %35 = sbr.rel (0) target = $region13
    $region12: #{trans_encoder_forward.1} parent=1 // pred_region
      %36 = dma.done [#allocation3], 256
    $region13: #{trans_encoder_forward.1} parent=1 // pred_fallthru
      _
    // Predicated region
    $region14: #{trans_encoder_forward.1} parent=1 // pred_check
      _
    $region15: #{trans_encoder_forward.1} parent=1 // pred_check_branch
      %38 = sbr.rel (0) target = $region17
    $region16: #{trans_encoder_forward.1} parent=1 // pred_region
      %39 = dma.done [#allocation6], 6784
    $region17: #{trans_encoder_forward.1} parent=1 // pred_fallthru
      _
    %v40 = vld [vmem:[#allocation5] sm:$0xff]
    %v41 = vld [vmem:[#allocation5 + $0x8] sm:$0xff]
    %v42 = vld [vmem:[#allocation5 + $0x10] sm:$0x1]
    %v43 = vld [vmem:[#allocation5 + $0x18] sm:$0xff]
    %v44 = vld [vmem:[#allocation5 + $0x20] sm:$0xff]
    %v45 = vld [vmem:[#allocation2] sm:$0xff]
    %v46 = vld [vmem:[#allocation2 + $0x8] sm:$0xff]
    %v47 = vlaneseq
    %v48 = vshrl.u32 %v47, 7
    %v49 = vsub.s32 0, %v48
    %v50 = vrot.slane %v42, %v49
    %vm51 = vcmask 130048
    %v53 = vsel %vm51, %v45, 0
    %v56 = vsel %vm51, %v46, 0
    %58 = vmatprep.subr.mxu0 0.0
    %59 = vmatpush1.msra.mxu0 %v40
    %60 = vmatprep.subr.mxu0 0.0
    %61 = vmatpush1.msra.mxu0 %v41
    %62 = vmatprep.subr.mxu0 0.0
    %63 = vmatpush1.msra.mxu0 0.0
    %64 = vmatprep.subr.mxu0 0.0
    %65 = vmatpush1.msra.mxu0 0.0
    %66 = vmatprep.subr.mxu0 0.0
    %67 = vmatpush1.msra.mxu0 0.0
    %68 = vmatprep.subr.mxu0 0.0
    %69 = vmatpush1.msra.mxu0 0.0
    %70 = vmatprep.subr.mxu0 0.0
    %71 = vmatpush1.msra.mxu0 0.0
    %72 = vmatprep.subr.mxu0 0.0
    %73 = vmatpush1.msra.mxu0 0.0
    %74 = vmatprep.subr.mxu0 0.0
    %75 = vmatpush1.msra.mxu0 0.0
    %76 = vmatprep.subr.mxu0 0.0
    %77 = vmatpush1.msra.mxu0 0.0
    %78 = vmatprep.subr.mxu0 0.0
    %79 = vmatpush1.msra.mxu0 0.0
    %80 = vmatprep.subr.mxu0 0.0
    %81 = vmatpush1.msra.mxu0 0.0
    %82 = vmatprep.subr.mxu0 0.0
    %83 = vmatpush1.msra.mxu0 0.0
    %84 = vmatprep.subr.mxu0 0.0
    %85 = vmatpush1.msra.mxu0 0.0
    %86 = vmatprep.subr.mxu0 0.0
    %87 = vmatpush1.msra.mxu0 0.0
    %88 = vmatprep.subr.mxu0 0.0
    %89 = vmatpush1.msra.mxu0 0.0
    %90 = vmatprep.subr.mxu0 0.0
    %91 = vmatpush1.msra.mxu0 0.0
    %92 = vmatprep.subr.mxu0 0.0
    %93 = vmatpush1.msra.mxu0 0.0
    %94 = vmatprep.subr.mxu0 0.0
    %95 = vmatpush1.msra.mxu0 0.0
    %96 = vmatprep.subr.mxu0 0.0
    %97 = vmatpush1.msra.mxu0 0.0
    %98 = vmatprep.subr.mxu0 0.0
    %99 = vmatpush1.msra.mxu0 0.0
    %100 = vmatprep.subr.mxu0 0.0
    %101 = vmatpush1.msra.mxu0 0.0
    %102 = vmatprep.subr.mxu0 0.0
    %103 = vmatpush1.msra.mxu0 0.0
    %104 = vmatprep.subr.mxu0 0.0
    %105 = vmatpush1.msra.mxu0 0.0
    %106 = vmatprep.subr.mxu0 0.0
    %107 = vmatpush1.msra.mxu0 0.0
    %108 = vmatprep.subr.mxu0 0.0
    %109 = vmatpush1.msra.mxu0 0.0
    %110 = vmatprep.subr.mxu0 0.0
    %111 = vmatpush1.msra.mxu0 0.0
    %112 = vmatprep.subr.mxu0 0.0
    %113 = vmatpush1.msra.mxu0 0.0
    %114 = vmatprep.subr.mxu0 0.0
    %115 = vmatpush1.msra.mxu0 0.0
    %116 = vmatprep.subr.mxu0 0.0
    %117 = vmatpush1.msra.mxu0 0.0
    %118 = vmatprep.subr.mxu0 0.0
    %119 = vmatpush1.msra.mxu0 0.0
    %120 = vmatprep.subr.mxu0 0.0
    %121 = vmatpush1.msra.mxu0 0.0
    %122 = vmatprep.mubr.f32.mxu0 0.0
    %123 = vmatmul.mubr.f32.gmra.mrb[0].mxu0 %v53
    %v124 = vpop.f32.mrb[0].mxu0
    %v125 = vadd.f32 %v50, %v124
    %v126 = vpop.f32.mrb[0].mxu0
    %127 = vmatprep.mubr.f32.mxu0 0.0
    %128 = vmatmul.mubr.f32.gmra.mrb[0].mxu0 %v56
    %v129 = vpop.f32.mrb[0].mxu0
    %v130 = vadd.f32 %v50, %v129
    %v131 = vpop.f32.mrb[0].mxu0
    %132 = vdwg.mxu0
    %v133 = vadd.f32 %v125, %v43
    %v134 = vadd.f32 %v130, %v44
    %v135 = vld [vmem:[#allocation5 + $0x28] sm:$0xff]
    %v136 = vld [vmem:[#allocation5 + $0x30] sm:$0xff]
    %v137 = vld [vmem:[#allocation5 + $0x38] sm:$0xff]
    %v138 = vld [vmem:[#allocation5 + $0x40] sm:$0xff]
    %v139 = vld [vmem:[#allocation5 + $0x48] sm:$0xff]
    %v140 = vld [vmem:[#allocation5 + $0x50] sm:$0xff]
    %v141 = vld [vmem:[#allocation5 + $0x58] sm:$0x1]
    %v142 = vld [vmem:[#allocation5 + $0x60] sm:$0xff]
    %v143 = vld [vmem:[#allocation5 + $0x68] sm:$0xff]
    %v144 = vld [vmem:[#allocation5 + $0x70] sm:$0xff]
    %v145 = vld [vmem:[#allocation5 + $0x78] sm:$0xff]
    %v146 = vld [vmem:[#allocation5 + $0x80] sm:$0xff]
    %v147 = vld [vmem:[#allocation5 + $0x88] sm:$0xff]
    %v148 = vld [vmem:[#allocation5 + $0x90] sm:$0xff]
    %v149 = vld [vmem:[#allocation5 + $0x98] sm:$0xff]
    %v150 = vld [vmem:[#allocation5 + $0xa0] sm:$0x1]
    %v151 = vld [vmem:[#allocation5 + $0xa8] sm:$0xff]
    %v152 = vld [vmem:[#allocation5 + $0xb0] sm:$0xff]
    %v153 = vld [vmem:[#allocation5 + $0xb8] sm:$0xff]
    %v154 = vld [vmem:[#allocation5 + $0xc0] sm:$0xff]
    %v155 = vld [vmem:[#allocation5 + $0xc8] sm:$0xff]
    %v156 = vld [vmem:[#allocation5 + $0xd0] sm:$0xff]
    %v157 = vld [vmem:[#allocation5 + $0xd8] sm:$0xff]
    %v158 = vld [vmem:[#allocation5 + $0xe0] sm:$0xff]
    %v159 = vld [vmem:[#allocation5 + $0xe8] sm:$0x3f]
    %v160 = vlaneseq
    %v161 = vshrl.u32 %v160, 7
    %v162 = vsub.s32 0, %v161
    %v163 = vrot.slane %v141, %v162
    %vm164 = vcmask 261120
    %v166 = vsel %vm164, %v133, 0
    %v169 = vsel %vm164, %v134, 0
    %171 = vmatprep.subr.mxu0 0.0
    %172 = vmatpush1.msra.mxu0 %v137
    %173 = vmatprep.subr.mxu0 0.0
    %174 = vmatpush1.msra.mxu0 %v138
    %175 = vmatprep.subr.mxu0 0.0
    %176 = vmatpush1.msra.mxu0 %v139
    %177 = vmatprep.subr.mxu0 0.0
    %178 = vmatpush1.msra.mxu0 %v140
    %179 = vmatprep.subr.mxu0 0.0
    %180 = vmatpush1.msra.mxu0 0.0
    %181 = vmatprep.subr.mxu0 0.0
    %182 = vmatpush1.msra.mxu0 0.0
    %183 = vmatprep.subr.mxu0 0.0
    %184 = vmatpush1.msra.mxu0 0.0
    %185 = vmatprep.subr.mxu0 0.0
    %186 = vmatpush1.msra.mxu0 0.0
    %187 = vmatprep.subr.mxu0 0.0
    %188 = vmatpush1.msra.mxu0 0.0
    %189 = vmatprep.subr.mxu0 0.0
    %190 = vmatpush1.msra.mxu0 0.0
    %191 = vmatprep.subr.mxu0 0.0
    %192 = vmatpush1.msra.mxu0 0.0
    %193 = vmatprep.subr.mxu0 0.0
    %194 = vmatpush1.msra.mxu0 0.0
    %195 = vmatprep.subr.mxu0 0.0
    %196 = vmatpush1.msra.mxu0 0.0
    %197 = vmatprep.subr.mxu0 0.0
    %198 = vmatpush1.msra.mxu0 0.0
    %199 = vmatprep.subr.mxu0 0.0
    %200 = vmatpush1.msra.mxu0 0.0
    %201 = vmatprep.subr.mxu0 0.0
    %202 = vmatpush1.msra.mxu0 0.0
    %203 = vmatprep.subr.mxu0 0.0
    %204 = vmatpush1.msra.mxu0 0.0
    %205 = vmatprep.subr.mxu0 0.0
    %206 = vmatpush1.msra.mxu0 0.0
    %207 = vmatprep.subr.mxu0 0.0
    %208 = vmatpush1.msra.mxu0 0.0
    %209 = vmatprep.subr.mxu0 0.0
    %210 = vmatpush1.msra.mxu0 0.0
    %211 = vmatprep.subr.mxu0 0.0
    %212 = vmatpush1.msra.mxu0 0.0
    %213 = vmatprep.subr.mxu0 0.0
    %214 = vmatpush1.msra.mxu0 0.0
    %215 = vmatprep.subr.mxu0 0.0
    %216 = vmatpush1.msra.mxu0 0.0
    %217 = vmatprep.subr.mxu0 0.0
    %218 = vmatpush1.msra.mxu0 0.0
    %219 = vmatprep.subr.mxu0 0.0
    %220 = vmatpush1.msra.mxu0 0.0
    %221 = vmatprep.subr.mxu0 0.0
    %222 = vmatpush1.msra.mxu0 0.0
    %223 = vmatprep.subr.mxu0 0.0
    %224 = vmatpush1.msra.mxu0 0.0
    %225 = vmatprep.subr.mxu0 0.0
    %226 = vmatpush1.msra.mxu0 0.0
    %227 = vmatprep.subr.mxu0 0.0
    %228 = vmatpush1.msra.mxu0 0.0
    %229 = vmatprep.subr.mxu0 0.0
    %230 = vmatpush1.msra.mxu0 0.0
    %231 = vmatprep.subr.mxu0 0.0
    %232 = vmatpush1.msra.mxu0 0.0
    %233 = vmatprep.subr.mxu0 0.0
    %234 = vmatpush1.msra.mxu0 0.0
    %235 = vmatprep.mubr.f32.mxu0 0.0
    %236 = vmatmul.mubr.f32.gmra.mrb[0].mxu0 %v166
    %v237 = vpop.f32.mrb[0].mxu0
    %v238 = vadd.f32 %v163, %v237
    %v239 = vpop.f32.mrb[0].mxu0
    %240 = vmatprep.mubr.f32.mxu0 0.0
    %241 = vmatmul.mubr.f32.gmra.mrb[0].mxu0 %v169
    %v242 = vpop.f32.mrb[0].mxu0
    %v243 = vadd.f32 %v163, %v242
    %v244 = vpop.f32.mrb[0].mxu0
    %245 = vdwg.mxu0
    %248 = vrot.lane.b32.xlu0 %v238, 96
    %v249 = vpop.permute.xlu0 %248
    %250 = vrot.lane.b32.xlu0 %v243, 96
    %v251 = vpop.permute.xlu0 %250
    %vm252 = vcmask 64512
    %v253 = vsel %vm252, %v238, 0
    %v255 = vsel %vm252, %v243, 0
    %v257 = vsel %vm252, %v249, 0
    %v259 = vsel %vm252, %v251, 0
    %261 = vmatprep.subr.mxu0 0.0
    %262 = vmatpush1.xpose.msra.mxu0 %v257
    %263 = vmatprep.subr.mxu0 0.0
    %264 = vmatpush1.xpose.msra.mxu0 %v259
    %265 = vmatprep.subr.mxu0 0.0
    %266 = vmatpush1.xpose.msra.mxu0 0.0
    %267 = vmatprep.subr.mxu0 0.0
    %268 = vmatpush1.xpose.msra.mxu0 0.0
    %269 = vmatprep.subr.mxu0 0.0
    %270 = vmatpush1.xpose.msra.mxu0 0.0
    %271 = vmatprep.subr.mxu0 0.0
    %272 = vmatpush1.xpose.msra.mxu0 0.0
    %273 = vmatprep.subr.mxu0 0.0
    %274 = vmatpush1.xpose.msra.mxu0 0.0
    %275 = vmatprep.subr.mxu0 0.0
    %276 = vmatpush1.xpose.msra.mxu0 0.0
    %277 = vmatprep.subr.mxu0 0.0
    %278 = vmatpush1.xpose.msra.mxu0 0.0
    %279 = vmatprep.subr.mxu0 0.0
    %280 = vmatpush1.xpose.msra.mxu0 0.0
    %281 = vmatprep.subr.mxu0 0.0
    %282 = vmatpush1.xpose.msra.mxu0 0.0
    %283 = vmatprep.subr.mxu0 0.0
    %284 = vmatpush1.xpose.msra.mxu0 0.0
    %285 = vmatprep.subr.mxu0 0.0
    %286 = vmatpush1.xpose.msra.mxu0 0.0
    %287 = vmatprep.subr.mxu0 0.0
    %288 = vmatpush1.xpose.msra.mxu0 0.0
    %289 = vmatprep.subr.mxu0 0.0
    %290 = vmatpush1.xpose.msra.mxu0 0.0
    %291 = vmatprep.subr.mxu0 0.0
    %292 = vmatpush1.xpose.msra.mxu0 0.0
    %293 = vmatprep.subr.mxu0 0.0
    %294 = vmatpush1.xpose.msra.mxu0 0.0
    %295 = vmatprep.subr.mxu0 0.0
    %296 = vmatpush1.xpose.msra.mxu0 0.0
    %297 = vmatprep.subr.mxu0 0.0
    %298 = vmatpush1.xpose.msra.mxu0 0.0
    %299 = vmatprep.subr.mxu0 0.0
    %300 = vmatpush1.xpose.msra.mxu0 0.0
    %301 = vmatprep.subr.mxu0 0.0
    %302 = vmatpush1.xpose.msra.mxu0 0.0
    %303 = vmatprep.subr.mxu0 0.0
    %304 = vmatpush1.xpose.msra.mxu0 0.0
    %305 = vmatprep.subr.mxu0 0.0
    %306 = vmatpush1.xpose.msra.mxu0 0.0
    %307 = vmatprep.subr.mxu0 0.0
    %308 = vmatpush1.xpose.msra.mxu0 0.0
    %309 = vmatprep.subr.mxu0 0.0
    %310 = vmatpush1.xpose.msra.mxu0 0.0
    %311 = vmatprep.subr.mxu0 0.0
    %312 = vmatpush1.xpose.msra.mxu0 0.0
    %313 = vmatprep.subr.mxu0 0.0
    %314 = vmatpush1.xpose.msra.mxu0 0.0
    %315 = vmatprep.subr.mxu0 0.0
    %316 = vmatpush1.xpose.msra.mxu0 0.0
    %317 = vmatprep.subr.mxu0 0.0
    %318 = vmatpush1.xpose.msra.mxu0 0.0
    %319 = vmatprep.subr.mxu0 0.0
    %320 = vmatpush1.xpose.msra.mxu0 0.0
    %321 = vmatprep.subr.mxu0 0.0
    %322 = vmatpush1.xpose.msra.mxu0 0.0
    %323 = vmatprep.subr.mxu0 0.0
    %324 = vmatpush1.xpose.msra.mxu0 0.0
    %325 = vmatprep.mubr.f32.mxu0 0.0
    %326 = vmatmul.mubr.f32.gmra.mrb[0].mxu0 %v253
    %v327 = vpop.f32.mrb[0].mxu0
    %v328 = vadd.f32 %v135, %v327
    %v329 = vpop.f32.mrb[0].mxu0
    %330 = vmatprep.mubr.f32.mxu0 0.0
    %331 = vmatmul.mubr.f32.gmra.mrb[0].mxu0 %v255
    %v332 = vpop.f32.mrb[0].mxu0
    %v333 = vadd.f32 %v136, %v332
    %v334 = vpop.f32.mrb[0].mxu0
    %335 = vdwg.mxu0
    %v336 = vsel %vm51, %v328, -inf
    %337 = vmax.xlane.f32.xlu0 %v336
    %v338 = vpop.xlane.xlu0 %337
    %v339 = vsel %vm51, %v333, -inf
    %340 = vmax.xlane.f32.xlu0 %v339
    %v341 = vpop.xlane.xlu0 %340
    %v342 = vsub.f32 %v328, %v338
    %v343 = vsub.f32 %v333, %v341
    %v344 = vmul.f32 %v342, 1.442695
    %v345 = vpow.pop %v344
    %v346 = vmul.f32 %v343, 1.442695
    %v347 = vpow.pop %v346
    %v348 = vsel %vm51, %v345, 0.0
    %349 = vadd.xlane.f32.xlu0 %v348
    %v350 = vpop.xlane.xlu0 %349
    %v351 = vsel %vm51, %v347, 0.0
    %352 = vadd.xlane.f32.xlu0 %v351
    %v353 = vpop.xlane.xlu0 %352
    %v354 = vrcp.pop %v350
    %v355 = vrcp.pop %v353
    %v356 = vmul.f32 %v345, %v354
    %v357 = vmul.f32 %v347, %v355
    %358 = vrot.lane.b32.xlu0 %v238, 64
    %v359 = vpop.permute.xlu0 %358
    %360 = vrot.lane.b32.xlu0 %v243, 64
    %v361 = vpop.permute.xlu0 %360
    %v365 = vsel %vm51, %v356, 0
    %v368 = vsel %vm51, %v357, 0
    %370 = vmatprep.subr.mxu0 0.0
    %371 = vmatpush1.msra.mxu0 %v359
    %372 = vmatprep.subr.mxu0 0.0
    %373 = vmatpush1.msra.mxu0 %v361
    %374 = vmatprep.subr.mxu0 0.0
    %375 = vmatpush1.msra.mxu0 0.0
    %376 = vmatprep.subr.mxu0 0.0
    %377 = vmatpush1.msra.mxu0 0.0
    %378 = vmatprep.subr.mxu0 0.0
    %379 = vmatpush1.msra.mxu0 0.0
    %380 = vmatprep.subr.mxu0 0.0
    %381 = vmatpush1.msra.mxu0 0.0
    %382 = vmatprep.subr.mxu0 0.0
    %383 = vmatpush1.msra.mxu0 0.0
    %384 = vmatprep.subr.mxu0 0.0
    %385 = vmatpush1.msra.mxu0 0.0
    %386 = vmatprep.subr.mxu0 0.0
    %387 = vmatpush1.msra.mxu0 0.0
    %388 = vmatprep.subr.mxu0 0.0
    %389 = vmatpush1.msra.mxu0 0.0
    %390 = vmatprep.subr.mxu0 0.0
    %391 = vmatpush1.msra.mxu0 0.0
    %392 = vmatprep.subr.mxu0 0.0
    %393 = vmatpush1.msra.mxu0 0.0
    %394 = vmatprep.subr.mxu0 0.0
    %395 = vmatpush1.msra.mxu0 0.0
    %396 = vmatprep.subr.mxu0 0.0
    %397 = vmatpush1.msra.mxu0 0.0
    %398 = vmatprep.subr.mxu0 0.0
    %399 = vmatpush1.msra.mxu0 0.0
    %400 = vmatprep.subr.mxu0 0.0
    %401 = vmatpush1.msra.mxu0 0.0
    %402 = vmatprep.subr.mxu0 0.0
    %403 = vmatpush1.msra.mxu0 0.0
    %404 = vmatprep.subr.mxu0 0.0
    %405 = vmatpush1.msra.mxu0 0.0
    %406 = vmatprep.subr.mxu0 0.0
    %407 = vmatpush1.msra.mxu0 0.0
    %408 = vmatprep.subr.mxu0 0.0
    %409 = vmatpush1.msra.mxu0 0.0
    %410 = vmatprep.subr.mxu0 0.0
    %411 = vmatpush1.msra.mxu0 0.0
    %412 = vmatprep.subr.mxu0 0.0
    %413 = vmatpush1.msra.mxu0 0.0
    %414 = vmatprep.subr.mxu0 0.0
    %415 = vmatpush1.msra.mxu0 0.0
    %416 = vmatprep.subr.mxu0 0.0
    %417 = vmatpush1.msra.mxu0 0.0
    %418 = vmatprep.subr.mxu0 0.0
    %419 = vmatpush1.msra.mxu0 0.0
    %420 = vmatprep.subr.mxu0 0.0
    %421 = vmatpush1.msra.mxu0 0.0
    %422 = vmatprep.subr.mxu0 0.0
    %423 = vmatpush1.msra.mxu0 0.0
    %424 = vmatprep.subr.mxu0 0.0
    %425 = vmatpush1.msra.mxu0 0.0
    %426 = vmatprep.subr.mxu0 0.0
    %427 = vmatpush1.msra.mxu0 0.0
    %428 = vmatprep.subr.mxu0 0.0
    %429 = vmatpush1.msra.mxu0 0.0
    %430 = vmatprep.subr.mxu0 0.0
    %431 = vmatpush1.msra.mxu0 0.0
    %432 = vmatprep.subr.mxu0 0.0
    %433 = vmatpush1.msra.mxu0 0.0
    %434 = vmatprep.mubr.f32.mxu0 0.0
    %435 = vmatmul.mubr.f32.gmra.mrb[0].mxu0 %v365
    %v436 = vpop.f32.mrb[0].mxu0
    %v437 = vadd.f32 0.0, %v436
    %v438 = vpop.f32.mrb[0].mxu0
    %439 = vmatprep.mubr.f32.mxu0 0.0
    %440 = vmatmul.mubr.f32.gmra.mrb[0].mxu0 %v368
    %v441 = vpop.f32.mrb[0].mxu0
    %v442 = vadd.f32 0.0, %v441
    %v443 = vpop.f32.mrb[0].mxu0
    %444 = vdwg.mxu0
    %445 = vrot.lane.b32.xlu0 %v238, 120
    %v446 = vpop.permute.xlu0 %445
    %447 = vrot.lane.b32.xlu0 %v243, 120
    %v448 = vpop.permute.xlu0 %447
    %449 = vrot.lane.b32.xlu0 %v238, 88
    %v450 = vpop.permute.xlu0 %449
    %451 = vrot.lane.b32.xlu0 %v243, 88
    %v452 = vpop.permute.xlu0 %451
    %v453 = vsel %vm252, %v446, 0
    %v455 = vsel %vm252, %v448, 0
    %v457 = vsel %vm252, %v450, 0
    %v459 = vsel %vm252, %v452, 0
    %461 = vmatprep.subr.mxu0 0.0
    %462 = vmatpush1.xpose.msra.mxu0 %v457
    %463 = vmatprep.subr.mxu0 0.0
    %464 = vmatpush1.xpose.msra.mxu0 %v459
    %465 = vmatprep.subr.mxu0 0.0
    %466 = vmatpush1.xpose.msra.mxu0 0.0
    %467 = vmatprep.subr.mxu0 0.0
    %468 = vmatpush1.xpose.msra.mxu0 0.0
    %469 = vmatprep.subr.mxu0 0.0
    %470 = vmatpush1.xpose.msra.mxu0 0.0
    %471 = vmatprep.subr.mxu0 0.0
    %472 = vmatpush1.xpose.msra.mxu0 0.0
    %473 = vmatprep.subr.mxu0 0.0
    %474 = vmatpush1.xpose.msra.mxu0 0.0
    %475 = vmatprep.subr.mxu0 0.0
    %476 = vmatpush1.xpose.msra.mxu0 0.0
    %477 = vmatprep.subr.mxu0 0.0
    %478 = vmatpush1.xpose.msra.mxu0 0.0
    %479 = vmatprep.subr.mxu0 0.0
    %480 = vmatpush1.xpose.msra.mxu0 0.0
    %481 = vmatprep.subr.mxu0 0.0
    %482 = vmatpush1.xpose.msra.mxu0 0.0
    %483 = vmatprep.subr.mxu0 0.0
    %484 = vmatpush1.xpose.msra.mxu0 0.0
    %485 = vmatprep.subr.mxu0 0.0
    %486 = vmatpush1.xpose.msra.mxu0 0.0
    %487 = vmatprep.subr.mxu0 0.0
    %488 = vmatpush1.xpose.msra.mxu0 0.0
    %489 = vmatprep.subr.mxu0 0.0
    %490 = vmatpush1.xpose.msra.mxu0 0.0
    %491 = vmatprep.subr.mxu0 0.0
    %492 = vmatpush1.xpose.msra.mxu0 0.0
    %493 = vmatprep.subr.mxu0 0.0
    %494 = vmatpush1.xpose.msra.mxu0 0.0
    %495 = vmatprep.subr.mxu0 0.0
    %496 = vmatpush1.xpose.msra.mxu0 0.0
    %497 = vmatprep.subr.mxu0 0.0
    %498 = vmatpush1.xpose.msra.mxu0 0.0
    %499 = vmatprep.subr.mxu0 0.0
    %500 = vmatpush1.xpose.msra.mxu0 0.0
    %501 = vmatprep.subr.mxu0 0.0
    %502 = vmatpush1.xpose.msra.mxu0 0.0
    %503 = vmatprep.subr.mxu0 0.0
    %504 = vmatpush1.xpose.msra.mxu0 0.0
    %505 = vmatprep.subr.mxu0 0.0
    %506 = vmatpush1.xpose.msra.mxu0 0.0
    %507 = vmatprep.subr.mxu0 0.0
    %508 = vmatpush1.xpose.msra.mxu0 0.0
    %509 = vmatprep.subr.mxu0 0.0
    %510 = vmatpush1.xpose.msra.mxu0 0.0
    %511 = vmatprep.subr.mxu0 0.0
    %512 = vmatpush1.xpose.msra.mxu0 0.0
    %513 = vmatprep.subr.mxu0 0.0
    %514 = vmatpush1.xpose.msra.mxu0 0.0
    %515 = vmatprep.subr.mxu0 0.0
    %516 = vmatpush1.xpose.msra.mxu0 0.0
    %517 = vmatprep.subr.mxu0 0.0
    %518 = vmatpush1.xpose.msra.mxu0 0.0
    %519 = vmatprep.subr.mxu0 0.0
    %520 = vmatpush1.xpose.msra.mxu0 0.0
    %521 = vmatprep.subr.mxu0 0.0
    %522 = vmatpush1.xpose.msra.mxu0 0.0
    %523 = vmatprep.subr.mxu0 0.0
    %524 = vmatpush1.xpose.msra.mxu0 0.0
    %525 = vmatprep.mubr.f32.mxu0 0.0
    %526 = vmatmul.mubr.f32.gmra.mrb[0].mxu0 %v453
    %v527 = vpop.f32.mrb[0].mxu0
    %v528 = vadd.f32 %v135, %v527
    %v529 = vpop.f32.mrb[0].mxu0
    %530 = vmatprep.mubr.f32.mxu0 0.0
    %531 = vmatmul.mubr.f32.gmra.mrb[0].mxu0 %v455
    %v532 = vpop.f32.mrb[0].mxu0
    %v533 = vadd.f32 %v136, %v532
    %v534 = vpop.f32.mrb[0].mxu0
    %535 = vdwg.mxu0
    %v536 = vsel %vm51, %v528, -inf
    %537 = vmax.xlane.f32.xlu0 %v536
    %v538 = vpop.xlane.xlu0 %537
    %v539 = vsel %vm51, %v533, -inf
    %540 = vmax.xlane.f32.xlu0 %v539
    %v541 = vpop.xlane.xlu0 %540
    %v542 = vsub.f32 %v528, %v538
    %v543 = vsub.f32 %v533, %v541
    %v544 = vmul.f32 %v542, 1.442695
    %v545 = vpow.pop %v544
    %v546 = vmul.f32 %v543, 1.442695
    %v547 = vpow.pop %v546
    %v548 = vsel %vm51, %v545, 0.0
    %549 = vadd.xlane.f32.xlu0 %v548
    %v550 = vpop.xlane.xlu0 %549
    %v551 = vsel %vm51, %v547, 0.0
    %552 = vadd.xlane.f32.xlu0 %v551
    %v553 = vpop.xlane.xlu0 %552
    %v554 = vrcp.pop %v550
    %v555 = vrcp.pop %v553
    %v556 = vmul.f32 %v545, %v554
    %v557 = vmul.f32 %v547, %v555
    %558 = vrot.lane.b32.xlu0 %v238, 56
    %v559 = vpop.permute.xlu0 %558
    %560 = vrot.lane.b32.xlu0 %v243, 56
    %v561 = vpop.permute.xlu0 %560
    %v565 = vsel %vm51, %v556, 0
    %v568 = vsel %vm51, %v557, 0
    %570 = vmatprep.subr.mxu0 0.0
    %571 = vmatpush1.msra.mxu0 %v559
    %572 = vmatprep.subr.mxu0 0.0
    %573 = vmatpush1.msra.mxu0 %v561
    %574 = vmatprep.subr.mxu0 0.0
    %575 = vmatpush1.msra.mxu0 0.0
    %576 = vmatprep.subr.mxu0 0.0
    %577 = vmatpush1.msra.mxu0 0.0
    %578 = vmatprep.subr.mxu0 0.0
    %579 = vmatpush1.msra.mxu0 0.0
    %580 = vmatprep.subr.mxu0 0.0
    %581 = vmatpush1.msra.mxu0 0.0
    %582 = vmatprep.subr.mxu0 0.0
    %583 = vmatpush1.msra.mxu0 0.0
    %584 = vmatprep.subr.mxu0 0.0
    %585 = vmatpush1.msra.mxu0 0.0
    %586 = vmatprep.subr.mxu0 0.0
    %587 = vmatpush1.msra.mxu0 0.0
    %588 = vmatprep.subr.mxu0 0.0
    %589 = vmatpush1.msra.mxu0 0.0
    %590 = vmatprep.subr.mxu0 0.0
    %591 = vmatpush1.msra.mxu0 0.0
    %592 = vmatprep.subr.mxu0 0.0
    %593 = vmatpush1.msra.mxu0 0.0
    %594 = vmatprep.subr.mxu0 0.0
    %595 = vmatpush1.msra.mxu0 0.0
    %596 = vmatprep.subr.mxu0 0.0
    %597 = vmatpush1.msra.mxu0 0.0
    %598 = vmatprep.subr.mxu0 0.0
    %599 = vmatpush1.msra.mxu0 0.0
    %600 = vmatprep.subr.mxu0 0.0
    %601 = vmatpush1.msra.mxu0 0.0
    %602 = vmatprep.subr.mxu0 0.0
    %603 = vmatpush1.msra.mxu0 0.0
    %604 = vmatprep.subr.mxu0 0.0
    %605 = vmatpush1.msra.mxu0 0.0
    %606 = vmatprep.subr.mxu0 0.0
    %607 = vmatpush1.msra.mxu0 0.0
    %608 = vmatprep.subr.mxu0 0.0
    %609 = vmatpush1.msra.mxu0 0.0
    %610 = vmatprep.subr.mxu0 0.0
    %611 = vmatpush1.msra.mxu0 0.0
    %612 = vmatprep.subr.mxu0 0.0
    %613 = vmatpush1.msra.mxu0 0.0
    %614 = vmatprep.subr.mxu0 0.0
    %615 = vmatpush1.msra.mxu0 0.0
    %616 = vmatprep.subr.mxu0 0.0
    %617 = vmatpush1.msra.mxu0 0.0
    %618 = vmatprep.subr.mxu0 0.0
    %619 = vmatpush1.msra.mxu0 0.0
    %620 = vmatprep.subr.mxu0 0.0
    %621 = vmatpush1.msra.mxu0 0.0
    %622 = vmatprep.subr.mxu0 0.0
    %623 = vmatpush1.msra.mxu0 0.0
    %624 = vmatprep.subr.mxu0 0.0
    %625 = vmatpush1.msra.mxu0 0.0
    %626 = vmatprep.subr.mxu0 0.0
    %627 = vmatpush1.msra.mxu0 0.0
    %628 = vmatprep.subr.mxu0 0.0
    %629 = vmatpush1.msra.mxu0 0.0
    %630 = vmatprep.subr.mxu0 0.0
    %631 = vmatpush1.msra.mxu0 0.0
    %632 = vmatprep.subr.mxu0 0.0
    %633 = vmatpush1.msra.mxu0 0.0
    %634 = vmatprep.mubr.f32.mxu0 0.0
    %635 = vmatmul.mubr.f32.gmra.mrb[0].mxu0 %v565
    %v636 = vpop.f32.mrb[0].mxu0
    %v637 = vadd.f32 0.0, %v636
    %v638 = vpop.f32.mrb[0].mxu0
    %639 = vmatprep.mubr.f32.mxu0 0.0
    %640 = vmatmul.mubr.f32.gmra.mrb[0].mxu0 %v568
    %v641 = vpop.f32.mrb[0].mxu0
    %v642 = vadd.f32 0.0, %v641
    %v643 = vpop.f32.mrb[0].mxu0
    %644 = vdwg.mxu0
    %645 = vrot.lane.b32.xlu0 %v238, 112
    %v646 = vpop.permute.xlu0 %645
    %647 = vrot.lane.b32.xlu0 %v243, 112
    %v648 = vpop.permute.xlu0 %647
    %649 = vrot.lane.b32.xlu0 %v238, 80
    %v650 = vpop.permute.xlu0 %649
    %651 = vrot.lane.b32.xlu0 %v243, 80
    %v652 = vpop.permute.xlu0 %651
    %v653 = vsel %vm252, %v646, 0
    %v655 = vsel %vm252, %v648, 0
    %v657 = vsel %vm252, %v650, 0
    %v659 = vsel %vm252, %v652, 0
    %661 = vmatprep.subr.mxu0 0.0
    %662 = vmatpush1.xpose.msra.mxu0 %v657
    %663 = vmatprep.subr.mxu0 0.0
    %664 = vmatpush1.xpose.msra.mxu0 %v659
    %665 = vmatprep.subr.mxu0 0.0
    %666 = vmatpush1.xpose.msra.mxu0 0.0
    %667 = vmatprep.subr.mxu0 0.0
    %668 = vmatpush1.xpose.msra.mxu0 0.0
    %669 = vmatprep.subr.mxu0 0.0
    %670 = vmatpush1.xpose.msra.mxu0 0.0
    %671 = vmatprep.subr.mxu0 0.0
    %672 = vmatpush1.xpose.msra.mxu0 0.0
    %673 = vmatprep.subr.mxu0 0.0
    %674 = vmatpush1.xpose.msra.mxu0 0.0
    %675 = vmatprep.subr.mxu0 0.0
    %676 = vmatpush1.xpose.msra.mxu0 0.0
    %677 = vmatprep.subr.mxu0 0.0
    %678 = vmatpush1.xpose.msra.mxu0 0.0
    %679 = vmatprep.subr.mxu0 0.0
    %680 = vmatpush1.xpose.msra.mxu0 0.0
    %681 = vmatprep.subr.mxu0 0.0
    %682 = vmatpush1.xpose.msra.mxu0 0.0
    %683 = vmatprep.subr.mxu0 0.0
    %684 = vmatpush1.xpose.msra.mxu0 0.0
    %685 = vmatprep.subr.mxu0 0.0
    %686 = vmatpush1.xpose.msra.mxu0 0.0
    %687 = vmatprep.subr.mxu0 0.0
    %688 = vmatpush1.xpose.msra.mxu0 0.0
    %689 = vmatprep.subr.mxu0 0.0
    %690 = vmatpush1.xpose.msra.mxu0 0.0
    %691 = vmatprep.subr.mxu0 0.0
    %692 = vmatpush1.xpose.msra.mxu0 0.0
    %693 = vmatprep.subr.mxu0 0.0
    %694 = vmatpush1.xpose.msra.mxu0 0.0
    %695 = vmatprep.subr.mxu0 0.0
    %696 = vmatpush1.xpose.msra.mxu0 0.0
    %697 = vmatprep.subr.mxu0 0.0
    %698 = vmatpush1.xpose.msra.mxu0 0.0
    %699 = vmatprep.subr.mxu0 0.0
    %700 = vmatpush1.xpose.msra.mxu0 0.0
    %701 = vmatprep.subr.mxu0 0.0
    %702 = vmatpush1.xpose.msra.mxu0 0.0
    %703 = vmatprep.subr.mxu0 0.0
    %704 = vmatpush1.xpose.msra.mxu0 0.0
    %705 = vmatprep.subr.mxu0 0.0
    %706 = vmatpush1.xpose.msra.mxu0 0.0
    %707 = vmatprep.subr.mxu0 0.0
    %708 = vmatpush1.xpose.msra.mxu0 0.0
    %709 = vmatprep.subr.mxu0 0.0
    %710 = vmatpush1.xpose.msra.mxu0 0.0
    %711 = vmatprep.subr.mxu0 0.0
    %712 = vmatpush1.xpose.msra.mxu0 0.0
    %713 = vmatprep.subr.mxu0 0.0
    %714 = vmatpush1.xpose.msra.mxu0 0.0
    %715 = vmatprep.subr.mxu0 0.0
    %716 = vmatpush1.xpose.msra.mxu0 0.0
    %717 = vmatprep.subr.mxu0 0.0
    %718 = vmatpush1.xpose.msra.mxu0 0.0
    %719 = vmatprep.subr.mxu0 0.0
    %720 = vmatpush1.xpose.msra.mxu0 0.0
    %721 = vmatprep.subr.mxu0 0.0
    %722 = vmatpush1.xpose.msra.mxu0 0.0
    %723 = vmatprep.subr.mxu0 0.0
    %724 = vmatpush1.xpose.msra.mxu0 0.0
    %725 = vmatprep.mubr.f32.mxu0 0.0
    %726 = vmatmul.mubr.f32.gmra.mrb[0].mxu0 %v653
    %v727 = vpop.f32.mrb[0].mxu0
    %v728 = vadd.f32 %v135, %v727
    %v729 = vpop.f32.mrb[0].mxu0
    %730 = vmatprep.mubr.f32.mxu0 0.0
    %731 = vmatmul.mubr.f32.gmra.mrb[0].mxu0 %v655
    %v732 = vpop.f32.mrb[0].mxu0
    %v733 = vadd.f32 %v136, %v732
    %v734 = vpop.f32.mrb[0].mxu0
    %735 = vdwg.mxu0
    %v736 = vsel %vm51, %v728, -inf
    %737 = vmax.xlane.f32.xlu0 %v736
    %v738 = vpop.xlane.xlu0 %737
    %v739 = vsel %vm51, %v733, -inf
    %740 = vmax.xlane.f32.xlu0 %v739
    %v741 = vpop.xlane.xlu0 %740
    %v742 = vsub.f32 %v728, %v738
    %v743 = vsub.f32 %v733, %v741
    %v744 = vmul.f32 %v742, 1.442695
    %v745 = vpow.pop %v744
    %v746 = vmul.f32 %v743, 1.442695
    %v747 = vpow.pop %v746
    %v748 = vsel %vm51, %v745, 0.0
    %749 = vadd.xlane.f32.xlu0 %v748
    %v750 = vpop.xlane.xlu0 %749
    %v751 = vsel %vm51, %v747, 0.0
    %752 = vadd.xlane.f32.xlu0 %v751
    %v753 = vpop.xlane.xlu0 %752
    %v754 = vrcp.pop %v750
    %v755 = vrcp.pop %v753
    %v756 = vmul.f32 %v745, %v754
    %v757 = vmul.f32 %v747, %v755
    %758 = vrot.lane.b32.xlu0 %v238, 48
    %v759 = vpop.permute.xlu0 %758
    %760 = vrot.lane.b32.xlu0 %v243, 48
    %v761 = vpop.permute.xlu0 %760
    %v765 = vsel %vm51, %v756, 0
    %v768 = vsel %vm51, %v757, 0
    %770 = vmatprep.subr.mxu0 0.0
    %771 = vmatpush1.msra.mxu0 %v759
    %772 = vmatprep.subr.mxu0 0.0
    %773 = vmatpush1.msra.mxu0 %v761
    %774 = vmatprep.subr.mxu0 0.0
    %775 = vmatpush1.msra.mxu0 0.0
    %776 = vmatprep.subr.mxu0 0.0
    %777 = vmatpush1.msra.mxu0 0.0
    %778 = vmatprep.subr.mxu0 0.0
    %779 = vmatpush1.msra.mxu0 0.0
    %780 = vmatprep.subr.mxu0 0.0
    %781 = vmatpush1.msra.mxu0 0.0
    %782 = vmatprep.subr.mxu0 0.0
    %783 = vmatpush1.msra.mxu0 0.0
    %784 = vmatprep.subr.mxu0 0.0
    %785 = vmatpush1.msra.mxu0 0.0
    %786 = vmatprep.subr.mxu0 0.0
    %787 = vmatpush1.msra.mxu0 0.0
    %788 = vmatprep.subr.mxu0 0.0
    %789 = vmatpush1.msra.mxu0 0.0
    %790 = vmatprep.subr.mxu0 0.0
    %791 = vmatpush1.msra.mxu0 0.0
    %792 = vmatprep.subr.mxu0 0.0
    %793 = vmatpush1.msra.mxu0 0.0
    %794 = vmatprep.subr.mxu0 0.0
    %795 = vmatpush1.msra.mxu0 0.0
    %796 = vmatprep.subr.mxu0 0.0
    %797 = vmatpush1.msra.mxu0 0.0
    %798 = vmatprep.subr.mxu0 0.0
    %799 = vmatpush1.msra.mxu0 0.0
    %800 = vmatprep.subr.mxu0 0.0
    %801 = vmatpush1.msra.mxu0 0.0
    %802 = vmatprep.subr.mxu0 0.0
    %803 = vmatpush1.msra.mxu0 0.0
    %804 = vmatprep.subr.mxu0 0.0
    %805 = vmatpush1.msra.mxu0 0.0
    %806 = vmatprep.subr.mxu0 0.0
    %807 = vmatpush1.msra.mxu0 0.0
    %808 = vmatprep.subr.mxu0 0.0
    %809 = vmatpush1.msra.mxu0 0.0
    %810 = vmatprep.subr.mxu0 0.0
    %811 = vmatpush1.msra.mxu0 0.0
    %812 = vmatprep.subr.mxu0 0.0
    %813 = vmatpush1.msra.mxu0 0.0
    %814 = vmatprep.subr.mxu0 0.0
    %815 = vmatpush1.msra.mxu0 0.0
    %816 = vmatprep.subr.mxu0 0.0
    %817 = vmatpush1.msra.mxu0 0.0
    %818 = vmatprep.subr.mxu0 0.0
    %819 = vmatpush1.msra.mxu0 0.0
    %820 = vmatprep.subr.mxu0 0.0
    %821 = vmatpush1.msra.mxu0 0.0
    %822 = vmatprep.subr.mxu0 0.0
    %823 = vmatpush1.msra.mxu0 0.0
    %824 = vmatprep.subr.mxu0 0.0
    %825 = vmatpush1.msra.mxu0 0.0
    %826 = vmatprep.subr.mxu0 0.0
    %827 = vmatpush1.msra.mxu0 0.0
    %828 = vmatprep.subr.mxu0 0.0
    %829 = vmatpush1.msra.mxu0 0.0
    %830 = vmatprep.subr.mxu0 0.0
    %831 = vmatpush1.msra.mxu0 0.0
    %832 = vmatprep.subr.mxu0 0.0
    %833 = vmatpush1.msra.mxu0 0.0
    %834 = vmatprep.mubr.f32.mxu0 0.0
    %835 = vmatmul.mubr.f32.gmra.mrb[0].mxu0 %v765
    %v836 = vpop.f32.mrb[0].mxu0
    %v837 = vadd.f32 0.0, %v836
    %v838 = vpop.f32.mrb[0].mxu0
    %839 = vmatprep.mubr.f32.mxu0 0.0
    %840 = vmatmul.mubr.f32.gmra.mrb[0].mxu0 %v768
    %v841 = vpop.f32.mrb[0].mxu0
    %v842 = vadd.f32 0.0, %v841
    %v843 = vpop.f32.mrb[0].mxu0
    %844 = vdwg.mxu0
    %845 = vrot.lane.b32.xlu0 %v238, 104
    %v846 = vpop.permute.xlu0 %845
    %847 = vrot.lane.b32.xlu0 %v243, 104
    %v848 = vpop.permute.xlu0 %847
    %849 = vrot.lane.b32.xlu0 %v238, 72
    %v850 = vpop.permute.xlu0 %849
    %851 = vrot.lane.b32.xlu0 %v243, 72
    %v852 = vpop.permute.xlu0 %851
    %v853 = vsel %vm252, %v846, 0
    %v855 = vsel %vm252, %v848, 0
    %v857 = vsel %vm252, %v850, 0
    %v859 = vsel %vm252, %v852, 0
    %861 = vmatprep.subr.mxu0 0.0
    %862 = vmatpush1.xpose.msra.mxu0 %v857
    %863 = vmatprep.subr.mxu0 0.0
    %864 = vmatpush1.xpose.msra.mxu0 %v859
    %865 = vmatprep.subr.mxu0 0.0
    %866 = vmatpush1.xpose.msra.mxu0 0.0
    %867 = vmatprep.subr.mxu0 0.0
    %868 = vmatpush1.xpose.msra.mxu0 0.0
    %869 = vmatprep.subr.mxu0 0.0
    %870 = vmatpush1.xpose.msra.mxu0 0.0
    %871 = vmatprep.subr.mxu0 0.0
    %872 = vmatpush1.xpose.msra.mxu0 0.0
    %873 = vmatprep.subr.mxu0 0.0
    %874 = vmatpush1.xpose.msra.mxu0 0.0
    %875 = vmatprep.subr.mxu0 0.0
    %876 = vmatpush1.xpose.msra.mxu0 0.0
    %877 = vmatprep.subr.mxu0 0.0
    %878 = vmatpush1.xpose.msra.mxu0 0.0
    %879 = vmatprep.subr.mxu0 0.0
    %880 = vmatpush1.xpose.msra.mxu0 0.0
    %881 = vmatprep.subr.mxu0 0.0
    %882 = vmatpush1.xpose.msra.mxu0 0.0
    %883 = vmatprep.subr.mxu0 0.0
    %884 = vmatpush1.xpose.msra.mxu0 0.0
    %885 = vmatprep.subr.mxu0 0.0
    %886 = vmatpush1.xpose.msra.mxu0 0.0
    %887 = vmatprep.subr.mxu0 0.0
    %888 = vmatpush1.xpose.msra.mxu0 0.0
    %889 = vmatprep.subr.mxu0 0.0
    %890 = vmatpush1.xpose.msra.mxu0 0.0
    %891 = vmatprep.subr.mxu0 0.0
    %892 = vmatpush1.xpose.msra.mxu0 0.0
    %893 = vmatprep.subr.mxu0 0.0
    %894 = vmatpush1.xpose.msra.mxu0 0.0
    %895 = vmatprep.subr.mxu0 0.0
    %896 = vmatpush1.xpose.msra.mxu0 0.0
    %897 = vmatprep.subr.mxu0 0.0
    %898 = vmatpush1.xpose.msra.mxu0 0.0
    %899 = vmatprep.subr.mxu0 0.0
    %900 = vmatpush1.xpose.msra.mxu0 0.0
    %901 = vmatprep.subr.mxu0 0.0
    %902 = vmatpush1.xpose.msra.mxu0 0.0
    %903 = vmatprep.subr.mxu0 0.0
    %904 = vmatpush1.xpose.msra.mxu0 0.0
    %905 = vmatprep.subr.mxu0 0.0
    %906 = vmatpush1.xpose.msra.mxu0 0.0
    %907 = vmatprep.subr.mxu0 0.0
    %908 = vmatpush1.xpose.msra.mxu0 0.0
    %909 = vmatprep.subr.mxu0 0.0
    %910 = vmatpush1.xpose.msra.mxu0 0.0
    %911 = vmatprep.subr.mxu0 0.0
    %912 = vmatpush1.xpose.msra.mxu0 0.0
    %913 = vmatprep.subr.mxu0 0.0
    %914 = vmatpush1.xpose.msra.mxu0 0.0
    %915 = vmatprep.subr.mxu0 0.0
    %916 = vmatpush1.xpose.msra.mxu0 0.0
    %917 = vmatprep.subr.mxu0 0.0
    %918 = vmatpush1.xpose.msra.mxu0 0.0
    %919 = vmatprep.subr.mxu0 0.0
    %920 = vmatpush1.xpose.msra.mxu0 0.0
    %921 = vmatprep.subr.mxu0 0.0
    %922 = vmatpush1.xpose.msra.mxu0 0.0
    %923 = vmatprep.subr.mxu0 0.0
    %924 = vmatpush1.xpose.msra.mxu0 0.0
    %925 = vmatprep.mubr.f32.mxu0 0.0
    %926 = vmatmul.mubr.f32.gmra.mrb[0].mxu0 %v853
    %v927 = vpop.f32.mrb[0].mxu0
    %v928 = vadd.f32 %v135, %v927
    %v929 = vpop.f32.mrb[0].mxu0
    %930 = vmatprep.mubr.f32.mxu0 0.0
    %931 = vmatmul.mubr.f32.gmra.mrb[0].mxu0 %v855
    %v932 = vpop.f32.mrb[0].mxu0
    %v933 = vadd.f32 %v136, %v932
    %v934 = vpop.f32.mrb[0].mxu0
    %935 = vdwg.mxu0
    %v936 = vsel %vm51, %v928, -inf
    %937 = vmax.xlane.f32.xlu0 %v936
    %v938 = vpop.xlane.xlu0 %937
    %v939 = vsel %vm51, %v933, -inf
    %940 = vmax.xlane.f32.xlu0 %v939
    %v941 = vpop.xlane.xlu0 %940
    %v942 = vsub.f32 %v928, %v938
    %v943 = vsub.f32 %v933, %v941
    %v944 = vmul.f32 %v942, 1.442695
    %v945 = vpow.pop %v944
    %v946 = vmul.f32 %v943, 1.442695
    %v947 = vpow.pop %v946
    %v948 = vsel %vm51, %v945, 0.0
    %949 = vadd.xlane.f32.xlu0 %v948
    %v950 = vpop.xlane.xlu0 %949
    %v951 = vsel %vm51, %v947, 0.0
    %952 = vadd.xlane.f32.xlu0 %v951
    %v953 = vpop.xlane.xlu0 %952
    %v954 = vrcp.pop %v950
    %v955 = vrcp.pop %v953
    %v956 = vmul.f32 %v945, %v954
    %v957 = vmul.f32 %v947, %v955
    %958 = vrot.lane.b32.xlu0 %v238, 40
    %v959 = vpop.permute.xlu0 %958
    %960 = vrot.lane.b32.xlu0 %v243, 40
    %v961 = vpop.permute.xlu0 %960
    %v965 = vsel %vm51, %v956, 0
    %v968 = vsel %vm51, %v957, 0
    %970 = vmatprep.subr.mxu0 0.0
    %971 = vmatpush1.msra.mxu0 %v959
    %972 = vmatprep.subr.mxu0 0.0
    %973 = vmatpush1.msra.mxu0 %v961
    %974 = vmatprep.subr.mxu0 0.0
    %975 = vmatpush1.msra.mxu0 0.0
    %976 = vmatprep.subr.mxu0 0.0
    %977 = vmatpush1.msra.mxu0 0.0
    %978 = vmatprep.subr.mxu0 0.0
    %979 = vmatpush1.msra.mxu0 0.0
    %980 = vmatprep.subr.mxu0 0.0
    %981 = vmatpush1.msra.mxu0 0.0
    %982 = vmatprep.subr.mxu0 0.0
    %983 = vmatpush1.msra.mxu0 0.0
    %984 = vmatprep.subr.mxu0 0.0
    %985 = vmatpush1.msra.mxu0 0.0
    %986 = vmatprep.subr.mxu0 0.0
    %987 = vmatpush1.msra.mxu0 0.0
    %988 = vmatprep.subr.mxu0 0.0
    %989 = vmatpush1.msra.mxu0 0.0
    %990 = vmatprep.subr.mxu0 0.0
    %991 = vmatpush1.msra.mxu0 0.0
    %992 = vmatprep.subr.mxu0 0.0
    %993 = vmatpush1.msra.mxu0 0.0
    %994 = vmatprep.subr.mxu0 0.0
    %995 = vmatpush1.msra.mxu0 0.0
    %996 = vmatprep.subr.mxu0 0.0
    %997 = vmatpush1.msra.mxu0 0.0
    %998 = vmatprep.subr.mxu0 0.0
    %999 = vmatpush1.msra.mxu0 0.0
    %1000 = vmatprep.subr.mxu0 0.0
    %1001 = vmatpush1.msra.mxu0 0.0
    %1002 = vmatprep.subr.mxu0 0.0
    %1003 = vmatpush1.msra.mxu0 0.0
    %1004 = vmatprep.subr.mxu0 0.0
    %1005 = vmatpush1.msra.mxu0 0.0
    %1006 = vmatprep.subr.mxu0 0.0
    %1007 = vmatpush1.msra.mxu0 0.0
    %1008 = vmatprep.subr.mxu0 0.0
    %1009 = vmatpush1.msra.mxu0 0.0
    %1010 = vmatprep.subr.mxu0 0.0
    %1011 = vmatpush1.msra.mxu0 0.0
    %1012 = vmatprep.subr.mxu0 0.0
    %1013 = vmatpush1.msra.mxu0 0.0
    %1014 = vmatprep.subr.mxu0 0.0
    %1015 = vmatpush1.msra.mxu0 0.0
    %1016 = vmatprep.subr.mxu0 0.0
    %1017 = vmatpush1.msra.mxu0 0.0
    %1018 = vmatprep.subr.mxu0 0.0
    %1019 = vmatpush1.msra.mxu0 0.0
    %1020 = vmatprep.subr.mxu0 0.0
    %1021 = vmatpush1.msra.mxu0 0.0
    %1022 = vmatprep.subr.mxu0 0.0
    %1023 = vmatpush1.msra.mxu0 0.0
    %1024 = vmatprep.subr.mxu0 0.0
    %1025 = vmatpush1.msra.mxu0 0.0
    %1026 = vmatprep.subr.mxu0 0.0
    %1027 = vmatpush1.msra.mxu0 0.0
    %1028 = vmatprep.subr.mxu0 0.0
    %1029 = vmatpush1.msra.mxu0 0.0
    %1030 = vmatprep.subr.mxu0 0.0
    %1031 = vmatpush1.msra.mxu0 0.0
    %1032 = vmatprep.subr.mxu0 0.0
    %1033 = vmatpush1.msra.mxu0 0.0
    %1034 = vmatprep.mubr.f32.mxu0 0.0
    %1035 = vmatmul.mubr.f32.gmra.mrb[0].mxu0 %v965
    %v1036 = vpop.f32.mrb[0].mxu0
    %v1037 = vadd.f32 0.0, %v1036
    %v1038 = vpop.f32.mrb[0].mxu0
    %1039 = vmatprep.mubr.f32.mxu0 0.0
    %1040 = vmatmul.mubr.f32.gmra.mrb[0].mxu0 %v968
    %v1041 = vpop.f32.mrb[0].mxu0
    %v1042 = vadd.f32 0.0, %v1041
    %v1043 = vpop.f32.mrb[0].mxu0
    %1044 = vdwg.mxu0
    %1047 = vrot.lane.b32.xlu0 %v637, 8
    %v1048 = vpop.permute.xlu0 %1047
    %1049 = vrot.lane.b32.xlu0 %v642, 8
    %v1050 = vpop.permute.xlu0 %1049
    %1055 = vrot.lane.b32.xlu0 %v837, 16
    %v1056 = vpop.permute.xlu0 %1055
    %1057 = vrot.lane.b32.xlu0 %v842, 16
    %v1058 = vpop.permute.xlu0 %1057
    %1063 = vrot.lane.b32.xlu0 %v1037, 24
    %v1064 = vpop.permute.xlu0 %1063
    %1065 = vrot.lane.b32.xlu0 %v1042, 24
    %v1066 = vpop.permute.xlu0 %1065
    %v1069 = vsel %vm252, %v437, %v1048
    %v1070 = vsel %vm252, %v442, %v1050
    %v1071 = vsel %vm51, %v1069, %v1056
    %v1072 = vsel %vm51, %v1070, %v1058
    %vm1073 = vcmask 195584
    %v1074 = vsel %vm1073, %v1071, %v1064
    %v1075 = vsel %vm1073, %v1072, %v1066
    %v1076 = vlaneseq
    %v1077 = vshrl.u32 %v1076, 7
    %v1078 = vsub.s32 0, %v1077
    %v1079 = vrot.slane %v159, %v1078
    %v1081 = vsel %vm164, %v1074, 0
    %v1084 = vsel %vm164, %v1075, 0
    %1086 = vmatprep.subr.mxu0 0.0
    %1087 = vmatpush1.msra.mxu0 %v142
    %1088 = vmatprep.subr.mxu0 0.0
    %1089 = vmatpush1.msra.mxu0 %v143
    %1090 = vmatprep.subr.mxu0 0.0
    %1091 = vmatpush1.msra.mxu0 %v144
    %1092 = vmatprep.subr.mxu0 0.0
    %1093 = vmatpush1.msra.mxu0 %v145
    %1094 = vmatprep.subr.mxu0 0.0
    %1095 = vmatpush1.msra.mxu0 0.0
    %1096 = vmatprep.subr.mxu0 0.0
    %1097 = vmatpush1.msra.mxu0 0.0
    %1098 = vmatprep.subr.mxu0 0.0
    %1099 = vmatpush1.msra.mxu0 0.0
    %1100 = vmatprep.subr.mxu0 0.0
    %1101 = vmatpush1.msra.mxu0 0.0
    %1102 = vmatprep.subr.mxu0 0.0
    %1103 = vmatpush1.msra.mxu0 0.0
    %1104 = vmatprep.subr.mxu0 0.0
    %1105 = vmatpush1.msra.mxu0 0.0
    %1106 = vmatprep.subr.mxu0 0.0
    %1107 = vmatpush1.msra.mxu0 0.0
    %1108 = vmatprep.subr.mxu0 0.0
    %1109 = vmatpush1.msra.mxu0 0.0
    %1110 = vmatprep.subr.mxu0 0.0
    %1111 = vmatpush1.msra.mxu0 0.0
    %1112 = vmatprep.subr.mxu0 0.0
    %1113 = vmatpush1.msra.mxu0 0.0
    %1114 = vmatprep.subr.mxu0 0.0
    %1115 = vmatpush1.msra.mxu0 0.0
    %1116 = vmatprep.subr.mxu0 0.0
    %1117 = vmatpush1.msra.mxu0 0.0
    %1118 = vmatprep.subr.mxu0 0.0
    %1119 = vmatpush1.msra.mxu0 0.0
    %1120 = vmatprep.subr.mxu0 0.0
    %1121 = vmatpush1.msra.mxu0 0.0
    %1122 = vmatprep.subr.mxu0 0.0
    %1123 = vmatpush1.msra.mxu0 0.0
    %1124 = vmatprep.subr.mxu0 0.0
    %1125 = vmatpush1.msra.mxu0 0.0
    %1126 = vmatprep.subr.mxu0 0.0
    %1127 = vmatpush1.msra.mxu0 0.0
    %1128 = vmatprep.subr.mxu0 0.0
    %1129 = vmatpush1.msra.mxu0 0.0
    %1130 = vmatprep.subr.mxu0 0.0
    %1131 = vmatpush1.msra.mxu0 0.0
    %1132 = vmatprep.subr.mxu0 0.0
    %1133 = vmatpush1.msra.mxu0 0.0
    %1134 = vmatprep.subr.mxu0 0.0
    %1135 = vmatpush1.msra.mxu0 0.0
    %1136 = vmatprep.subr.mxu0 0.0
    %1137 = vmatpush1.msra.mxu0 0.0
    %1138 = vmatprep.subr.mxu0 0.0
    %1139 = vmatpush1.msra.mxu0 0.0
    %1140 = vmatprep.subr.mxu0 0.0
    %1141 = vmatpush1.msra.mxu0 0.0
    %1142 = vmatprep.subr.mxu0 0.0
    %1143 = vmatpush1.msra.mxu0 0.0
    %1144 = vmatprep.subr.mxu0 0.0
    %1145 = vmatpush1.msra.mxu0 0.0
    %1146 = vmatprep.subr.mxu0 0.0
    %1147 = vmatpush1.msra.mxu0 0.0
    %1148 = vmatprep.subr.mxu0 0.0
    %1149 = vmatpush1.msra.mxu0 0.0
    %1150 = vmatprep.mubr.f32.mxu0 0.0
    %1151 = vmatmul.mubr.f32.gmra.mrb[0].mxu0 %v1081
    %v1152 = vpop.f32.mrb[0].mxu0
    %v1153 = vadd.f32 %v1079, %v1152
    %v1154 = vpop.f32.mrb[0].mxu0
    %1155 = vmatprep.mubr.f32.mxu0 0.0
    %1156 = vmatmul.mubr.f32.gmra.mrb[0].mxu0 %v1084
    %v1157 = vpop.f32.mrb[0].mxu0
    %v1158 = vadd.f32 %v1079, %v1157
    %v1159 = vpop.f32.mrb[0].mxu0
    %1160 = vdwg.mxu0
    %v1161 = vadd.f32 %v133, %v1153
    %v1162 = vadd.f32 %v134, %v1158
    %v1163 = vsel %vm164, %v1161, 0.0
    %1164 = vadd.xlane.f32.xlu0 %v1163
    %v1165 = vpop.xlane.xlu0 %1164
    %v1166 = vsel %vm164, %v1162, 0.0
    %1167 = vadd.xlane.f32.xlu0 %v1166
    %v1168 = vpop.xlane.xlu0 %1167
    %v1169 = vrcp.pop 32.0
    %v1170 = vmul.f32 %v1165, %v1169
    %v1171 = vmul.f32 %v1168, %v1169
    %v1172 = vsub.f32 %v1161, %v1170
    %v1173 = vsub.f32 %v1162, %v1171
    %v1174 = vmul.f32 %v1172, %v1172
    %v1175 = vmul.f32 %v1173, %v1173
    %v1176 = vsel %vm164, %v1174, 0.0
    %1177 = vadd.xlane.f32.xlu0 %v1176
    %v1178 = vpop.xlane.xlu0 %1177
    %v1179 = vsel %vm164, %v1175, 0.0
    %1180 = vadd.xlane.f32.xlu0 %v1179
    %v1181 = vpop.xlane.xlu0 %1180
    %v1182 = vmul.f32 %v1178, %v1169
    %v1183 = vmul.f32 %v1181, %v1169
    %v1184 = vadd.f32 %v1182, 1e-05
    %v1185 = vadd.f32 %v1183, 1e-05
    %v1186 = vrsqrt.pop %v1184
    %v1187 = vrsqrt.pop %v1185
    %v1188 = vmul.f32 %v1172, %v1186
    %v1189 = vmul.f32 %v1173, %v1187
    %v1190 = vlaneseq
    %v1191 = vshrl.u32 %v1190, 7
    %v1192 = vsub.s32 1, %v1191
    %v1193 = vrot.slane %v159, %v1192
    %v1194 = vmul.f32 %v1188, %v1193
    %v1195 = vmul.f32 %v1189, %v1193
    %v1196 = vlaneseq
    %v1197 = vshrl.u32 %v1196, 7
    %v1198 = vsub.s32 2, %v1197
    %v1199 = vrot.slane %v159, %v1198
    %v1200 = vadd.f32 %v1194, %v1199
    %v1201 = vadd.f32 %v1195, %v1199
    %v1202 = vlaneseq
    %v1203 = vshrl.u32 %v1202, 7
    %v1204 = vsub.s32 0, %v1203
    %v1205 = vrot.slane %v150, %v1204
    %v1207 = vsel %vm164, %v1200, 0
    %v1210 = vsel %vm164, %v1201, 0
    %1212 = vmatprep.subr.mxu0 0.0
    %1213 = vmatpush1.msra.mxu0 %v146
    %1214 = vmatprep.subr.mxu0 0.0
    %1215 = vmatpush1.msra.mxu0 %v147
    %1216 = vmatprep.subr.mxu0 0.0
    %1217 = vmatpush1.msra.mxu0 %v148
    %1218 = vmatprep.subr.mxu0 0.0
    %1219 = vmatpush1.msra.mxu0 %v149
    %1220 = vmatprep.subr.mxu0 0.0
    %1221 = vmatpush1.msra.mxu0 0.0
    %1222 = vmatprep.subr.mxu0 0.0
    %1223 = vmatpush1.msra.mxu0 0.0
    %1224 = vmatprep.subr.mxu0 0.0
    %1225 = vmatpush1.msra.mxu0 0.0
    %1226 = vmatprep.subr.mxu0 0.0
    %1227 = vmatpush1.msra.mxu0 0.0
    %1228 = vmatprep.subr.mxu0 0.0
    %1229 = vmatpush1.msra.mxu0 0.0
    %1230 = vmatprep.subr.mxu0 0.0
    %1231 = vmatpush1.msra.mxu0 0.0
    %1232 = vmatprep.subr.mxu0 0.0
    %1233 = vmatpush1.msra.mxu0 0.0
    %1234 = vmatprep.subr.mxu0 0.0
    %1235 = vmatpush1.msra.mxu0 0.0
    %1236 = vmatprep.subr.mxu0 0.0
    %1237 = vmatpush1.msra.mxu0 0.0
    %1238 = vmatprep.subr.mxu0 0.0
    %1239 = vmatpush1.msra.mxu0 0.0
    %1240 = vmatprep.subr.mxu0 0.0
    %1241 = vmatpush1.msra.mxu0 0.0
    %1242 = vmatprep.subr.mxu0 0.0
    %1243 = vmatpush1.msra.mxu0 0.0
    %1244 = vmatprep.subr.mxu0 0.0
    %1245 = vmatpush1.msra.mxu0 0.0
    %1246 = vmatprep.subr.mxu0 0.0
    %1247 = vmatpush1.msra.mxu0 0.0
    %1248 = vmatprep.subr.mxu0 0.0
    %1249 = vmatpush1.msra.mxu0 0.0
    %1250 = vmatprep.subr.mxu0 0.0
    %1251 = vmatpush1.msra.mxu0 0.0
    %1252 = vmatprep.subr.mxu0 0.0
    %1253 = vmatpush1.msra.mxu0 0.0
    %1254 = vmatprep.subr.mxu0 0.0
    %1255 = vmatpush1.msra.mxu0 0.0
    %1256 = vmatprep.subr.mxu0 0.0
    %1257 = vmatpush1.msra.mxu0 0.0
    %1258 = vmatprep.subr.mxu0 0.0
    %1259 = vmatpush1.msra.mxu0 0.0
    %1260 = vmatprep.subr.mxu0 0.0
    %1261 = vmatpush1.msra.mxu0 0.0
    %1262 = vmatprep.subr.mxu0 0.0
    %1263 = vmatpush1.msra.mxu0 0.0
    %1264 = vmatprep.subr.mxu0 0.0
    %1265 = vmatpush1.msra.mxu0 0.0
    %1266 = vmatprep.subr.mxu0 0.0
    %1267 = vmatpush1.msra.mxu0 0.0
    %1268 = vmatprep.subr.mxu0 0.0
    %1269 = vmatpush1.msra.mxu0 0.0
    %1270 = vmatprep.subr.mxu0 0.0
    %1271 = vmatpush1.msra.mxu0 0.0
    %1272 = vmatprep.subr.mxu0 0.0
    %1273 = vmatpush1.msra.mxu0 0.0
    %1274 = vmatprep.subr.mxu0 0.0
    %1275 = vmatpush1.msra.mxu0 0.0
    %1276 = vmatprep.mubr.f32.mxu0 0.0
    %1277 = vmatmul.mubr.f32.gmra.mrb[0].mxu0 %v1207
    %v1278 = vpop.f32.mrb[0].mxu0
    %v1279 = vadd.f32 %v1205, %v1278
    %v1280 = vpop.f32.mrb[0].mxu0
    %1281 = vmatprep.mubr.f32.mxu0 0.0
    %1282 = vmatmul.mubr.f32.gmra.mrb[0].mxu0 %v1210
    %v1283 = vpop.f32.mrb[0].mxu0
    %v1284 = vadd.f32 %v1205, %v1283
    %v1285 = vpop.f32.mrb[0].mxu0
    %1286 = vdwg.mxu0
    %v1287 = vmax.f32 %v1279, 0.0
    %v1288 = vmax.f32 %v1284, 0.0
    %v1289 = vlaneseq
    %v1290 = vshrl.u32 %v1289, 7
    %v1291 = vsub.s32 3, %v1290
    %v1292 = vrot.slane %v159, %v1291
    %vm1293 = vcmask 523264
    %v1295 = vsel %vm1293, %v1287, 0
    %v1298 = vsel %vm1293, %v1288, 0
    %1300 = vmatprep.subr.mxu0 0.0
    %1301 = vmatpush1.msra.mxu0 %v151
    %1302 = vmatprep.subr.mxu0 0.0
    %1303 = vmatpush1.msra.mxu0 %v152
    %1304 = vmatprep.subr.mxu0 0.0
    %1305 = vmatpush1.msra.mxu0 %v153
    %1306 = vmatprep.subr.mxu0 0.0
    %1307 = vmatpush1.msra.mxu0 %v154
    %1308 = vmatprep.subr.mxu0 0.0
    %1309 = vmatpush1.msra.mxu0 %v155
    %1310 = vmatprep.subr.mxu0 0.0
    %1311 = vmatpush1.msra.mxu0 %v156
    %1312 = vmatprep.subr.mxu0 0.0
    %1313 = vmatpush1.msra.mxu0 %v157
    %1314 = vmatprep.subr.mxu0 0.0
    %1315 = vmatpush1.msra.mxu0 %v158
    %1316 = vmatprep.subr.mxu0 0.0
    %1317 = vmatpush1.msra.mxu0 0.0
    %1318 = vmatprep.subr.mxu0 0.0
    %1319 = vmatpush1.msra.mxu0 0.0
    %1320 = vmatprep.subr.mxu0 0.0
    %1321 = vmatpush1.msra.mxu0 0.0
    %1322 = vmatprep.subr.mxu0 0.0
    %1323 = vmatpush1.msra.mxu0 0.0
    %1324 = vmatprep.subr.mxu0 0.0
    %1325 = vmatpush1.msra.mxu0 0.0
    %1326 = vmatprep.subr.mxu0 0.0
    %1327 = vmatpush1.msra.mxu0 0.0
    %1328 = vmatprep.subr.mxu0 0.0
    %1329 = vmatpush1.msra.mxu0 0.0
    %1330 = vmatprep.subr.mxu0 0.0
    %1331 = vmatpush1.msra.mxu0 0.0
    %1332 = vmatprep.subr.mxu0 0.0
    %1333 = vmatpush1.msra.mxu0 0.0
    %1334 = vmatprep.subr.mxu0 0.0
    %1335 = vmatpush1.msra.mxu0 0.0
    %1336 = vmatprep.subr.mxu0 0.0
    %1337 = vmatpush1.msra.mxu0 0.0
    %1338 = vmatprep.subr.mxu0 0.0
    %1339 = vmatpush1.msra.mxu0 0.0
    %1340 = vmatprep.subr.mxu0 0.0
    %1341 = vmatpush1.msra.mxu0 0.0
    %1342 = vmatprep.subr.mxu0 0.0
    %1343 = vmatpush1.msra.mxu0 0.0
    %1344 = vmatprep.subr.mxu0 0.0
    %1345 = vmatpush1.msra.mxu0 0.0
    %1346 = vmatprep.subr.mxu0 0.0
    %1347 = vmatpush1.msra.mxu0 0.0
    %1348 = vmatprep.subr.mxu0 0.0
    %1349 = vmatpush1.msra.mxu0 0.0
    %1350 = vmatprep.subr.mxu0 0.0
    %1351 = vmatpush1.msra.mxu0 0.0
    %1352 = vmatprep.subr.mxu0 0.0
    %1353 = vmatpush1.msra.mxu0 0.0
    %1354 = vmatprep.subr.mxu0 0.0
    %1355 = vmatpush1.msra.mxu0 0.0
    %1356 = vmatprep.subr.mxu0 0.0
    %1357 = vmatpush1.msra.mxu0 0.0
    %1358 = vmatprep.subr.mxu0 0.0
    %1359 = vmatpush1.msra.mxu0 0.0
    %1360 = vmatprep.subr.mxu0 0.0
    %1361 = vmatpush1.msra.mxu0 0.0
    %1362 = vmatprep.subr.mxu0 0.0
    %1363 = vmatpush1.msra.mxu0 0.0
    %1364 = vmatprep.mubr.f32.mxu0 0.0
    %1365 = vmatmul.mubr.f32.gmra.mrb[0].mxu0 %v1295
    %v1366 = vpop.f32.mrb[0].mxu0
    %v1367 = vadd.f32 %v1292, %v1366
    %v1368 = vpop.f32.mrb[0].mxu0
    %1369 = vmatprep.mubr.f32.mxu0 0.0
    %1370 = vmatmul.mubr.f32.gmra.mrb[0].mxu0 %v1298
    %v1371 = vpop.f32.mrb[0].mxu0
    %v1372 = vadd.f32 %v1292, %v1371
    %v1373 = vpop.f32.mrb[0].mxu0
    %1374 = vdwg.mxu0
    %v1375 = vadd.f32 %v1200, %v1367
    %v1376 = vadd.f32 %v1201, %v1372
    %v1377 = vsel %vm164, %v1375, 0.0
    %1378 = vadd.xlane.f32.xlu0 %v1377
    %v1379 = vpop.xlane.xlu0 %1378
    %v1380 = vsel %vm164, %v1376, 0.0
    %1381 = vadd.xlane.f32.xlu0 %v1380
    %v1382 = vpop.xlane.xlu0 %1381
    %v1383 = vmul.f32 %v1379, %v1169
    %v1384 = vmul.f32 %v1382, %v1169
    %v1385 = vsub.f32 %v1375, %v1383
    %v1386 = vsub.f32 %v1376, %v1384
    %v1387 = vmul.f32 %v1385, %v1385
    %v1388 = vmul.f32 %v1386, %v1386
    %v1389 = vsel %vm164, %v1387, 0.0
    %1390 = vadd.xlane.f32.xlu0 %v1389
    %v1391 = vpop.xlane.xlu0 %1390
    %v1392 = vsel %vm164, %v1388, 0.0
    %1393 = vadd.xlane.f32.xlu0 %v1392
    %v1394 = vpop.xlane.xlu0 %1393
    %v1395 = vmul.f32 %v1391, %v1169
    %v1396 = vmul.f32 %v1394, %v1169
    %v1397 = vadd.f32 %v1395, 1e-05
    %v1398 = vadd.f32 %v1396, 1e-05
    %v1399 = vrsqrt.pop %v1397
    %v1400 = vrsqrt.pop %v1398
    %v1401 = vmul.f32 %v1385, %v1399
    %v1402 = vmul.f32 %v1386, %v1400
    %v1403 = vlaneseq
    %v1404 = vshrl.u32 %v1403, 7
    %v1405 = vsub.s32 4, %v1404
    %v1406 = vrot.slane %v159, %v1405
    %v1407 = vmul.f32 %v1401, %v1406
    %v1408 = vmul.f32 %v1402, %v1406
    %v1409 = vlaneseq
    %v1410 = vshrl.u32 %v1409, 7
    %v1411 = vsub.s32 5, %v1410
    %v1412 = vrot.slane %v159, %v1411
    %v1413 = vadd.f32 %v1407, %v1412
    %v1414 = vadd.f32 %v1408, %v1412
    %v1415 = vld [vmem:[#allocation5 + $0xf0] sm:$0xff]
    %v1416 = vld [vmem:[#allocation5 + $0xf8] sm:$0xff]
    %v1417 = vld [vmem:[#allocation5 + $0x100] sm:$0xff]
    %v1418 = vld [vmem:[#allocation5 + $0x108] sm:$0xff]
    %v1419 = vld [vmem:[#allocation5 + $0x110] sm:$0x1]
    %v1420 = vld [vmem:[#allocation5 + $0x118] sm:$0xff]
    %v1421 = vld [vmem:[#allocation5 + $0x120] sm:$0xff]
    %v1422 = vld [vmem:[#allocation5 + $0x128] sm:$0xff]
    %v1423 = vld [vmem:[#allocation5 + $0x130] sm:$0xff]
    %v1424 = vld [vmem:[#allocation5 + $0x138] sm:$0xff]
    %v1425 = vld [vmem:[#allocation5 + $0x140] sm:$0xff]
    %v1426 = vld [vmem:[#allocation5 + $0x148] sm:$0xff]
    %v1427 = vld [vmem:[#allocation5 + $0x150] sm:$0xff]
    %v1428 = vld [vmem:[#allocation5 + $0x158] sm:$0x1]
    %v1429 = vld [vmem:[#allocation5 + $0x160] sm:$0xff]
    %v1430 = vld [vmem:[#allocation5 + $0x168] sm:$0xff]
    %v1431 = vld [vmem:[#allocation5 + $0x170] sm:$0xff]
    %v1432 = vld [vmem:[#allocation5 + $0x178] sm:$0xff]
    %v1433 = vld [vmem:[#allocation5 + $0x180] sm:$0xff]
    %v1434 = vld [vmem:[#allocation5 + $0x188] sm:$0xff]
    %v1435 = vld [vmem:[#allocation5 + $0x190] sm:$0xff]
    %v1436 = vld [vmem:[#allocation5 + $0x198] sm:$0xff]
    %v1437 = vld [vmem:[#allocation5 + $0x1a0] sm:$0x3f]
    %v1438 = vlaneseq
    %v1439 = vshrl.u32 %v1438, 7
    %v1440 = vsub.s32 0, %v1439
    %v1441 = vrot.slane %v1419, %v1440
    %v1443 = vsel %vm164, %v1413, 0
    %v1446 = vsel %vm164, %v1414, 0
    %1448 = vmatprep.subr.mxu0 0.0
    %1449 = vmatpush1.msra.mxu0 %v1415
    %1450 = vmatprep.subr.mxu0 0.0
    %1451 = vmatpush1.msra.mxu0 %v1416
    %1452 = vmatprep.subr.mxu0 0.0
    %1453 = vmatpush1.msra.mxu0 %v1417
    %1454 = vmatprep.subr.mxu0 0.0
    %1455 = vmatpush1.msra.mxu0 %v1418
    %1456 = vmatprep.subr.mxu0 0.0
    %1457 = vmatpush1.msra.mxu0 0.0
    %1458 = vmatprep.subr.mxu0 0.0
    %1459 = vmatpush1.msra.mxu0 0.0
    %1460 = vmatprep.subr.mxu0 0.0
    %1461 = vmatpush1.msra.mxu0 0.0
    %1462 = vmatprep.subr.mxu0 0.0
    %1463 = vmatpush1.msra.mxu0 0.0
    %1464 = vmatprep.subr.mxu0 0.0
    %1465 = vmatpush1.msra.mxu0 0.0
    %1466 = vmatprep.subr.mxu0 0.0
    %1467 = vmatpush1.msra.mxu0 0.0
    %1468 = vmatprep.subr.mxu0 0.0
    %1469 = vmatpush1.msra.mxu0 0.0
    %1470 = vmatprep.subr.mxu0 0.0
    %1471 = vmatpush1.msra.mxu0 0.0
    %1472 = vmatprep.subr.mxu0 0.0
    %1473 = vmatpush1.msra.mxu0 0.0
    %1474 = vmatprep.subr.mxu0 0.0
    %1475 = vmatpush1.msra.mxu0 0.0
    %1476 = vmatprep.subr.mxu0 0.0
    %1477 = vmatpush1.msra.mxu0 0.0
    %1478 = vmatprep.subr.mxu0 0.0
    %1479 = vmatpush1.msra.mxu0 0.0
    %1480 = vmatprep.subr.mxu0 0.0
    %1481 = vmatpush1.msra.mxu0 0.0
    %1482 = vmatprep.subr.mxu0 0.0
    %1483 = vmatpush1.msra.mxu0 0.0
    %1484 = vmatprep.subr.mxu0 0.0
    %1485 = vmatpush1.msra.mxu0 0.0
    %1486 = vmatprep.subr.mxu0 0.0
    %1487 = vmatpush1.msra.mxu0 0.0
    %1488 = vmatprep.subr.mxu0 0.0
    %1489 = vmatpush1.msra.mxu0 0.0
    %1490 = vmatprep.subr.mxu0 0.0
    %1491 = vmatpush1.msra.mxu0 0.0
    %1492 = vmatprep.subr.mxu0 0.0
    %1493 = vmatpush1.msra.mxu0 0.0
    %1494 = vmatprep.subr.mxu0 0.0
    %1495 = vmatpush1.msra.mxu0 0.0
    %1496 = vmatprep.subr.mxu0 0.0
    %1497 = vmatpush1.msra.mxu0 0.0
    %1498 = vmatprep.subr.mxu0 0.0
    %1499 = vmatpush1.msra.mxu0 0.0
    %1500 = vmatprep.subr.mxu0 0.0
    %1501 = vmatpush1.msra.mxu0 0.0
    %1502 = vmatprep.subr.mxu0 0.0
    %1503 = vmatpush1.msra.mxu0 0.0
    %1504 = vmatprep.subr.mxu0 0.0
    %1505 = vmatpush1.msra.mxu0 0.0
    %1506 = vmatprep.subr.mxu0 0.0
    %1507 = vmatpush1.msra.mxu0 0.0
    %1508 = vmatprep.subr.mxu0 0.0
    %1509 = vmatpush1.msra.mxu0 0.0
    %1510 = vmatprep.subr.mxu0 0.0
    %1511 = vmatpush1.msra.mxu0 0.0
    %1512 = vmatprep.mubr.f32.mxu0 0.0
    %1513 = vmatmul.mubr.f32.gmra.mrb[0].mxu0 %v1443
    %v1514 = vpop.f32.mrb[0].mxu0
    %v1515 = vadd.f32 %v1441, %v1514
    %v1516 = vpop.f32.mrb[0].mxu0
    %1517 = vmatprep.mubr.f32.mxu0 0.0
    %1518 = vmatmul.mubr.f32.gmra.mrb[0].mxu0 %v1446
    %v1519 = vpop.f32.mrb[0].mxu0
    %v1520 = vadd.f32 %v1441, %v1519
    %v1521 = vpop.f32.mrb[0].mxu0
    %1522 = vdwg.mxu0
    %1525 = vrot.lane.b32.xlu0 %v1515, 96
    %v1526 = vpop.permute.xlu0 %1525
    %1527 = vrot.lane.b32.xlu0 %v1520, 96
    %v1528 = vpop.permute.xlu0 %1527
    %v1529 = vsel %vm252, %v1515, 0
    %v1531 = vsel %vm252, %v1520, 0
    %v1533 = vsel %vm252, %v1526, 0
    %v1535 = vsel %vm252, %v1528, 0
    %1537 = vmatprep.subr.mxu0 0.0
    %1538 = vmatpush1.xpose.msra.mxu0 %v1533
    %1539 = vmatprep.subr.mxu0 0.0
    %1540 = vmatpush1.xpose.msra.mxu0 %v1535
    %1541 = vmatprep.subr.mxu0 0.0
    %1542 = vmatpush1.xpose.msra.mxu0 0.0
    %1543 = vmatprep.subr.mxu0 0.0
    %1544 = vmatpush1.xpose.msra.mxu0 0.0
    %1545 = vmatprep.subr.mxu0 0.0
    %1546 = vmatpush1.xpose.msra.mxu0 0.0
    %1547 = vmatprep.subr.mxu0 0.0
    %1548 = vmatpush1.xpose.msra.mxu0 0.0
    %1549 = vmatprep.subr.mxu0 0.0
    %1550 = vmatpush1.xpose.msra.mxu0 0.0
    %1551 = vmatprep.subr.mxu0 0.0
    %1552 = vmatpush1.xpose.msra.mxu0 0.0
    %1553 = vmatprep.subr.mxu0 0.0
    %1554 = vmatpush1.xpose.msra.mxu0 0.0
    %1555 = vmatprep.subr.mxu0 0.0
    %1556 = vmatpush1.xpose.msra.mxu0 0.0
    %1557 = vmatprep.subr.mxu0 0.0
    %1558 = vmatpush1.xpose.msra.mxu0 0.0
    %1559 = vmatprep.subr.mxu0 0.0
    %1560 = vmatpush1.xpose.msra.mxu0 0.0
    %1561 = vmatprep.subr.mxu0 0.0
    %1562 = vmatpush1.xpose.msra.mxu0 0.0
    %1563 = vmatprep.subr.mxu0 0.0
    %1564 = vmatpush1.xpose.msra.mxu0 0.0
    %1565 = vmatprep.subr.mxu0 0.0
    %1566 = vmatpush1.xpose.msra.mxu0 0.0
    %1567 = vmatprep.subr.mxu0 0.0
    %1568 = vmatpush1.xpose.msra.mxu0 0.0
    %1569 = vmatprep.subr.mxu0 0.0
    %1570 = vmatpush1.xpose.msra.mxu0 0.0
    %1571 = vmatprep.subr.mxu0 0.0
    %1572 = vmatpush1.xpose.msra.mxu0 0.0
    %1573 = vmatprep.subr.mxu0 0.0
    %1574 = vmatpush1.xpose.msra.mxu0 0.0
    %1575 = vmatprep.subr.mxu0 0.0
    %1576 = vmatpush1.xpose.msra.mxu0 0.0
    %1577 = vmatprep.subr.mxu0 0.0
    %1578 = vmatpush1.xpose.msra.mxu0 0.0
    %1579 = vmatprep.subr.mxu0 0.0
    %1580 = vmatpush1.xpose.msra.mxu0 0.0
    %1581 = vmatprep.subr.mxu0 0.0
    %1582 = vmatpush1.xpose.msra.mxu0 0.0
    %1583 = vmatprep.subr.mxu0 0.0
    %1584 = vmatpush1.xpose.msra.mxu0 0.0
    %1585 = vmatprep.subr.mxu0 0.0
    %1586 = vmatpush1.xpose.msra.mxu0 0.0
    %1587 = vmatprep.subr.mxu0 0.0
    %1588 = vmatpush1.xpose.msra.mxu0 0.0
    %1589 = vmatprep.subr.mxu0 0.0
    %1590 = vmatpush1.xpose.msra.mxu0 0.0
    %1591 = vmatprep.subr.mxu0 0.0
    %1592 = vmatpush1.xpose.msra.mxu0 0.0
    %1593 = vmatprep.subr.mxu0 0.0
    %1594 = vmatpush1.xpose.msra.mxu0 0.0
    %1595 = vmatprep.subr.mxu0 0.0
    %1596 = vmatpush1.xpose.msra.mxu0 0.0
    %1597 = vmatprep.subr.mxu0 0.0
    %1598 = vmatpush1.xpose.msra.mxu0 0.0
    %1599 = vmatprep.subr.mxu0 0.0
    %1600 = vmatpush1.xpose.msra.mxu0 0.0
    %1601 = vmatprep.mubr.f32.mxu0 0.0
    %1602 = vmatmul.mubr.f32.gmra.mrb[0].mxu0 %v1529
    %v1603 = vpop.f32.mrb[0].mxu0
    %v1604 = vadd.f32 %v135, %v1603
    %v1605 = vpop.f32.mrb[0].mxu0
    %1606 = vmatprep.mubr.f32.mxu0 0.0
    %1607 = vmatmul.mubr.f32.gmra.mrb[0].mxu0 %v1531
    %v1608 = vpop.f32.mrb[0].mxu0
    %v1609 = vadd.f32 %v136, %v1608
    %v1610 = vpop.f32.mrb[0].mxu0
    %1611 = vdwg.mxu0
    %v1612 = vsel %vm51, %v1604, -inf
    %1613 = vmax.xlane.f32.xlu0 %v1612
    %v1614 = vpop.xlane.xlu0 %1613
    %v1615 = vsel %vm51, %v1609, -inf
    %1616 = vmax.xlane.f32.xlu0 %v1615
    %v1617 = vpop.xlane.xlu0 %1616
    %v1618 = vsub.f32 %v1604, %v1614
    %v1619 = vsub.f32 %v1609, %v1617
    %v1620 = vmul.f32 %v1618, 1.442695
    %v1621 = vpow.pop %v1620
    %v1622 = vmul.f32 %v1619, 1.442695
    %v1623 = vpow.pop %v1622
    %v1624 = vsel %vm51, %v1621, 0.0
    %1625 = vadd.xlane.f32.xlu0 %v1624
    %v1626 = vpop.xlane.xlu0 %1625
    %v1627 = vsel %vm51, %v1623, 0.0
    %1628 = vadd.xlane.f32.xlu0 %v1627
    %v1629 = vpop.xlane.xlu0 %1628
    %v1630 = vrcp.pop %v1626
    %v1631 = vrcp.pop %v1629
    %v1632 = vmul.f32 %v1621, %v1630
    %v1633 = vmul.f32 %v1623, %v1631
    %1634 = vrot.lane.b32.xlu0 %v1515, 64
    %v1635 = vpop.permute.xlu0 %1634
    %1636 = vrot.lane.b32.xlu0 %v1520, 64
    %v1637 = vpop.permute.xlu0 %1636
    %v1641 = vsel %vm51, %v1632, 0
    %v1644 = vsel %vm51, %v1633, 0
    %1646 = vmatprep.subr.mxu0 0.0
    %1647 = vmatpush1.msra.mxu0 %v1635
    %1648 = vmatprep.subr.mxu0 0.0
    %1649 = vmatpush1.msra.mxu0 %v1637
    %1650 = vmatprep.subr.mxu0 0.0
    %1651 = vmatpush1.msra.mxu0 0.0
    %1652 = vmatprep.subr.mxu0 0.0
    %1653 = vmatpush1.msra.mxu0 0.0
    %1654 = vmatprep.subr.mxu0 0.0
    %1655 = vmatpush1.msra.mxu0 0.0
    %1656 = vmatprep.subr.mxu0 0.0
    %1657 = vmatpush1.msra.mxu0 0.0
    %1658 = vmatprep.subr.mxu0 0.0
    %1659 = vmatpush1.msra.mxu0 0.0
    %1660 = vmatprep.subr.mxu0 0.0
    %1661 = vmatpush1.msra.mxu0 0.0
    %1662 = vmatprep.subr.mxu0 0.0
    %1663 = vmatpush1.msra.mxu0 0.0
    %1664 = vmatprep.subr.mxu0 0.0
    %1665 = vmatpush1.msra.mxu0 0.0
    %1666 = vmatprep.subr.mxu0 0.0
    %1667 = vmatpush1.msra.mxu0 0.0
    %1668 = vmatprep.subr.mxu0 0.0
    %1669 = vmatpush1.msra.mxu0 0.0
    %1670 = vmatprep.subr.mxu0 0.0
    %1671 = vmatpush1.msra.mxu0 0.0
    %1672 = vmatprep.subr.mxu0 0.0
    %1673 = vmatpush1.msra.mxu0 0.0
    %1674 = vmatprep.subr.mxu0 0.0
    %1675 = vmatpush1.msra.mxu0 0.0
    %1676 = vmatprep.subr.mxu0 0.0
    %1677 = vmatpush1.msra.mxu0 0.0
    %1678 = vmatprep.subr.mxu0 0.0
    %1679 = vmatpush1.msra.mxu0 0.0
    %1680 = vmatprep.subr.mxu0 0.0
    %1681 = vmatpush1.msra.mxu0 0.0
    %1682 = vmatprep.subr.mxu0 0.0
    %1683 = vmatpush1.msra.mxu0 0.0
    %1684 = vmatprep.subr.mxu0 0.0
    %1685 = vmatpush1.msra.mxu0 0.0
    %1686 = vmatprep.subr.mxu0 0.0
    %1687 = vmatpush1.msra.mxu0 0.0
    %1688 = vmatprep.subr.mxu0 0.0
    %1689 = vmatpush1.msra.mxu0 0.0
    %1690 = vmatprep.subr.mxu0 0.0
    %1691 = vmatpush1.msra.mxu0 0.0
    %1692 = vmatprep.subr.mxu0 0.0
    %1693 = vmatpush1.msra.mxu0 0.0
    %1694 = vmatprep.subr.mxu0 0.0
    %1695 = vmatpush1.msra.mxu0 0.0
    %1696 = vmatprep.subr.mxu0 0.0
    %1697 = vmatpush1.msra.mxu0 0.0
    %1698 = vmatprep.subr.mxu0 0.0
    %1699 = vmatpush1.msra.mxu0 0.0
    %1700 = vmatprep.subr.mxu0 0.0
    %1701 = vmatpush1.msra.mxu0 0.0
    %1702 = vmatprep.subr.mxu0 0.0
    %1703 = vmatpush1.msra.mxu0 0.0
    %1704 = vmatprep.subr.mxu0 0.0
    %1705 = vmatpush1.msra.mxu0 0.0
    %1706 = vmatprep.subr.mxu0 0.0
    %1707 = vmatpush1.msra.mxu0 0.0
    %1708 = vmatprep.subr.mxu0 0.0
    %1709 = vmatpush1.msra.mxu0 0.0
    %1710 = vmatprep.mubr.f32.mxu0 0.0
    %1711 = vmatmul.mubr.f32.gmra.mrb[0].mxu0 %v1641
    %v1712 = vpop.f32.mrb[0].mxu0
    %v1713 = vadd.f32 0.0, %v1712
    %v1714 = vpop.f32.mrb[0].mxu0
    %1715 = vmatprep.mubr.f32.mxu0 0.0
    %1716 = vmatmul.mubr.f32.gmra.mrb[0].mxu0 %v1644
    %v1717 = vpop.f32.mrb[0].mxu0
    %v1718 = vadd.f32 0.0, %v1717
    %v1719 = vpop.f32.mrb[0].mxu0
    %1720 = vdwg.mxu0
    %1721 = vrot.lane.b32.xlu0 %v1515, 120
    %v1722 = vpop.permute.xlu0 %1721
    %1723 = vrot.lane.b32.xlu0 %v1520, 120
    %v1724 = vpop.permute.xlu0 %1723
    %1725 = vrot.lane.b32.xlu0 %v1515, 88
    %v1726 = vpop.permute.xlu0 %1725
    %1727 = vrot.lane.b32.xlu0 %v1520, 88
    %v1728 = vpop.permute.xlu0 %1727
    %v1729 = vsel %vm252, %v1722, 0
    %v1731 = vsel %vm252, %v1724, 0
    %v1733 = vsel %vm252, %v1726, 0
    %v1735 = vsel %vm252, %v1728, 0
    %1737 = vmatprep.subr.mxu0 0.0
    %1738 = vmatpush1.xpose.msra.mxu0 %v1733
    %1739 = vmatprep.subr.mxu0 0.0
    %1740 = vmatpush1.xpose.msra.mxu0 %v1735
    %1741 = vmatprep.subr.mxu0 0.0
    %1742 = vmatpush1.xpose.msra.mxu0 0.0
    %1743 = vmatprep.subr.mxu0 0.0
    %1744 = vmatpush1.xpose.msra.mxu0 0.0
    %1745 = vmatprep.subr.mxu0 0.0
    %1746 = vmatpush1.xpose.msra.mxu0 0.0
    %1747 = vmatprep.subr.mxu0 0.0
    %1748 = vmatpush1.xpose.msra.mxu0 0.0
    %1749 = vmatprep.subr.mxu0 0.0
    %1750 = vmatpush1.xpose.msra.mxu0 0.0
    %1751 = vmatprep.subr.mxu0 0.0
    %1752 = vmatpush1.xpose.msra.mxu0 0.0
    %1753 = vmatprep.subr.mxu0 0.0
    %1754 = vmatpush1.xpose.msra.mxu0 0.0
    %1755 = vmatprep.subr.mxu0 0.0
    %1756 = vmatpush1.xpose.msra.mxu0 0.0
    %1757 = vmatprep.subr.mxu0 0.0
    %1758 = vmatpush1.xpose.msra.mxu0 0.0
    %1759 = vmatprep.subr.mxu0 0.0
    %1760 = vmatpush1.xpose.msra.mxu0 0.0
    %1761 = vmatprep.subr.mxu0 0.0
    %1762 = vmatpush1.xpose.msra.mxu0 0.0
    %1763 = vmatprep.subr.mxu0 0.0
    %1764 = vmatpush1.xpose.msra.mxu0 0.0
    %1765 = vmatprep.subr.mxu0 0.0
    %1766 = vmatpush1.xpose.msra.mxu0 0.0
    %1767 = vmatprep.subr.mxu0 0.0
    %1768 = vmatpush1.xpose.msra.mxu0 0.0
    %1769 = vmatprep.subr.mxu0 0.0
    %1770 = vmatpush1.xpose.msra.mxu0 0.0
    %1771 = vmatprep.subr.mxu0 0.0
    %1772 = vmatpush1.xpose.msra.mxu0 0.0
    %1773 = vmatprep.subr.mxu0 0.0
    %1774 = vmatpush1.xpose.msra.mxu0 0.0
    %1775 = vmatprep.subr.mxu0 0.0
    %1776 = vmatpush1.xpose.msra.mxu0 0.0
    %1777 = vmatprep.subr.mxu0 0.0
    %1778 = vmatpush1.xpose.msra.mxu0 0.0
    %1779 = vmatprep.subr.mxu0 0.0
    %1780 = vmatpush1.xpose.msra.mxu0 0.0
    %1781 = vmatprep.subr.mxu0 0.0
    %1782 = vmatpush1.xpose.msra.mxu0 0.0
    %1783 = vmatprep.subr.mxu0 0.0
    %1784 = vmatpush1.xpose.msra.mxu0 0.0
    %1785 = vmatprep.subr.mxu0 0.0
    %1786 = vmatpush1.xpose.msra.mxu0 0.0
    %1787 = vmatprep.subr.mxu0 0.0
    %1788 = vmatpush1.xpose.msra.mxu0 0.0
    %1789 = vmatprep.subr.mxu0 0.0
    %1790 = vmatpush1.xpose.msra.mxu0 0.0
    %1791 = vmatprep.subr.mxu0 0.0
    %1792 = vmatpush1.xpose.msra.mxu0 0.0
    %1793 = vmatprep.subr.mxu0 0.0
    %1794 = vmatpush1.xpose.msra.mxu0 0.0
    %1795 = vmatprep.subr.mxu0 0.0
    %1796 = vmatpush1.xpose.msra.mxu0 0.0
    %1797 = vmatprep.subr.mxu0 0.0
    %1798 = vmatpush1.xpose.msra.mxu0 0.0
    %1799 = vmatprep.subr.mxu0 0.0
    %1800 = vmatpush1.xpose.msra.mxu0 0.0
    %1801 = vmatprep.mubr.f32.mxu0 0.0
    %1802 = vmatmul.mubr.f32.gmra.mrb[0].mxu0 %v1729
    %v1803 = vpop.f32.mrb[0].mxu0
    %v1804 = vadd.f32 %v135, %v1803
    %v1805 = vpop.f32.mrb[0].mxu0
    %1806 = vmatprep.mubr.f32.mxu0 0.0
    %1807 = vmatmul.mubr.f32.gmra.mrb[0].mxu0 %v1731
    %v1808 = vpop.f32.mrb[0].mxu0
    %v1809 = vadd.f32 %v136, %v1808
    %v1810 = vpop.f32.mrb[0].mxu0
    %1811 = vdwg.mxu0
    %v1812 = vsel %vm51, %v1804, -inf
    %1813 = vmax.xlane.f32.xlu0 %v1812
    %v1814 = vpop.xlane.xlu0 %1813
    %v1815 = vsel %vm51, %v1809, -inf
    %1816 = vmax.xlane.f32.xlu0 %v1815
    %v1817 = vpop.xlane.xlu0 %1816
    %v1818 = vsub.f32 %v1804, %v1814
    %v1819 = vsub.f32 %v1809, %v1817
    %v1820 = vmul.f32 %v1818, 1.442695
    %v1821 = vpow.pop %v1820
    %v1822 = vmul.f32 %v1819, 1.442695
    %v1823 = vpow.pop %v1822
    %v1824 = vsel %vm51, %v1821, 0.0
    %1825 = vadd.xlane.f32.xlu0 %v1824
    %v1826 = vpop.xlane.xlu0 %1825
    %v1827 = vsel %vm51, %v1823, 0.0
    %1828 = vadd.xlane.f32.xlu0 %v1827
    %v1829 = vpop.xlane.xlu0 %1828
    %v1830 = vrcp.pop %v1826
    %v1831 = vrcp.pop %v1829
    %v1832 = vmul.f32 %v1821, %v1830
    %v1833 = vmul.f32 %v1823, %v1831
    %1834 = vrot.lane.b32.xlu0 %v1515, 56
    %v1835 = vpop.permute.xlu0 %1834
    %1836 = vrot.lane.b32.xlu0 %v1520, 56
    %v1837 = vpop.permute.xlu0 %1836
    %v1841 = vsel %vm51, %v1832, 0
    %v1844 = vsel %vm51, %v1833, 0
    %1846 = vmatprep.subr.mxu0 0.0
    %1847 = vmatpush1.msra.mxu0 %v1835
    %1848 = vmatprep.subr.mxu0 0.0
    %1849 = vmatpush1.msra.mxu0 %v1837
    %1850 = vmatprep.subr.mxu0 0.0
    %1851 = vmatpush1.msra.mxu0 0.0
    %1852 = vmatprep.subr.mxu0 0.0
    %1853 = vmatpush1.msra.mxu0 0.0
    %1854 = vmatprep.subr.mxu0 0.0
    %1855 = vmatpush1.msra.mxu0 0.0
    %1856 = vmatprep.subr.mxu0 0.0
    %1857 = vmatpush1.msra.mxu0 0.0
    %1858 = vmatprep.subr.mxu0 0.0
    %1859 = vmatpush1.msra.mxu0 0.0
    %1860 = vmatprep.subr.mxu0 0.0
    %1861 = vmatpush1.msra.mxu0 0.0
    %1862 = vmatprep.subr.mxu0 0.0
    %1863 = vmatpush1.msra.mxu0 0.0
    %1864 = vmatprep.subr.mxu0 0.0
    %1865 = vmatpush1.msra.mxu0 0.0
    %1866 = vmatprep.subr.mxu0 0.0
    %1867 = vmatpush1.msra.mxu0 0.0
    %1868 = vmatprep.subr.mxu0 0.0
    %1869 = vmatpush1.msra.mxu0 0.0
    %1870 = vmatprep.subr.mxu0 0.0
    %1871 = vmatpush1.msra.mxu0 0.0
    %1872 = vmatprep.subr.mxu0 0.0
    %1873 = vmatpush1.msra.mxu0 0.0
    %1874 = vmatprep.subr.mxu0 0.0
    %1875 = vmatpush1.msra.mxu0 0.0
    %1876 = vmatprep.subr.mxu0 0.0
    %1877 = vmatpush1.msra.mxu0 0.0
    %1878 = vmatprep.subr.mxu0 0.0
    %1879 = vmatpush1.msra.mxu0 0.0
    %1880 = vmatprep.subr.mxu0 0.0
    %1881 = vmatpush1.msra.mxu0 0.0
    %1882 = vmatprep.subr.mxu0 0.0
    %1883 = vmatpush1.msra.mxu0 0.0
    %1884 = vmatprep.subr.mxu0 0.0
    %1885 = vmatpush1.msra.mxu0 0.0
    %1886 = vmatprep.subr.mxu0 0.0
    %1887 = vmatpush1.msra.mxu0 0.0
    %1888 = vmatprep.subr.mxu0 0.0
    %1889 = vmatpush1.msra.mxu0 0.0
    %1890 = vmatprep.subr.mxu0 0.0
    %1891 = vmatpush1.msra.mxu0 0.0
    %1892 = vmatprep.subr.mxu0 0.0
    %1893 = vmatpush1.msra.mxu0 0.0
    %1894 = vmatprep.subr.mxu0 0.0
    %1895 = vmatpush1.msra.mxu0 0.0
    %1896 = vmatprep.subr.mxu0 0.0
    %1897 = vmatpush1.msra.mxu0 0.0
    %1898 = vmatprep.subr.mxu0 0.0
    %1899 = vmatpush1.msra.mxu0 0.0
    %1900 = vmatprep.subr.mxu0 0.0
    %1901 = vmatpush1.msra.mxu0 0.0
    %1902 = vmatprep.subr.mxu0 0.0
    %1903 = vmatpush1.msra.mxu0 0.0
    %1904 = vmatprep.subr.mxu0 0.0
    %1905 = vmatpush1.msra.mxu0 0.0
    %1906 = vmatprep.subr.mxu0 0.0
    %1907 = vmatpush1.msra.mxu0 0.0
    %1908 = vmatprep.subr.mxu0 0.0
    %1909 = vmatpush1.msra.mxu0 0.0
    %1910 = vmatprep.mubr.f32.mxu0 0.0
    %1911 = vmatmul.mubr.f32.gmra.mrb[0].mxu0 %v1841
    %v1912 = vpop.f32.mrb[0].mxu0
    %v1913 = vadd.f32 0.0, %v1912
    %v1914 = vpop.f32.mrb[0].mxu0
    %1915 = vmatprep.mubr.f32.mxu0 0.0
    %1916 = vmatmul.mubr.f32.gmra.mrb[0].mxu0 %v1844
    %v1917 = vpop.f32.mrb[0].mxu0
    %v1918 = vadd.f32 0.0, %v1917
    %v1919 = vpop.f32.mrb[0].mxu0
    %1920 = vdwg.mxu0
    %1921 = vrot.lane.b32.xlu0 %v1515, 112
    %v1922 = vpop.permute.xlu0 %1921
    %1923 = vrot.lane.b32.xlu0 %v1520, 112
    %v1924 = vpop.permute.xlu0 %1923
    %1925 = vrot.lane.b32.xlu0 %v1515, 80
    %v1926 = vpop.permute.xlu0 %1925
    %1927 = vrot.lane.b32.xlu0 %v1520, 80
    %v1928 = vpop.permute.xlu0 %1927
    %v1929 = vsel %vm252, %v1922, 0
    %v1931 = vsel %vm252, %v1924, 0
    %v1933 = vsel %vm252, %v1926, 0
    %v1935 = vsel %vm252, %v1928, 0
    %1937 = vmatprep.subr.mxu0 0.0
    %1938 = vmatpush1.xpose.msra.mxu0 %v1933
    %1939 = vmatprep.subr.mxu0 0.0
    %1940 = vmatpush1.xpose.msra.mxu0 %v1935
    %1941 = vmatprep.subr.mxu0 0.0
    %1942 = vmatpush1.xpose.msra.mxu0 0.0
    %1943 = vmatprep.subr.mxu0 0.0
    %1944 = vmatpush1.xpose.msra.mxu0 0.0
    %1945 = vmatprep.subr.mxu0 0.0
    %1946 = vmatpush1.xpose.msra.mxu0 0.0
    %1947 = vmatprep.subr.mxu0 0.0
    %1948 = vmatpush1.xpose.msra.mxu0 0.0
    %1949 = vmatprep.subr.mxu0 0.0
    %1950 = vmatpush1.xpose.msra.mxu0 0.0
    %1951 = vmatprep.subr.mxu0 0.0
    %1952 = vmatpush1.xpose.msra.mxu0 0.0
    %1953 = vmatprep.subr.mxu0 0.0
    %1954 = vmatpush1.xpose.msra.mxu0 0.0
    %1955 = vmatprep.subr.mxu0 0.0
    %1956 = vmatpush1.xpose.msra.mxu0 0.0
    %1957 = vmatprep.subr.mxu0 0.0
    %1958 = vmatpush1.xpose.msra.mxu0 0.0
    %1959 = vmatprep.subr.mxu0 0.0
    %1960 = vmatpush1.xpose.msra.mxu0 0.0
    %1961 = vmatprep.subr.mxu0 0.0
    %1962 = vmatpush1.xpose.msra.mxu0 0.0
    %1963 = vmatprep.subr.mxu0 0.0
    %1964 = vmatpush1.xpose.msra.mxu0 0.0
    %1965 = vmatprep.subr.mxu0 0.0
    %1966 = vmatpush1.xpose.msra.mxu0 0.0
    %1967 = vmatprep.subr.mxu0 0.0
    %1968 = vmatpush1.xpose.msra.mxu0 0.0
    %1969 = vmatprep.subr.mxu0 0.0
    %1970 = vmatpush1.xpose.msra.mxu0 0.0
    %1971 = vmatprep.subr.mxu0 0.0
    %1972 = vmatpush1.xpose.msra.mxu0 0.0
    %1973 = vmatprep.subr.mxu0 0.0
    %1974 = vmatpush1.xpose.msra.mxu0 0.0
    %1975 = vmatprep.subr.mxu0 0.0
    %1976 = vmatpush1.xpose.msra.mxu0 0.0
    %1977 = vmatprep.subr.mxu0 0.0
    %1978 = vmatpush1.xpose.msra.mxu0 0.0
    %1979 = vmatprep.subr.mxu0 0.0
    %1980 = vmatpush1.xpose.msra.mxu0 0.0
    %1981 = vmatprep.subr.mxu0 0.0
    %1982 = vmatpush1.xpose.msra.mxu0 0.0
    %1983 = vmatprep.subr.mxu0 0.0
    %1984 = vmatpush1.xpose.msra.mxu0 0.0
    %1985 = vmatprep.subr.mxu0 0.0
    %1986 = vmatpush1.xpose.msra.mxu0 0.0
    %1987 = vmatprep.subr.mxu0 0.0
    %1988 = vmatpush1.xpose.msra.mxu0 0.0
    %1989 = vmatprep.subr.mxu0 0.0
    %1990 = vmatpush1.xpose.msra.mxu0 0.0
    %1991 = vmatprep.subr.mxu0 0.0
    %1992 = vmatpush1.xpose.msra.mxu0 0.0
    %1993 = vmatprep.subr.mxu0 0.0
    %1994 = vmatpush1.xpose.msra.mxu0 0.0
    %1995 = vmatprep.subr.mxu0 0.0
    %1996 = vmatpush1.xpose.msra.mxu0 0.0
    %1997 = vmatprep.subr.mxu0 0.0
    %1998 = vmatpush1.xpose.msra.mxu0 0.0
    %1999 = vmatprep.subr.mxu0 0.0
    %2000 = vmatpush1.xpose.msra.mxu0 0.0
    %2001 = vmatprep.mubr.f32.mxu0 0.0
    %2002 = vmatmul.mubr.f32.gmra.mrb[0].mxu0 %v1929
    %v2003 = vpop.f32.mrb[0].mxu0
    %v2004 = vadd.f32 %v135, %v2003
    %v2005 = vpop.f32.mrb[0].mxu0
    %2006 = vmatprep.mubr.f32.mxu0 0.0
    %2007 = vmatmul.mubr.f32.gmra.mrb[0].mxu0 %v1931
    %v2008 = vpop.f32.mrb[0].mxu0
    %v2009 = vadd.f32 %v136, %v2008
    %v2010 = vpop.f32.mrb[0].mxu0
    %2011 = vdwg.mxu0
    %v2012 = vsel %vm51, %v2004, -inf
    %2013 = vmax.xlane.f32.xlu0 %v2012
    %v2014 = vpop.xlane.xlu0 %2013
    %v2015 = vsel %vm51, %v2009, -inf
    %2016 = vmax.xlane.f32.xlu0 %v2015
    %v2017 = vpop.xlane.xlu0 %2016
    %v2018 = vsub.f32 %v2004, %v2014
    %v2019 = vsub.f32 %v2009, %v2017
    %v2020 = vmul.f32 %v2018, 1.442695
    %v2021 = vpow.pop %v2020
    %v2022 = vmul.f32 %v2019, 1.442695
    %v2023 = vpow.pop %v2022
    %v2024 = vsel %vm51, %v2021, 0.0
    %2025 = vadd.xlane.f32.xlu0 %v2024
    %v2026 = vpop.xlane.xlu0 %2025
    %v2027 = vsel %vm51, %v2023, 0.0
    %2028 = vadd.xlane.f32.xlu0 %v2027
    %v2029 = vpop.xlane.xlu0 %2028
    %v2030 = vrcp.pop %v2026
    %v2031 = vrcp.pop %v2029
    %v2032 = vmul.f32 %v2021, %v2030
    %v2033 = vmul.f32 %v2023, %v2031
    %2034 = vrot.lane.b32.xlu0 %v1515, 48
    %v2035 = vpop.permute.xlu0 %2034
    %2036 = vrot.lane.b32.xlu0 %v1520, 48
    %v2037 = vpop.permute.xlu0 %2036
    %v2041 = vsel %vm51, %v2032, 0
    %v2044 = vsel %vm51, %v2033, 0
    %2046 = vmatprep.subr.mxu0 0.0
    %2047 = vmatpush1.msra.mxu0 %v2035
    %2048 = vmatprep.subr.mxu0 0.0
    %2049 = vmatpush1.msra.mxu0 %v2037
    %2050 = vmatprep.subr.mxu0 0.0
    %2051 = vmatpush1.msra.mxu0 0.0
    %2052 = vmatprep.subr.mxu0 0.0
    %2053 = vmatpush1.msra.mxu0 0.0
    %2054 = vmatprep.subr.mxu0 0.0
    %2055 = vmatpush1.msra.mxu0 0.0
    %2056 = vmatprep.subr.mxu0 0.0
    %2057 = vmatpush1.msra.mxu0 0.0
    %2058 = vmatprep.subr.mxu0 0.0
    %2059 = vmatpush1.msra.mxu0 0.0
    %2060 = vmatprep.subr.mxu0 0.0
    %2061 = vmatpush1.msra.mxu0 0.0
    %2062 = vmatprep.subr.mxu0 0.0
    %2063 = vmatpush1.msra.mxu0 0.0
    %2064 = vmatprep.subr.mxu0 0.0
    %2065 = vmatpush1.msra.mxu0 0.0
    %2066 = vmatprep.subr.mxu0 0.0
    %2067 = vmatpush1.msra.mxu0 0.0
    %2068 = vmatprep.subr.mxu0 0.0
    %2069 = vmatpush1.msra.mxu0 0.0
    %2070 = vmatprep.subr.mxu0 0.0
    %2071 = vmatpush1.msra.mxu0 0.0
    %2072 = vmatprep.subr.mxu0 0.0
    %2073 = vmatpush1.msra.mxu0 0.0
    %2074 = vmatprep.subr.mxu0 0.0
    %2075 = vmatpush1.msra.mxu0 0.0
    %2076 = vmatprep.subr.mxu0 0.0
    %2077 = vmatpush1.msra.mxu0 0.0
    %2078 = vmatprep.subr.mxu0 0.0
    %2079 = vmatpush1.msra.mxu0 0.0
    %2080 = vmatprep.subr.mxu0 0.0
    %2081 = vmatpush1.msra.mxu0 0.0
    %2082 = vmatprep.subr.mxu0 0.0
    %2083 = vmatpush1.msra.mxu0 0.0
    %2084 = vmatprep.subr.mxu0 0.0
    %2085 = vmatpush1.msra.mxu0 0.0
    %2086 = vmatprep.subr.mxu0 0.0
    %2087 = vmatpush1.msra.mxu0 0.0
    %2088 = vmatprep.subr.mxu0 0.0
    %2089 = vmatpush1.msra.mxu0 0.0
    %2090 = vmatprep.subr.mxu0 0.0
    %2091 = vmatpush1.msra.mxu0 0.0
    %2092 = vmatprep.subr.mxu0 0.0
    %2093 = vmatpush1.msra.mxu0 0.0
    %2094 = vmatprep.subr.mxu0 0.0
    %2095 = vmatpush1.msra.mxu0 0.0
    %2096 = vmatprep.subr.mxu0 0.0
    %2097 = vmatpush1.msra.mxu0 0.0
    %2098 = vmatprep.subr.mxu0 0.0
    %2099 = vmatpush1.msra.mxu0 0.0
    %2100 = vmatprep.subr.mxu0 0.0
    %2101 = vmatpush1.msra.mxu0 0.0
    %2102 = vmatprep.subr.mxu0 0.0
    %2103 = vmatpush1.msra.mxu0 0.0
    %2104 = vmatprep.subr.mxu0 0.0
    %2105 = vmatpush1.msra.mxu0 0.0
    %2106 = vmatprep.subr.mxu0 0.0
    %2107 = vmatpush1.msra.mxu0 0.0
    %2108 = vmatprep.subr.mxu0 0.0
    %2109 = vmatpush1.msra.mxu0 0.0
    %2110 = vmatprep.mubr.f32.mxu0 0.0
    %2111 = vmatmul.mubr.f32.gmra.mrb[0].mxu0 %v2041
    %v2112 = vpop.f32.mrb[0].mxu0
    %v2113 = vadd.f32 0.0, %v2112
    %v2114 = vpop.f32.mrb[0].mxu0
    %2115 = vmatprep.mubr.f32.mxu0 0.0
    %2116 = vmatmul.mubr.f32.gmra.mrb[0].mxu0 %v2044
    %v2117 = vpop.f32.mrb[0].mxu0
    %v2118 = vadd.f32 0.0, %v2117
    %v2119 = vpop.f32.mrb[0].mxu0
    %2120 = vdwg.mxu0
    %2121 = vrot.lane.b32.xlu0 %v1515, 104
    %v2122 = vpop.permute.xlu0 %2121
    %2123 = vrot.lane.b32.xlu0 %v1520, 104
    %v2124 = vpop.permute.xlu0 %2123
    %2125 = vrot.lane.b32.xlu0 %v1515, 72
    %v2126 = vpop.permute.xlu0 %2125
    %2127 = vrot.lane.b32.xlu0 %v1520, 72
    %v2128 = vpop.permute.xlu0 %2127
    %v2129 = vsel %vm252, %v2122, 0
    %v2131 = vsel %vm252, %v2124, 0
    %v2133 = vsel %vm252, %v2126, 0
    %v2135 = vsel %vm252, %v2128, 0
    %2137 = vmatprep.subr.mxu0 0.0
    %2138 = vmatpush1.xpose.msra.mxu0 %v2133
    %2139 = vmatprep.subr.mxu0 0.0
    %2140 = vmatpush1.xpose.msra.mxu0 %v2135
    %2141 = vmatprep.subr.mxu0 0.0
    %2142 = vmatpush1.xpose.msra.mxu0 0.0
    %2143 = vmatprep.subr.mxu0 0.0
    %2144 = vmatpush1.xpose.msra.mxu0 0.0
    %2145 = vmatprep.subr.mxu0 0.0
    %2146 = vmatpush1.xpose.msra.mxu0 0.0
    %2147 = vmatprep.subr.mxu0 0.0
    %2148 = vmatpush1.xpose.msra.mxu0 0.0
    %2149 = vmatprep.subr.mxu0 0.0
    %2150 = vmatpush1.xpose.msra.mxu0 0.0
    %2151 = vmatprep.subr.mxu0 0.0
    %2152 = vmatpush1.xpose.msra.mxu0 0.0
    %2153 = vmatprep.subr.mxu0 0.0
    %2154 = vmatpush1.xpose.msra.mxu0 0.0
    %2155 = vmatprep.subr.mxu0 0.0
    %2156 = vmatpush1.xpose.msra.mxu0 0.0
    %2157 = vmatprep.subr.mxu0 0.0
    %2158 = vmatpush1.xpose.msra.mxu0 0.0
    %2159 = vmatprep.subr.mxu0 0.0
    %2160 = vmatpush1.xpose.msra.mxu0 0.0
    %2161 = vmatprep.subr.mxu0 0.0
    %2162 = vmatpush1.xpose.msra.mxu0 0.0
    %2163 = vmatprep.subr.mxu0 0.0
    %2164 = vmatpush1.xpose.msra.mxu0 0.0
    %2165 = vmatprep.subr.mxu0 0.0
    %2166 = vmatpush1.xpose.msra.mxu0 0.0
    %2167 = vmatprep.subr.mxu0 0.0
    %2168 = vmatpush1.xpose.msra.mxu0 0.0
    %2169 = vmatprep.subr.mxu0 0.0
    %2170 = vmatpush1.xpose.msra.mxu0 0.0
    %2171 = vmatprep.subr.mxu0 0.0
    %2172 = vmatpush1.xpose.msra.mxu0 0.0
    %2173 = vmatprep.subr.mxu0 0.0
    %2174 = vmatpush1.xpose.msra.mxu0 0.0
    %2175 = vmatprep.subr.mxu0 0.0
    %2176 = vmatpush1.xpose.msra.mxu0 0.0
    %2177 = vmatprep.subr.mxu0 0.0
    %2178 = vmatpush1.xpose.msra.mxu0 0.0
    %2179 = vmatprep.subr.mxu0 0.0
    %2180 = vmatpush1.xpose.msra.mxu0 0.0
    %2181 = vmatprep.subr.mxu0 0.0
    %2182 = vmatpush1.xpose.msra.mxu0 0.0
    %2183 = vmatprep.subr.mxu0 0.0
    %2184 = vmatpush1.xpose.msra.mxu0 0.0
    %2185 = vmatprep.subr.mxu0 0.0
    %2186 = vmatpush1.xpose.msra.mxu0 0.0
    %2187 = vmatprep.subr.mxu0 0.0
    %2188 = vmatpush1.xpose.msra.mxu0 0.0
    %2189 = vmatprep.subr.mxu0 0.0
    %2190 = vmatpush1.xpose.msra.mxu0 0.0
    %2191 = vmatprep.subr.mxu0 0.0
    %2192 = vmatpush1.xpose.msra.mxu0 0.0
    %2193 = vmatprep.subr.mxu0 0.0
    %2194 = vmatpush1.xpose.msra.mxu0 0.0
    %2195 = vmatprep.subr.mxu0 0.0
    %2196 = vmatpush1.xpose.msra.mxu0 0.0
    %2197 = vmatprep.subr.mxu0 0.0
    %2198 = vmatpush1.xpose.msra.mxu0 0.0
    %2199 = vmatprep.subr.mxu0 0.0
    %2200 = vmatpush1.xpose.msra.mxu0 0.0
    %2201 = vmatprep.mubr.f32.mxu0 0.0
    %2202 = vmatmul.mubr.f32.gmra.mrb[0].mxu0 %v2129
    %v2203 = vpop.f32.mrb[0].mxu0
    %v2204 = vadd.f32 %v135, %v2203
    %v2205 = vpop.f32.mrb[0].mxu0
    %2206 = vmatprep.mubr.f32.mxu0 0.0
    %2207 = vmatmul.mubr.f32.gmra.mrb[0].mxu0 %v2131
    %v2208 = vpop.f32.mrb[0].mxu0
    %v2209 = vadd.f32 %v136, %v2208
    %v2210 = vpop.f32.mrb[0].mxu0
    %2211 = vdwg.mxu0
    %v2212 = vsel %vm51, %v2204, -inf
    %2213 = vmax.xlane.f32.xlu0 %v2212
    %v2214 = vpop.xlane.xlu0 %2213
    %v2215 = vsel %vm51, %v2209, -inf
    %2216 = vmax.xlane.f32.xlu0 %v2215
    %v2217 = vpop.xlane.xlu0 %2216
    %v2218 = vsub.f32 %v2204, %v2214
    %v2219 = vsub.f32 %v2209, %v2217
    %v2220 = vmul.f32 %v2218, 1.442695
    %v2221 = vpow.pop %v2220
    %v2222 = vmul.f32 %v2219, 1.442695
    %v2223 = vpow.pop %v2222
    %v2224 = vsel %vm51, %v2221, 0.0
    %2225 = vadd.xlane.f32.xlu0 %v2224
    %v2226 = vpop.xlane.xlu0 %2225
    %v2227 = vsel %vm51, %v2223, 0.0
    %2228 = vadd.xlane.f32.xlu0 %v2227
    %v2229 = vpop.xlane.xlu0 %2228
    %v2230 = vrcp.pop %v2226
    %v2231 = vrcp.pop %v2229
    %v2232 = vmul.f32 %v2221, %v2230
    %v2233 = vmul.f32 %v2223, %v2231
    %2234 = vrot.lane.b32.xlu0 %v1515, 40
    %v2235 = vpop.permute.xlu0 %2234
    %2236 = vrot.lane.b32.xlu0 %v1520, 40
    %v2237 = vpop.permute.xlu0 %2236
    %v2241 = vsel %vm51, %v2232, 0
    %v2244 = vsel %vm51, %v2233, 0
    %2246 = vmatprep.subr.mxu0 0.0
    %2247 = vmatpush1.msra.mxu0 %v2235
    %2248 = vmatprep.subr.mxu0 0.0
    %2249 = vmatpush1.msra.mxu0 %v2237
    %2250 = vmatprep.subr.mxu0 0.0
    %2251 = vmatpush1.msra.mxu0 0.0
    %2252 = vmatprep.subr.mxu0 0.0
    %2253 = vmatpush1.msra.mxu0 0.0
    %2254 = vmatprep.subr.mxu0 0.0
    %2255 = vmatpush1.msra.mxu0 0.0
    %2256 = vmatprep.subr.mxu0 0.0
    %2257 = vmatpush1.msra.mxu0 0.0
    %2258 = vmatprep.subr.mxu0 0.0
    %2259 = vmatpush1.msra.mxu0 0.0
    %2260 = vmatprep.subr.mxu0 0.0
    %2261 = vmatpush1.msra.mxu0 0.0
    %2262 = vmatprep.subr.mxu0 0.0
    %2263 = vmatpush1.msra.mxu0 0.0
    %2264 = vmatprep.subr.mxu0 0.0
    %2265 = vmatpush1.msra.mxu0 0.0
    %2266 = vmatprep.subr.mxu0 0.0
    %2267 = vmatpush1.msra.mxu0 0.0
    %2268 = vmatprep.subr.mxu0 0.0
    %2269 = vmatpush1.msra.mxu0 0.0
    %2270 = vmatprep.subr.mxu0 0.0
    %2271 = vmatpush1.msra.mxu0 0.0
    %2272 = vmatprep.subr.mxu0 0.0
    %2273 = vmatpush1.msra.mxu0 0.0
    %2274 = vmatprep.subr.mxu0 0.0
    %2275 = vmatpush1.msra.mxu0 0.0
    %2276 = vmatprep.subr.mxu0 0.0
    %2277 = vmatpush1.msra.mxu0 0.0
    %2278 = vmatprep.subr.mxu0 0.0
    %2279 = vmatpush1.msra.mxu0 0.0
    %2280 = vmatprep.subr.mxu0 0.0
    %2281 = vmatpush1.msra.mxu0 0.0
    %2282 = vmatprep.subr.mxu0 0.0
    %2283 = vmatpush1.msra.mxu0 0.0
    %2284 = vmatprep.subr.mxu0 0.0
    %2285 = vmatpush1.msra.mxu0 0.0
    %2286 = vmatprep.subr.mxu0 0.0
    %2287 = vmatpush1.msra.mxu0 0.0
    %2288 = vmatprep.subr.mxu0 0.0
    %2289 = vmatpush1.msra.mxu0 0.0
    %2290 = vmatprep.subr.mxu0 0.0
    %2291 = vmatpush1.msra.mxu0 0.0
    %2292 = vmatprep.subr.mxu0 0.0
    %2293 = vmatpush1.msra.mxu0 0.0
    %2294 = vmatprep.subr.mxu0 0.0
    %2295 = vmatpush1.msra.mxu0 0.0
    %2296 = vmatprep.subr.mxu0 0.0
    %2297 = vmatpush1.msra.mxu0 0.0
    %2298 = vmatprep.subr.mxu0 0.0
    %2299 = vmatpush1.msra.mxu0 0.0
    %2300 = vmatprep.subr.mxu0 0.0
    %2301 = vmatpush1.msra.mxu0 0.0
    %2302 = vmatprep.subr.mxu0 0.0
    %2303 = vmatpush1.msra.mxu0 0.0
    %2304 = vmatprep.subr.mxu0 0.0
    %2305 = vmatpush1.msra.mxu0 0.0
    %2306 = vmatprep.subr.mxu0 0.0
    %2307 = vmatpush1.msra.mxu0 0.0
    %2308 = vmatprep.subr.mxu0 0.0
    %2309 = vmatpush1.msra.mxu0 0.0
    %2310 = vmatprep.mubr.f32.mxu0 0.0
    %2311 = vmatmul.mubr.f32.gmra.mrb[0].mxu0 %v2241
    %v2312 = vpop.f32.mrb[0].mxu0
    %v2313 = vadd.f32 0.0, %v2312
    %v2314 = vpop.f32.mrb[0].mxu0
    %2315 = vmatprep.mubr.f32.mxu0 0.0
    %2316 = vmatmul.mubr.f32.gmra.mrb[0].mxu0 %v2244
    %v2317 = vpop.f32.mrb[0].mxu0
    %v2318 = vadd.f32 0.0, %v2317
    %v2319 = vpop.f32.mrb[0].mxu0
    %2320 = vdwg.mxu0
    %2323 = vrot.lane.b32.xlu0 %v1913, 8
    %v2324 = vpop.permute.xlu0 %2323
    %2325 = vrot.lane.b32.xlu0 %v1918, 8
    %v2326 = vpop.permute.xlu0 %2325
    %2331 = vrot.lane.b32.xlu0 %v2113, 16
    %v2332 = vpop.permute.xlu0 %2331
    %2333 = vrot.lane.b32.xlu0 %v2118, 16
    %v2334 = vpop.permute.xlu0 %2333
    %2339 = vrot.lane.b32.xlu0 %v2313, 24
    %v2340 = vpop.permute.xlu0 %2339
    %2341 = vrot.lane.b32.xlu0 %v2318, 24
    %v2342 = vpop.permute.xlu0 %2341
    %v2345 = vsel %vm252, %v1713, %v2324
    %v2346 = vsel %vm252, %v1718, %v2326
    %v2347 = vsel %vm51, %v2345, %v2332
    %v2348 = vsel %vm51, %v2346, %v2334
    %v2349 = vsel %vm1073, %v2347, %v2340
    %v2350 = vsel %vm1073, %v2348, %v2342
    %v2351 = vlaneseq
    %v2352 = vshrl.u32 %v2351, 7
    %v2353 = vsub.s32 0, %v2352
    %v2354 = vrot.slane %v1437, %v2353
    %v2356 = vsel %vm164, %v2349, 0
    %v2359 = vsel %vm164, %v2350, 0
    %2361 = vmatprep.subr.mxu0 0.0
    %2362 = vmatpush1.msra.mxu0 %v1420
    %2363 = vmatprep.subr.mxu0 0.0
    %2364 = vmatpush1.msra.mxu0 %v1421
    %2365 = vmatprep.subr.mxu0 0.0
    %2366 = vmatpush1.msra.mxu0 %v1422
    %2367 = vmatprep.subr.mxu0 0.0
    %2368 = vmatpush1.msra.mxu0 %v1423
    %2369 = vmatprep.subr.mxu0 0.0
    %2370 = vmatpush1.msra.mxu0 0.0
    %2371 = vmatprep.subr.mxu0 0.0
    %2372 = vmatpush1.msra.mxu0 0.0
    %2373 = vmatprep.subr.mxu0 0.0
    %2374 = vmatpush1.msra.mxu0 0.0
    %2375 = vmatprep.subr.mxu0 0.0
    %2376 = vmatpush1.msra.mxu0 0.0
    %2377 = vmatprep.subr.mxu0 0.0
    %2378 = vmatpush1.msra.mxu0 0.0
    %2379 = vmatprep.subr.mxu0 0.0
    %2380 = vmatpush1.msra.mxu0 0.0
    %2381 = vmatprep.subr.mxu0 0.0
    %2382 = vmatpush1.msra.mxu0 0.0
    %2383 = vmatprep.subr.mxu0 0.0
    %2384 = vmatpush1.msra.mxu0 0.0
    %2385 = vmatprep.subr.mxu0 0.0
    %2386 = vmatpush1.msra.mxu0 0.0
    %2387 = vmatprep.subr.mxu0 0.0
    %2388 = vmatpush1.msra.mxu0 0.0
    %2389 = vmatprep.subr.mxu0 0.0
    %2390 = vmatpush1.msra.mxu0 0.0
    %2391 = vmatprep.subr.mxu0 0.0
    %2392 = vmatpush1.msra.mxu0 0.0
    %2393 = vmatprep.subr.mxu0 0.0
    %2394 = vmatpush1.msra.mxu0 0.0
    %2395 = vmatprep.subr.mxu0 0.0
    %2396 = vmatpush1.msra.mxu0 0.0
    %2397 = vmatprep.subr.mxu0 0.0
    %2398 = vmatpush1.msra.mxu0 0.0
    %2399 = vmatprep.subr.mxu0 0.0
    %2400 = vmatpush1.msra.mxu0 0.0
    %2401 = vmatprep.subr.mxu0 0.0
    %2402 = vmatpush1.msra.mxu0 0.0
    %2403 = vmatprep.subr.mxu0 0.0
    %2404 = vmatpush1.msra.mxu0 0.0
    %2405 = vmatprep.subr.mxu0 0.0
    %2406 = vmatpush1.msra.mxu0 0.0
    %2407 = vmatprep.subr.mxu0 0.0
    %2408 = vmatpush1.msra.mxu0 0.0
    %2409 = vmatprep.subr.mxu0 0.0
    %2410 = vmatpush1.msra.mxu0 0.0
    %2411 = vmatprep.subr.mxu0 0.0
    %2412 = vmatpush1.msra.mxu0 0.0
    %2413 = vmatprep.subr.mxu0 0.0
    %2414 = vmatpush1.msra.mxu0 0.0
    %2415 = vmatprep.subr.mxu0 0.0
    %2416 = vmatpush1.msra.mxu0 0.0
    %2417 = vmatprep.subr.mxu0 0.0
    %2418 = vmatpush1.msra.mxu0 0.0
    %2419 = vmatprep.subr.mxu0 0.0
    %2420 = vmatpush1.msra.mxu0 0.0
    %2421 = vmatprep.subr.mxu0 0.0
    %2422 = vmatpush1.msra.mxu0 0.0
    %2423 = vmatprep.subr.mxu0 0.0
    %2424 = vmatpush1.msra.mxu0 0.0
    %2425 = vmatprep.mubr.f32.mxu0 0.0
    %2426 = vmatmul.mubr.f32.gmra.mrb[0].mxu0 %v2356
    %v2427 = vpop.f32.mrb[0].mxu0
    %v2428 = vadd.f32 %v2354, %v2427
    %v2429 = vpop.f32.mrb[0].mxu0
    %2430 = vmatprep.mubr.f32.mxu0 0.0
    %2431 = vmatmul.mubr.f32.gmra.mrb[0].mxu0 %v2359
    %v2432 = vpop.f32.mrb[0].mxu0
    %v2433 = vadd.f32 %v2354, %v2432
    %v2434 = vpop.f32.mrb[0].mxu0
    %2435 = vdwg.mxu0
    %v2436 = vadd.f32 %v1413, %v2428
    %v2437 = vadd.f32 %v1414, %v2433
    %v2438 = vsel %vm164, %v2436, 0.0
    %2439 = vadd.xlane.f32.xlu0 %v2438
    %v2440 = vpop.xlane.xlu0 %2439
    %v2441 = vsel %vm164, %v2437, 0.0
    %2442 = vadd.xlane.f32.xlu0 %v2441
    %v2443 = vpop.xlane.xlu0 %2442
    %v2444 = vmul.f32 %v2440, %v1169
    %v2445 = vmul.f32 %v2443, %v1169
    %v2446 = vsub.f32 %v2436, %v2444
    %v2447 = vsub.f32 %v2437, %v2445
    %v2448 = vmul.f32 %v2446, %v2446
    %v2449 = vmul.f32 %v2447, %v2447
    %v2450 = vsel %vm164, %v2448, 0.0
    %2451 = vadd.xlane.f32.xlu0 %v2450
    %v2452 = vpop.xlane.xlu0 %2451
    %v2453 = vsel %vm164, %v2449, 0.0
    %2454 = vadd.xlane.f32.xlu0 %v2453
    %v2455 = vpop.xlane.xlu0 %2454
    %v2456 = vmul.f32 %v2452, %v1169
    %v2457 = vmul.f32 %v2455, %v1169
    %v2458 = vadd.f32 %v2456, 1e-05
    %v2459 = vadd.f32 %v2457, 1e-05
    %v2460 = vrsqrt.pop %v2458
    %v2461 = vrsqrt.pop %v2459
    %v2462 = vmul.f32 %v2446, %v2460
    %v2463 = vmul.f32 %v2447, %v2461
    %v2464 = vlaneseq
    %v2465 = vshrl.u32 %v2464, 7
    %v2466 = vsub.s32 1, %v2465
    %v2467 = vrot.slane %v1437, %v2466
    %v2468 = vmul.f32 %v2462, %v2467
    %v2469 = vmul.f32 %v2463, %v2467
    %v2470 = vlaneseq
    %v2471 = vshrl.u32 %v2470, 7
    %v2472 = vsub.s32 2, %v2471
    %v2473 = vrot.slane %v1437, %v2472
    %v2474 = vadd.f32 %v2468, %v2473
    %v2475 = vadd.f32 %v2469, %v2473
    %v2476 = vlaneseq
    %v2477 = vshrl.u32 %v2476, 7
    %v2478 = vsub.s32 0, %v2477
    %v2479 = vrot.slane %v1428, %v2478
    %v2481 = vsel %vm164, %v2474, 0
    %v2484 = vsel %vm164, %v2475, 0
    %2486 = vmatprep.subr.mxu0 0.0
    %2487 = vmatpush1.msra.mxu0 %v1424
    %2488 = vmatprep.subr.mxu0 0.0
    %2489 = vmatpush1.msra.mxu0 %v1425
    %2490 = vmatprep.subr.mxu0 0.0
    %2491 = vmatpush1.msra.mxu0 %v1426
    %2492 = vmatprep.subr.mxu0 0.0
    %2493 = vmatpush1.msra.mxu0 %v1427
    %2494 = vmatprep.subr.mxu0 0.0
    %2495 = vmatpush1.msra.mxu0 0.0
    %2496 = vmatprep.subr.mxu0 0.0
    %2497 = vmatpush1.msra.mxu0 0.0
    %2498 = vmatprep.subr.mxu0 0.0
    %2499 = vmatpush1.msra.mxu0 0.0
    %2500 = vmatprep.subr.mxu0 0.0
    %2501 = vmatpush1.msra.mxu0 0.0
    %2502 = vmatprep.subr.mxu0 0.0
    %2503 = vmatpush1.msra.mxu0 0.0
    %2504 = vmatprep.subr.mxu0 0.0
    %2505 = vmatpush1.msra.mxu0 0.0
    %2506 = vmatprep.subr.mxu0 0.0
    %2507 = vmatpush1.msra.mxu0 0.0
    %2508 = vmatprep.subr.mxu0 0.0
    %2509 = vmatpush1.msra.mxu0 0.0
    %2510 = vmatprep.subr.mxu0 0.0
    %2511 = vmatpush1.msra.mxu0 0.0
    %2512 = vmatprep.subr.mxu0 0.0
    %2513 = vmatpush1.msra.mxu0 0.0
    %2514 = vmatprep.subr.mxu0 0.0
    %2515 = vmatpush1.msra.mxu0 0.0
    %2516 = vmatprep.subr.mxu0 0.0
    %2517 = vmatpush1.msra.mxu0 0.0
    %2518 = vmatprep.subr.mxu0 0.0
    %2519 = vmatpush1.msra.mxu0 0.0
    %2520 = vmatprep.subr.mxu0 0.0
    %2521 = vmatpush1.msra.mxu0 0.0
    %2522 = vmatprep.subr.mxu0 0.0
    %2523 = vmatpush1.msra.mxu0 0.0
    %2524 = vmatprep.subr.mxu0 0.0
    %2525 = vmatpush1.msra.mxu0 0.0
    %2526 = vmatprep.subr.mxu0 0.0
    %2527 = vmatpush1.msra.mxu0 0.0
    %2528 = vmatprep.subr.mxu0 0.0
    %2529 = vmatpush1.msra.mxu0 0.0
    %2530 = vmatprep.subr.mxu0 0.0
    %2531 = vmatpush1.msra.mxu0 0.0
    %2532 = vmatprep.subr.mxu0 0.0
    %2533 = vmatpush1.msra.mxu0 0.0
    %2534 = vmatprep.subr.mxu0 0.0
    %2535 = vmatpush1.msra.mxu0 0.0
    %2536 = vmatprep.subr.mxu0 0.0
    %2537 = vmatpush1.msra.mxu0 0.0
    %2538 = vmatprep.subr.mxu0 0.0
    %2539 = vmatpush1.msra.mxu0 0.0
    %2540 = vmatprep.subr.mxu0 0.0
    %2541 = vmatpush1.msra.mxu0 0.0
    %2542 = vmatprep.subr.mxu0 0.0
    %2543 = vmatpush1.msra.mxu0 0.0
    %2544 = vmatprep.subr.mxu0 0.0
    %2545 = vmatpush1.msra.mxu0 0.0
    %2546 = vmatprep.subr.mxu0 0.0
    %2547 = vmatpush1.msra.mxu0 0.0
    %2548 = vmatprep.subr.mxu0 0.0
    %2549 = vmatpush1.msra.mxu0 0.0
    %2550 = vmatprep.mubr.f32.mxu0 0.0
    %2551 = vmatmul.mubr.f32.gmra.mrb[0].mxu0 %v2481
    %v2552 = vpop.f32.mrb[0].mxu0
    %v2553 = vadd.f32 %v2479, %v2552
    %v2554 = vpop.f32.mrb[0].mxu0
    %2555 = vmatprep.mubr.f32.mxu0 0.0
    %2556 = vmatmul.mubr.f32.gmra.mrb[0].mxu0 %v2484
    %v2557 = vpop.f32.mrb[0].mxu0
    %v2558 = vadd.f32 %v2479, %v2557
    %v2559 = vpop.f32.mrb[0].mxu0
    %2560 = vdwg.mxu0
    %v2561 = vmax.f32 %v2553, 0.0
    %v2562 = vmax.f32 %v2558, 0.0
    %v2563 = vlaneseq
    %v2564 = vshrl.u32 %v2563, 7
    %v2565 = vsub.s32 3, %v2564
    %v2566 = vrot.slane %v1437, %v2565
    %v2568 = vsel %vm1293, %v2561, 0
    %v2571 = vsel %vm1293, %v2562, 0
    %2573 = vmatprep.subr.mxu0 0.0
    %2574 = vmatpush1.msra.mxu0 %v1429
    %2575 = vmatprep.subr.mxu0 0.0
    %2576 = vmatpush1.msra.mxu0 %v1430
    %2577 = vmatprep.subr.mxu0 0.0
    %2578 = vmatpush1.msra.mxu0 %v1431
    %2579 = vmatprep.subr.mxu0 0.0
    %2580 = vmatpush1.msra.mxu0 %v1432
    %2581 = vmatprep.subr.mxu0 0.0
    %2582 = vmatpush1.msra.mxu0 %v1433
    %2583 = vmatprep.subr.mxu0 0.0
    %2584 = vmatpush1.msra.mxu0 %v1434
    %2585 = vmatprep.subr.mxu0 0.0
    %2586 = vmatpush1.msra.mxu0 %v1435
    %2587 = vmatprep.subr.mxu0 0.0
    %2588 = vmatpush1.msra.mxu0 %v1436
    %2589 = vmatprep.subr.mxu0 0.0
    %2590 = vmatpush1.msra.mxu0 0.0
    %2591 = vmatprep.subr.mxu0 0.0
    %2592 = vmatpush1.msra.mxu0 0.0
    %2593 = vmatprep.subr.mxu0 0.0
    %2594 = vmatpush1.msra.mxu0 0.0
    %2595 = vmatprep.subr.mxu0 0.0
    %2596 = vmatpush1.msra.mxu0 0.0
    %2597 = vmatprep.subr.mxu0 0.0
    %2598 = vmatpush1.msra.mxu0 0.0
    %2599 = vmatprep.subr.mxu0 0.0
    %2600 = vmatpush1.msra.mxu0 0.0
    %2601 = vmatprep.subr.mxu0 0.0
    %2602 = vmatpush1.msra.mxu0 0.0
    %2603 = vmatprep.subr.mxu0 0.0
    %2604 = vmatpush1.msra.mxu0 0.0
    %2605 = vmatprep.subr.mxu0 0.0
    %2606 = vmatpush1.msra.mxu0 0.0
    %2607 = vmatprep.subr.mxu0 0.0
    %2608 = vmatpush1.msra.mxu0 0.0
    %2609 = vmatprep.subr.mxu0 0.0
    %2610 = vmatpush1.msra.mxu0 0.0
    %2611 = vmatprep.subr.mxu0 0.0
    %2612 = vmatpush1.msra.mxu0 0.0
    %2613 = vmatprep.subr.mxu0 0.0
    %2614 = vmatpush1.msra.mxu0 0.0
    %2615 = vmatprep.subr.mxu0 0.0
    %2616 = vmatpush1.msra.mxu0 0.0
    %2617 = vmatprep.subr.mxu0 0.0
    %2618 = vmatpush1.msra.mxu0 0.0
    %2619 = vmatprep.subr.mxu0 0.0
    %2620 = vmatpush1.msra.mxu0 0.0
    %2621 = vmatprep.subr.mxu0 0.0
    %2622 = vmatpush1.msra.mxu0 0.0
    %2623 = vmatprep.subr.mxu0 0.0
    %2624 = vmatpush1.msra.mxu0 0.0
    %2625 = vmatprep.subr.mxu0 0.0
    %2626 = vmatpush1.msra.mxu0 0.0
    %2627 = vmatprep.subr.mxu0 0.0
    %2628 = vmatpush1.msra.mxu0 0.0
    %2629 = vmatprep.subr.mxu0 0.0
    %2630 = vmatpush1.msra.mxu0 0.0
    %2631 = vmatprep.subr.mxu0 0.0
    %2632 = vmatpush1.msra.mxu0 0.0
    %2633 = vmatprep.subr.mxu0 0.0
    %2634 = vmatpush1.msra.mxu0 0.0
    %2635 = vmatprep.subr.mxu0 0.0
    %2636 = vmatpush1.msra.mxu0 0.0
    %2637 = vmatprep.mubr.f32.mxu0 0.0
    %2638 = vmatmul.mubr.f32.gmra.mrb[0].mxu0 %v2568
    %v2639 = vpop.f32.mrb[0].mxu0
    %v2640 = vadd.f32 %v2566, %v2639
    %v2641 = vpop.f32.mrb[0].mxu0
    %2642 = vmatprep.mubr.f32.mxu0 0.0
    %2643 = vmatmul.mubr.f32.gmra.mrb[0].mxu0 %v2571
    %v2644 = vpop.f32.mrb[0].mxu0
    %v2645 = vadd.f32 %v2566, %v2644
    %v2646 = vpop.f32.mrb[0].mxu0
    %2647 = vdwg.mxu0
    %v2648 = vadd.f32 %v2474, %v2640
    %v2649 = vadd.f32 %v2475, %v2645
    %v2650 = vsel %vm164, %v2648, 0.0
    %2651 = vadd.xlane.f32.xlu0 %v2650
    %v2652 = vpop.xlane.xlu0 %2651
    %v2653 = vsel %vm164, %v2649, 0.0
    %2654 = vadd.xlane.f32.xlu0 %v2653
    %v2655 = vpop.xlane.xlu0 %2654
    %v2656 = vmul.f32 %v2652, %v1169
    %v2657 = vmul.f32 %v2655, %v1169
    %v2658 = vsub.f32 %v2648, %v2656
    %v2659 = vsub.f32 %v2649, %v2657
    %v2660 = vmul.f32 %v2658, %v2658
    %v2661 = vmul.f32 %v2659, %v2659
    %v2662 = vsel %vm164, %v2660, 0.0
    %2663 = vadd.xlane.f32.xlu0 %v2662
    %v2664 = vpop.xlane.xlu0 %2663
    %v2665 = vsel %vm164, %v2661, 0.0
    %2666 = vadd.xlane.f32.xlu0 %v2665
    %v2667 = vpop.xlane.xlu0 %2666
    %v2668 = vmul.f32 %v2664, %v1169
    %v2669 = vmul.f32 %v2667, %v1169
    %v2670 = vadd.f32 %v2668, 1e-05
    %v2671 = vadd.f32 %v2669, 1e-05
    %v2672 = vrsqrt.pop %v2670
    %v2673 = vrsqrt.pop %v2671
    %v2674 = vmul.f32 %v2658, %v2672
    %v2675 = vmul.f32 %v2659, %v2673
    %v2676 = vlaneseq
    %v2677 = vshrl.u32 %v2676, 7
    %v2678 = vsub.s32 4, %v2677
    %v2679 = vrot.slane %v1437, %v2678
    %v2680 = vmul.f32 %v2674, %v2679
    %v2681 = vmul.f32 %v2675, %v2679
    %v2682 = vlaneseq
    %v2683 = vshrl.u32 %v2682, 7
    %v2684 = vsub.s32 5, %v2683
    %v2685 = vrot.slane %v1437, %v2684
    %v2686 = vadd.f32 %v2680, %v2685
    %v2687 = vadd.f32 %v2681, %v2685
    %vm2688 = vcmask 261127
    %2689 = vst.msk [vmem:[#allocation7 - $0x7] sm:$0x80] %vm2688, %v2686
    %2690 = vst.msk [vmem:[#allocation7 - $0x6] sm:$0x80] %vm2688, %v2687
    // Predicated region
    $region18: #{trans_encoder_forward.1} parent=1 // pred_check
      _
    $region19: #{trans_encoder_forward.1} parent=1 // pred_check_branch
      %2692 = sbr.rel (0) target = $region21
    $region20: #{trans_encoder_forward.1} parent=1 // pred_region
      %s2694 = ssub.s32 32, 32
      %2695 = vsyncadd [#allocation4], %s2694
      %s2697 = sshll.u32 [#allocation7], 4
      %s2698 = int_to_ptr.vmem [resolvable:$true] %s2697
      %2700 = dma.vmem_to_hbm [thread:$0]  %s2698, 32, %s2, [#allocation4]
    $region21: #{trans_encoder_forward.1} parent=1 // pred_fallthru
      _
    // Predicated region
    $region22: #{trans_encoder_forward.1} parent=1 // pred_check
      _
    $region23: #{trans_encoder_forward.1} parent=1 // pred_check_branch
      %2702 = sbr.rel (0) target = $region25
    $region24: #{trans_encoder_forward.1} parent=1 // pred_region
      %2703 = dma.done [#allocation4], 32
    $region25: #{trans_encoder_forward.1} parent=1 // pred_fallthru
      _
    %2704 = vsyncpa [#allocation3], 1
    %2705 = vsyncpa [#allocation6], 1
    %2706 = vsyncpa [#allocation4], 1

</llo_original>
